<compile_context>
chip_gen: v7x
topology: tpu7x:2x2x1
jax: 0.10.0
libtpu: 0.0.40
codegen_flags: <defaults>
</compile_context>

<pallas_src>
import functools

import numpy as np
import jax
import jax.numpy as jnp
from jax import lax
from jax.experimental import pallas as pl
from jax.experimental.pallas import tpu as pltpu


# -----------------------------------------------------------------------------
# Pallas kernel: whole HFFB forward for `bb` images folded into lanes.
#   channels on sublanes, per-image flattened spatial concatenated on lanes.
#   1x1 convs        : one merged (n_feat, n_feat) MXU matmul (+ one for conv1).
#   3x3 convs        : ONE stacked-tap matmul each (K = 9*Cin), taps built with
#                      pltpu.roll + boundary masks (zero padding).
#   avgpool4+nearest : (x @ R) @ R^T / 16 with a block-diagonal membership matrix.
#   CCA              : per-image per-channel stddev (f32), tiny MLP, sigmoid.
# -----------------------------------------------------------------------------
def _hffb_kernel(
    x_ref,        # (1, n_feat, L)   L = bb*HW, input images folded into lanes
    mask_ref,     # (9, 1, L)        3x3-tap validity masks (zero padding)
    r_ref,        # (L, bb*nb)       block-diagonal 4x4-pool membership (bf16)
    rt_ref,       # (bb*nb, L)       its transpose (bf16)
    w_in_ref,     # (n_feat, n_feat) [path_1 ; path_2] 1x1 weights   (bf16)
    w_dwpw_ref,   # (c3, 9*c3)       folded depthwise+pointwise taps (bf16)
    b_pw_ref,     # (c3, 1)          pointwise bias                   (f32)
    w_cv_ref,     # (c3, 9*c3)       3x3 conv taps                    (bf16)
    w_c1_ref,     # (mid, c3)        CCA squeeze                      (f32)
    b_c1_ref,     # (mid, 1)
    w_c2_ref,     # (c3, mid)        CCA excite                       (f32)
    b_c2_ref,     # (c3, 1)
    w_fe_ref,     # (3, ch, 9*ch)    FE k2/k3/k4 stacked taps         (bf16)
    w_out_ref,    # (n_feat, 2*ch)   conv1                            (bf16)
    o_ref,        # (1, n_feat, L)
    *, width, hw, bb, c3, inv_hw,
):
    f32, bf16 = jnp.float32, jnp.bfloat16
    L = bb * hw

    x = x_ref[0]                                   # (n_feat, L), f32
    masks = mask_ref[...]                          # (9, 1, L), f32

    # tap offsets within one image, (ky, kx) row-major == weight packing order
    offs = [(ky - 1) * width + (kx - 1) for ky in range(3) for kx in range(3)]

    def stacked_taps(v):
        # v: (Cin, L) f32 -> (9*Cin, L) bf16. tap(v,t)[c,p] == v[c, p+offs[t]],
        # zero outside each image (padding=1).  Masks also kill roll-wrap
        # across image boundaries in the folded lane axis.
        parts = []
        for t in range(9):
            off = offs[t]
            if off == 0:
                parts.append(v)                    # centre tap: mask is all-ones
            else:
                sh = pltpu.roll(v, shift=(-off) % L, axis=1)   # XLU lane rotate
                parts.append(sh * masks[t])
        return jnp.concatenate(parts, axis=0).astype(bf16)

    def conv3x3(v, w_stk):                         # w_stk: (Cout, 9*Cin) bf16
        return jnp.dot(w_stk, stacked_taps(v), preferred_element_type=f32)

    # ---- path_1 + path_2 1x1 convs in ONE dot; relu; row-split --------------
    p_in = jnp.maximum(
        jnp.dot(w_in_ref[...], x.astype(bf16), preferred_element_type=f32), 0.0)
    p3 = p_in[:c3]                                 # (c3, L)
    p4 = p_in[c3:2 * c3]                           # (c3, L)   (already >= 0)
    p2 = p_in[2 * c3:]                             # (ch, L)

    # ---- path_3: folded dw+pw 3x3 (+bias) -> 3x3 conv ------------------------
    p3 = conv3x3(p3, w_dwpw_ref[...]) + b_pw_ref[...]
    p3 = conv3x3(p3, w_cv_ref[...])

    # ---- CCA: per-image channel stddev (single sweep) -> MLP -> sigmoid ------
    stds = []
    for b in range(bb):                            # static lane-aligned slices
        sub = p3[:, b * hw:(b + 1) * hw]
        mu = jnp.sum(sub, axis=1, keepdims=True) * inv_hw
        ex2 = jnp.sum(sub * sub, axis=1, keepdims=True) * inv_hw
        stds.append(jnp.sqrt(jnp.maximum(ex2 - mu * mu, 0.0)))
    std = stds[0] if bb == 1 else jnp.concatenate(stds, axis=1)        # (c3, bb)
    hmid = jnp.maximum(
        jnp.dot(w_c1_ref[...], std, preferred_element_type=f32) + b_c1_ref[...], 0.0)
    g = jax.nn.sigmoid(
        jnp.dot(w_c2_ref[...], hmid, preferred_element_type=f32) + b_c2_ref[...])
    if bb == 1:
        gate = jnp.broadcast_to(g, (c3, hw))
    else:
        gate = jnp.concatenate(
            [jnp.broadcast_to(g[:, b:b + 1], (c3, hw)) for b in range(bb)], axis=1)
    p3 = jnp.maximum(p3 * gate, 0.0)               # relu(cat[p3,p4]) per half

    # ---- path_2: FE (avgpool4 + nearest upsample via membership matmuls) -----
    bsum = jnp.dot(p2.astype(bf16), r_ref[...], preferred_element_type=f32)
    h1 = jnp.dot(bsum.astype(bf16), rt_ref[...],
                 preferred_element_type=f32) * (1.0 / 16.0)
    h2 = p2 - h1
    f2 = jax.nn.sigmoid(conv3x3(h2, w_fe_ref[0]) + p2)
    fe = conv3x3(p2, w_fe_ref[1]) * f2
    fe = conv3x3(fe, w_fe_ref[2])
    p2 = jnp.maximum(fe, 0.0)

    # ---- conv1(cat([path_3, path_4, path_2])) in ONE dot + f32 residual ------
    cat = jnp.concatenate([p3, p4, p2], axis=0).astype(bf16)           # (2*ch, L)
    out = jnp.dot(w_out_ref[...], cat, preferred_element_type=f32) + x
    o_ref[...] = out[None].astype(o_ref.dtype)


# --------------------------- spatial helper constants -------------------------
def _tap_masks(H, W):
    """(9, 1, H*W) validity masks for the 9 taps of a padding=1 3x3 conv."""
    yy = np.arange(H)[:, None]
    xx = np.arange(W)[None, :]
    rows = []
    for ky in range(3):
        for kx in range(3):
            dy, dx = ky - 1, kx - 1
            valid = ((yy + dy >= 0) & (yy + dy < H) &
                     (xx + dx >= 0) & (xx + dx < W))
            rows.append(valid.reshape(-1))
    return np.stack(rows).astype(np.float32)[:, None, :]


def _pool_matrices(H, W):
    """One-hot (HW, nb) membership matrix of the 4x4 pooling blocks."""
    p = np.arange(H * W)
    blk = (p // W // 4) * (W // 4) + (p % W // 4)
    nb = (H // 4) * (W // 4)
    r = np.zeros((H * W, nb), np.float32)
    r[np.arange(H * W), blk] = 1.0
    return r


# ------------------------------- wrapper --------------------------------------
def hffb_forward(x_nchw, kp, *, images_per_step=None):
    """x_nchw: (B, n_feat, H, W). kp: kernel-layout params from pack_params()."""
    B, n_feat, H, W = x_nchw.shape
    assert n_feat % 4 == 0 and H % 4 == 0 and W % 4 == 0
    ch, c3 = n_feat // 2, n_feat // 4
    mid = kp["w_c1"].shape[0]
    HW = H * W
    nb = (H // 4) * (W // 4)

    bb = B if images_per_step is None else images_per_step
    assert B % bb == 0
    nsteps = B // bb           # on v7x prefer nsteps a multiple of 2 when B allows
    L = bb * HW

    # Fold bb images into the lane axis: (nsteps, n_feat, bb*HW).  bb == 1 is a
    # free reshape; bb > 1 is one small XLA transpose that buys N = bb*HW lanes
    # for every in-kernel matmul and amortizes per-grid-step overhead.
    x = (x_nchw.reshape(nsteps, bb, n_feat, HW)
         .transpose(0, 2, 1, 3)
         .reshape(nsteps, n_feat, L))

    masks = jnp.asarray(np.tile(_tap_masks(H, W), (1, 1, bb)))          # f32
    r_np = np.kron(np.eye(bb, dtype=np.float32), _pool_matrices(H, W))  # (L, bb*nb)
    r = jnp.asarray(r_np, jnp.bfloat16)                                 # one-hot: exact
    rt = jnp.asarray(np.ascontiguousarray(r_np.T), jnp.bfloat16)

    def rep(shape):                                # replicated across the grid
        zero = (0,) * len(shape)
        return pl.BlockSpec(shape, lambda s: zero)

    kernel = functools.partial(_hffb_kernel, width=W, hw=HW, bb=bb,
                               c3=c3, inv_hw=1.0 / HW)

    out = pl.pallas_call(
        kernel,
        out_shape=jax.ShapeDtypeStruct((nsteps, n_feat, L), x.dtype),
        grid_spec=pltpu.PrefetchScalarGridSpec(
            num_scalar_prefetch=0,
            grid=(nsteps,),
            in_specs=[
                pl.BlockSpec((1, n_feat, L), lambda s: (s, 0, 0)),   # x
                rep((9, 1, L)),            # tap masks
                rep((L, bb * nb)),         # pooling membership (block-diagonal)
                rep((bb * nb, L)),         # and its transpose
                rep((n_feat, n_feat)),     # w_in  [path_1 ; path_2]
                rep((c3, 9 * c3)),         # w_dwpw (folded depthwise+pointwise)
                rep((c3, 1)),              # b_pw
                rep((c3, 9 * c3)),         # w_cv
                rep((mid, c3)),            # w_c1
                rep((mid, 1)),             # b_c1
                rep((c3, mid)),            # w_c2
                rep((c3, 1)),              # b_c2
                rep((3, ch, 9 * ch)),      # w_fe (k2, k3, k4)
                rep((n_feat, 2 * ch)),     # w_out
            ],
            out_specs=pl.BlockSpec((1, n_feat, L), lambda s: (s, 0, 0)),
        ),
        input_output_aliases={0: 0},               # residual: reuse x's HBM buffer
        compiler_params=pltpu.CompilerParams(
            dimension_semantics=("parallel",),     # shard grid steps over TCs (v7x)
            vmem_limit_bytes=32 * 1024 * 1024,     # usage ~1-2 MiB at these shapes
        ),
    )(x, masks, r, rt,
      kp["w_in"], kp["w_dwpw"], kp["b_pw"], kp["w_cv"],
      kp["w_c1"], kp["b_c1"], kp["w_c2"], kp["b_c2"],
      kp["w_fe"], kp["w_out"])

    # unfold lanes back to NCHW (inverse of the fold above)
    return (out.reshape(nsteps, n_feat, bb, HW)
            .transpose(0, 2, 1, 3)
            .reshape(B, n_feat, H, W))


# ------------------------------ parameters ------------------------------------
def _weight_norm(v, g):
    """PyTorch weight_norm with dim=0: w = g * v / ||v|| (norm over dims 1..)."""
    norm = jnp.sqrt(jnp.sum(v * v, axis=tuple(range(1, v.ndim)), keepdims=True))
    return g * v / norm


def make_params(n_feat, key):
    """Random HFFB parameters; weight-norm materialized into effective weights."""
    ch, c3 = n_feat // 2, n_feat // 4
    mid = c3 // 4                                  # CCA reduction = 4
    keys = iter(jax.random.split(key, 32))

    def wn_conv(cout, cin, k):
        v = 0.1 * jax.random.normal(next(keys), (cout, cin, k, k), jnp.float32)
        g = 1.0 + 0.1 * jax.random.normal(next(keys), (cout, 1, 1, 1), jnp.float32)
        return _weight_norm(v, g)

    def bias(cout):
        return 0.1 * jax.random.normal(next(keys), (cout,), jnp.float32)

    return dict(
        w_path1=wn_conv(ch, n_feat, 1),
        w_path2=wn_conv(ch, n_feat, 1),
        w_dw=wn_conv(c3, 1, 3),                    # depthwise (groups == c3)
        w_pw=wn_conv(c3, c3, 1), b_pw=bias(c3),
        w_conv=wn_conv(c3, c3, 3),
        w_cca1=wn_conv(mid, c3, 1), b_cca1=bias(mid),
        w_cca2=wn_conv(c3, mid, 1), b_cca2=bias(c3),
        w_k2=wn_conv(ch, ch, 3),
        w_k3=wn_conv(ch, ch, 3),
        w_k4=wn_conv(ch, ch, 3),
        w_out=wn_conv(n_feat, 2 * ch, 1),
    )


def pack_params(p, n_feat):
    """Pack effective OIHW weights into the kernel's stacked bf16 operands."""
    ch, c3 = n_feat // 2, n_feat // 4
    bf16 = jnp.bfloat16

    def stack_w(w):        # (O, I, 3, 3) -> (O, 9*I); column index = t*I + i
        O, I = w.shape[0], w.shape[1]
        return jnp.transpose(w, (0, 2, 3, 1)).reshape(O, 9 * I)

    # fold depthwise + pointwise: W[o, t*c3 + c] = pw[o, c] * dw[c, t]
    dw2d = p["w_dw"].reshape(c3, 9)                # (c, t)
    pw2d = p["w_pw"][:, :, 0, 0]                   # (o, c)
    folded = (pw2d[:, None, :] * dw2d.T[None, :, :]).reshape(c3, 9 * c3)

    w_in = jnp.concatenate([p["w_path1"][:, :, 0, 0],
                            p["w_path2"][:, :, 0, 0]], axis=0)

    return dict(
        w_in=w_in.astype(bf16),                                 # (n_feat, n_feat)
        w_dwpw=folded.astype(bf16),                             # (c3, 9*c3)
        b_pw=p["b_pw"].reshape(c3, 1),                          # f32
        w_cv=stack_w(p["w_conv"]).astype(bf16),                 # (c3, 9*c3)
        w_c1=p["w_cca1"][:, :, 0, 0],                           # f32 (mid, c3)
        b_c1=p["b_cca1"].reshape(-1, 1),
        w_c2=p["w_cca2"][:, :, 0, 0],
        b_c2=p["b_cca2"].reshape(-1, 1),
        w_fe=jnp.stack([stack_w(p["w_k2"]), stack_w(p["w_k3"]),
                        stack_w(p["w_k4"])]).astype(bf16),      # (3, ch, 9*ch)
        w_out=p["w_out"][:, :, 0, 0].astype(bf16),              # (n_feat, 2*ch)
    )


# ------------------------------ reference -------------------------------------
def reference(x, p, n_feat):
    """Pure-JAX (XLA) HFFB forward in NCHW at f32/HIGHEST, for correctness."""
    ch, c3 = n_feat // 2, n_feat // 4
    hp = lax.Precision.HIGHEST
    dn = ("NCHW", "OIHW", "NCHW")

    def conv1x1(t, w):
        return lax.conv_general_dilated(t, w, (1, 1), "VALID",
                                        dimension_numbers=dn, precision=hp)

    def conv3x3(t, w, groups=1):
        return lax.conv_general_dilated(t, w, (1, 1), ((1, 1), (1, 1)),
                                        dimension_numbers=dn,
                                        feature_group_count=groups, precision=hp)

    relu = lambda t: jnp.maximum(t, 0.0)
    B, _, H, W = x.shape

    p1 = relu(conv1x1(x, p["w_path1"]))
    p3, p4 = p1[:, :c3], p1[:, c3:]
    p3 = conv3x3(p3, p["w_dw"], groups=c3)
    p3 = conv1x1(p3, p["w_pw"]) + p["b_pw"][None, :, None, None]
    p3 = conv3x3(p3, p["w_conv"])
    mu = jnp.mean(p3, axis=(2, 3), keepdims=True)
    std = jnp.sqrt(jnp.mean(jnp.square(p3 - mu), axis=(2, 3), keepdims=True))
    h = relu(conv1x1(std, p["w_cca1"]) + p["b_cca1"][None, :, None, None])
    s = jax.nn.sigmoid(conv1x1(h, p["w_cca2"]) + p["b_cca2"][None, :, None, None])
    p3 = p3 * s
    p1 = relu(jnp.concatenate([p3, p4], axis=1))

    p2 = relu(conv1x1(x, p["w_path2"]))
    pooled = p2.reshape(B, ch, H // 4, 4, W // 4, 4).mean(axis=(3, 5))
    h1 = jnp.repeat(jnp.repeat(pooled, 4, axis=2), 4, axis=3)
    h2 = p2 - h1
    f2 = jax.nn.sigmoid(conv3x3(h2, p["w_k2"]) + p2)
    fe = conv3x3(p2, p["w_k3"]) * f2
    fe = conv3x3(fe, p["w_k4"])
    p2 = relu(fe)
    return conv1x1(jnp.concatenate([p1, p2], axis=1), p["w_out"]) + x


if __name__ == "__main__":
    B, n_feat, H, W = 2, 32, 16, 16        # channels=16, channels_3=8, CCA mid=2

    key = jax.random.PRNGKey(0)
    kx, kp_key = jax.random.split(key)
    x = jax.random.normal(kx, (B, n_feat, H, W), jnp.float32)
    params = make_params(n_feat, kp_key)
    kparams = pack_params(params, n_feat)

    fwd = jax.jit(functools.partial(hffb_forward, images_per_step=B))
    out = jax.block_until_ready(fwd(x, kparams))

    ref = reference(x, params, n_feat)
    assert out.shape == (B, n_feat, H, W)
    err = float(jnp.max(jnp.abs(out - ref)))
    scale = float(jnp.max(jnp.abs(ref)))
    # bf16 MXU operands with f32 accumulation vs an f32/HIGHEST reference:
    # tolerance is relative to the output scale (per perf-review guidance).
    assert err <= 3e-2 * max(scale, 1.0) + 1e-2, f"max abs error {err} (scale {scale})"

    print("KERNEL_OK")
</pallas_src>

<mosaic_0001>
module attributes {stable_mosaic.version = 11 : i64} {
  func.func @_hffb_kernel(%arg0: i32, %arg1: memref<1x32x512xf32, #tpu.memory_space<vmem>>, %arg2: memref<9x1x512xf32, #tpu.memory_space<vmem>>, %arg3: memref<512x32xbf16, #tpu.memory_space<vmem>>, %arg4: memref<32x512xbf16, #tpu.memory_space<vmem>>, %arg5: memref<32x32xbf16, #tpu.memory_space<vmem>>, %arg6: memref<8x72xbf16, #tpu.memory_space<vmem>>, %arg7: memref<8x1xf32, #tpu.memory_space<vmem>>, %arg8: memref<8x72xbf16, #tpu.memory_space<vmem>>, %arg9: memref<2x8xf32, #tpu.memory_space<vmem>>, %arg10: memref<2x1xf32, #tpu.memory_space<vmem>>, %arg11: memref<8x2xf32, #tpu.memory_space<vmem>>, %arg12: memref<8x1xf32, #tpu.memory_space<vmem>>, %arg13: memref<3x16x144xbf16, #tpu.memory_space<vmem>>, %arg14: memref<32x32xbf16, #tpu.memory_space<vmem>>, %arg15: memref<1x32x512xf32, #tpu.memory_space<vmem>>) attributes {dimension_semantics = [#tpu.dimension_semantics<parallel>], iteration_bounds = array<i64: 1>, scalar_prefetch = 0 : i64, scratch_operands = 0 : i64, tpu.core_type = #tpu.core_type<tc>, window_params = [{transform_indices = @transform_0, window_bounds = array<i64: 1, 32, 512>}, {pipeline_mode = #tpu.pipeline_mode<synchronous>, transform_indices = @transform_1, window_bounds = array<i64: 9, 1, 512>}, {pipeline_mode = #tpu.pipeline_mode<synchronous>, transform_indices = @transform_2, window_bounds = array<i64: 512, 32>}, {pipeline_mode = #tpu.pipeline_mode<synchronous>, transform_indices = @transform_3, window_bounds = array<i64: 32, 512>}, {pipeline_mode = #tpu.pipeline_mode<synchronous>, transform_indices = @transform_4, window_bounds = array<i64: 32, 32>}, {pipeline_mode = #tpu.pipeline_mode<synchronous>, transform_indices = @transform_5, window_bounds = array<i64: 8, 72>}, {pipeline_mode = #tpu.pipeline_mode<synchronous>, transform_indices = @transform_6, window_bounds = array<i64: 8, 1>}, {pipeline_mode = #tpu.pipeline_mode<synchronous>, transform_indices = @transform_7, window_bounds = array<i64: 8, 72>}, {pipeline_mode = #tpu.pipeline_mode<synchronous>, transform_indices = @transform_8, window_bounds = array<i64: 2, 8>}, {pipeline_mode = #tpu.pipeline_mode<synchronous>, transform_indices = @transform_9, window_bounds = array<i64: 2, 1>}, {pipeline_mode = #tpu.pipeline_mode<synchronous>, transform_indices = @transform_10, window_bounds = array<i64: 8, 2>}, {pipeline_mode = #tpu.pipeline_mode<synchronous>, transform_indices = @transform_11, window_bounds = array<i64: 8, 1>}, {pipeline_mode = #tpu.pipeline_mode<synchronous>, transform_indices = @transform_12, window_bounds = array<i64: 3, 16, 144>}, {pipeline_mode = #tpu.pipeline_mode<synchronous>, transform_indices = @transform_13, window_bounds = array<i64: 32, 32>}, {transform_indices = @transform_14, window_bounds = array<i64: 1, 32, 512>}]} {
    %c0 = arith.constant 0 : index
    %c0_0 = arith.constant 0 : index
    %c0_1 = arith.constant 0 : index
    %0 = vector.load %arg1[%c0, %c0_0, %c0_1] : memref<1x32x512xf32, #tpu.memory_space<vmem>>, vector<1x32x512xf32>
    %1 = vector.shape_cast %0 : vector<1x32x512xf32> to vector<32x512xf32>
    %c0_2 = arith.constant 0 : index
    %c0_3 = arith.constant 0 : index
    %c0_4 = arith.constant 0 : index
    %2 = vector.load %arg2[%c0_2, %c0_3, %c0_4] : memref<9x1x512xf32, #tpu.memory_space<vmem>>, vector<9x1x512xf32>
    %c0_5 = arith.constant 0 : index
    %c0_6 = arith.constant 0 : index
    %3 = vector.load %arg5[%c0_5, %c0_6] : memref<32x32xbf16, #tpu.memory_space<vmem>>, vector<32x32xbf16>
    %4 = arith.truncf %1 : vector<32x512xf32> to vector<32x512xbf16>
    %cst = arith.constant dense<0.000000e+00> : vector<32x512xf32>
    %5 = tpu.matmul %3, %4, %cst {dimension_numbers = #tpu.dot_dimension_numbers<[1], [0], [0], [1], [0, 0, 1, 1], [], []>} : vector<32x32xbf16>, vector<32x512xbf16>, vector<32x512xf32> -> vector<32x512xf32>
    %cst_7 = arith.constant 0.000000e+00 : f32
    %6 = vector.broadcast %cst_7 : f32 to vector<32x512xf32>
    %7 = arith.maximumf %5, %6 : vector<32x512xf32>
    %8 = vector.extract_strided_slice %7 {offsets = [0, 0], sizes = [8, 512], strides = [1, 1]} : vector<32x512xf32> to vector<8x512xf32>
    %9 = vector.extract_strided_slice %7 {offsets = [8, 0], sizes = [8, 512], strides = [1, 1]} : vector<32x512xf32> to vector<8x512xf32>
    %10 = vector.extract_strided_slice %7 {offsets = [16, 0], sizes = [16, 512], strides = [1, 1]} : vector<32x512xf32> to vector<16x512xf32>
    %c0_8 = arith.constant 0 : index
    %c0_9 = arith.constant 0 : index
    %11 = vector.load %arg6[%c0_8, %c0_9] : memref<8x72xbf16, #tpu.memory_space<vmem>>, vector<8x72xbf16>
    %c17_i32 = arith.constant 17 : i32
    %12 = tpu.dynamic_rotate %8 by %c17_i32 dim 1 : vector<8x512xf32>, i32 -> vector<8x512xf32>
    %13 = vector.extract_strided_slice %2 {offsets = [0, 0, 0], sizes = [1, 1, 512], strides = [1, 1, 1]} : vector<9x1x512xf32> to vector<1x1x512xf32>
    %14 = vector.shape_cast %13 : vector<1x1x512xf32> to vector<1x512xf32>
    %15 = vector.broadcast %14 : vector<1x512xf32> to vector<8x512xf32>
    %16 = arith.mulf %12, %15 : vector<8x512xf32>
    %c16_i32 = arith.constant 16 : i32
    %17 = tpu.dynamic_rotate %8 by %c16_i32 dim 1 : vector<8x512xf32>, i32 -> vector<8x512xf32>
    %18 = vector.extract_strided_slice %2 {offsets = [1, 0, 0], sizes = [1, 1, 512], strides = [1, 1, 1]} : vector<9x1x512xf32> to vector<1x1x512xf32>
    %19 = vector.shape_cast %18 : vector<1x1x512xf32> to vector<1x512xf32>
    %20 = vector.broadcast %19 : vector<1x512xf32> to vector<8x512xf32>
    %21 = arith.mulf %17, %20 : vector<8x512xf32>
    %c15_i32 = arith.constant 15 : i32
    %22 = tpu.dynamic_rotate %8 by %c15_i32 dim 1 : vector<8x512xf32>, i32 -> vector<8x512xf32>
    %23 = vector.extract_strided_slice %2 {offsets = [2, 0, 0], sizes = [1, 1, 512], strides = [1, 1, 1]} : vector<9x1x512xf32> to vector<1x1x512xf32>
    %24 = vector.shape_cast %23 : vector<1x1x512xf32> to vector<1x512xf32>
    %25 = vector.broadcast %24 : vector<1x512xf32> to vector<8x512xf32>
    %26 = arith.mulf %22, %25 : vector<8x512xf32>
    %c1_i32 = arith.constant 1 : i32
    %27 = tpu.dynamic_rotate %8 by %c1_i32 dim 1 : vector<8x512xf32>, i32 -> vector<8x512xf32>
    %28 = vector.extract_strided_slice %2 {offsets = [3, 0, 0], sizes = [1, 1, 512], strides = [1, 1, 1]} : vector<9x1x512xf32> to vector<1x1x512xf32>
    %29 = vector.shape_cast %28 : vector<1x1x512xf32> to vector<1x512xf32>
    %30 = vector.broadcast %29 : vector<1x512xf32> to vector<8x512xf32>
    %31 = arith.mulf %27, %30 : vector<8x512xf32>
    %c511_i32 = arith.constant 511 : i32
    %32 = tpu.dynamic_rotate %8 by %c511_i32 dim 1 : vector<8x512xf32>, i32 -> vector<8x512xf32>
    %33 = vector.extract_strided_slice %2 {offsets = [5, 0, 0], sizes = [1, 1, 512], strides = [1, 1, 1]} : vector<9x1x512xf32> to vector<1x1x512xf32>
    %34 = vector.shape_cast %33 : vector<1x1x512xf32> to vector<1x512xf32>
    %35 = vector.broadcast %34 : vector<1x512xf32> to vector<8x512xf32>
    %36 = arith.mulf %32, %35 : vector<8x512xf32>
    %c497_i32 = arith.constant 497 : i32
    %37 = tpu.dynamic_rotate %8 by %c497_i32 dim 1 : vector<8x512xf32>, i32 -> vector<8x512xf32>
    %38 = vector.extract_strided_slice %2 {offsets = [6, 0, 0], sizes = [1, 1, 512], strides = [1, 1, 1]} : vector<9x1x512xf32> to vector<1x1x512xf32>
    %39 = vector.shape_cast %38 : vector<1x1x512xf32> to vector<1x512xf32>
    %40 = vector.broadcast %39 : vector<1x512xf32> to vector<8x512xf32>
    %41 = arith.mulf %37, %40 : vector<8x512xf32>
    %c496_i32 = arith.constant 496 : i32
    %42 = tpu.dynamic_rotate %8 by %c496_i32 dim 1 : vector<8x512xf32>, i32 -> vector<8x512xf32>
    %43 = vector.extract_strided_slice %2 {offsets = [7, 0, 0], sizes = [1, 1, 512], strides = [1, 1, 1]} : vector<9x1x512xf32> to vector<1x1x512xf32>
    %44 = vector.shape_cast %43 : vector<1x1x512xf32> to vector<1x512xf32>
    %45 = vector.broadcast %44 : vector<1x512xf32> to vector<8x512xf32>
    %46 = arith.mulf %42, %45 : vector<8x512xf32>
    %c495_i32 = arith.constant 495 : i32
    %47 = tpu.dynamic_rotate %8 by %c495_i32 dim 1 : vector<8x512xf32>, i32 -> vector<8x512xf32>
    %48 = vector.extract_strided_slice %2 {offsets = [8, 0, 0], sizes = [1, 1, 512], strides = [1, 1, 1]} : vector<9x1x512xf32> to vector<1x1x512xf32>
    %49 = vector.shape_cast %48 : vector<1x1x512xf32> to vector<1x512xf32>
    %50 = vector.broadcast %49 : vector<1x512xf32> to vector<8x512xf32>
    %51 = arith.mulf %47, %50 : vector<8x512xf32>
    %52 = tpu.concatenate %16, %21, %26, %31, %8, %36, %41, %46, %51 in 0 : vector<8x512xf32>, vector<8x512xf32>, vector<8x512xf32>, vector<8x512xf32>, vector<8x512xf32>, vector<8x512xf32>, vector<8x512xf32>, vector<8x512xf32>, vector<8x512xf32> -> vector<72x512xf32>
    %53 = arith.truncf %52 : vector<72x512xf32> to vector<72x512xbf16>
    %cst_10 = arith.constant dense<0.000000e+00> : vector<8x512xf32>
    %54 = tpu.matmul %11, %53, %cst_10 {dimension_numbers = #tpu.dot_dimension_numbers<[1], [0], [0], [1], [0, 0, 1, 1], [], []>} : vector<8x72xbf16>, vector<72x512xbf16>, vector<8x512xf32> -> vector<8x512xf32>
    %c0_11 = arith.constant 0 : index
    %c0_12 = arith.constant 0 : index
    %55 = vector.load %arg7[%c0_11, %c0_12] : memref<8x1xf32, #tpu.memory_space<vmem>>, vector<8x1xf32>
    %56 = vector.broadcast %55 : vector<8x1xf32> to vector<8x512xf32>
    %57 = arith.addf %54, %56 : vector<8x512xf32>
    %c0_13 = arith.constant 0 : index
    %c0_14 = arith.constant 0 : index
    %58 = vector.load %arg8[%c0_13, %c0_14] : memref<8x72xbf16, #tpu.memory_space<vmem>>, vector<8x72xbf16>
    %c17_i32_15 = arith.constant 17 : i32
    %59 = tpu.dynamic_rotate %57 by %c17_i32_15 dim 1 : vector<8x512xf32>, i32 -> vector<8x512xf32>
    %60 = vector.extract_strided_slice %2 {offsets = [0, 0, 0], sizes = [1, 1, 512], strides = [1, 1, 1]} : vector<9x1x512xf32> to vector<1x1x512xf32>
    %61 = vector.shape_cast %60 : vector<1x1x512xf32> to vector<1x512xf32>
    %62 = vector.broadcast %61 : vector<1x512xf32> to vector<8x512xf32>
    %63 = arith.mulf %59, %62 : vector<8x512xf32>
    %c16_i32_16 = arith.constant 16 : i32
    %64 = tpu.dynamic_rotate %57 by %c16_i32_16 dim 1 : vector<8x512xf32>, i32 -> vector<8x512xf32>
    %65 = vector.extract_strided_slice %2 {offsets = [1, 0, 0], sizes = [1, 1, 512], strides = [1, 1, 1]} : vector<9x1x512xf32> to vector<1x1x512xf32>
    %66 = vector.shape_cast %65 : vector<1x1x512xf32> to vector<1x512xf32>
    %67 = vector.broadcast %66 : vector<1x512xf32> to vector<8x512xf32>
    %68 = arith.mulf %64, %67 : vector<8x512xf32>
    %c15_i32_17 = arith.constant 15 : i32
    %69 = tpu.dynamic_rotate %57 by %c15_i32_17 dim 1 : vector<8x512xf32>, i32 -> vector<8x512xf32>
    %70 = vector.extract_strided_slice %2 {offsets = [2, 0, 0], sizes = [1, 1, 512], strides = [1, 1, 1]} : vector<9x1x512xf32> to vector<1x1x512xf32>
    %71 = vector.shape_cast %70 : vector<1x1x512xf32> to vector<1x512xf32>
    %72 = vector.broadcast %71 : vector<1x512xf32> to vector<8x512xf32>
    %73 = arith.mulf %69, %72 : vector<8x512xf32>
    %c1_i32_18 = arith.constant 1 : i32
    %74 = tpu.dynamic_rotate %57 by %c1_i32_18 dim 1 : vector<8x512xf32>, i32 -> vector<8x512xf32>
    %75 = vector.extract_strided_slice %2 {offsets = [3, 0, 0], sizes = [1, 1, 512], strides = [1, 1, 1]} : vector<9x1x512xf32> to vector<1x1x512xf32>
    %76 = vector.shape_cast %75 : vector<1x1x512xf32> to vector<1x512xf32>
    %77 = vector.broadcast %76 : vector<1x512xf32> to vector<8x512xf32>
    %78 = arith.mulf %74, %77 : vector<8x512xf32>
    %c511_i32_19 = arith.constant 511 : i32
    %79 = tpu.dynamic_rotate %57 by %c511_i32_19 dim 1 : vector<8x512xf32>, i32 -> vector<8x512xf32>
    %80 = vector.extract_strided_slice %2 {offsets = [5, 0, 0], sizes = [1, 1, 512], strides = [1, 1, 1]} : vector<9x1x512xf32> to vector<1x1x512xf32>
    %81 = vector.shape_cast %80 : vector<1x1x512xf32> to vector<1x512xf32>
    %82 = vector.broadcast %81 : vector<1x512xf32> to vector<8x512xf32>
    %83 = arith.mulf %79, %82 : vector<8x512xf32>
    %c497_i32_20 = arith.constant 497 : i32
    %84 = tpu.dynamic_rotate %57 by %c497_i32_20 dim 1 : vector<8x512xf32>, i32 -> vector<8x512xf32>
    %85 = vector.extract_strided_slice %2 {offsets = [6, 0, 0], sizes = [1, 1, 512], strides = [1, 1, 1]} : vector<9x1x512xf32> to vector<1x1x512xf32>
    %86 = vector.shape_cast %85 : vector<1x1x512xf32> to vector<1x512xf32>
    %87 = vector.broadcast %86 : vector<1x512xf32> to vector<8x512xf32>
    %88 = arith.mulf %84, %87 : vector<8x512xf32>
    %c496_i32_21 = arith.constant 496 : i32
    %89 = tpu.dynamic_rotate %57 by %c496_i32_21 dim 1 : vector<8x512xf32>, i32 -> vector<8x512xf32>
    %90 = vector.extract_strided_slice %2 {offsets = [7, 0, 0], sizes = [1, 1, 512], strides = [1, 1, 1]} : vector<9x1x512xf32> to vector<1x1x512xf32>
    %91 = vector.shape_cast %90 : vector<1x1x512xf32> to vector<1x512xf32>
    %92 = vector.broadcast %91 : vector<1x512xf32> to vector<8x512xf32>
    %93 = arith.mulf %89, %92 : vector<8x512xf32>
    %c495_i32_22 = arith.constant 495 : i32
    %94 = tpu.dynamic_rotate %57 by %c495_i32_22 dim 1 : vector<8x512xf32>, i32 -> vector<8x512xf32>
    %95 = vector.extract_strided_slice %2 {offsets = [8, 0, 0], sizes = [1, 1, 512], strides = [1, 1, 1]} : vector<9x1x512xf32> to vector<1x1x512xf32>
    %96 = vector.shape_cast %95 : vector<1x1x512xf32> to vector<1x512xf32>
    %97 = vector.broadcast %96 : vector<1x512xf32> to vector<8x512xf32>
    %98 = arith.mulf %94, %97 : vector<8x512xf32>
    %99 = tpu.concatenate %63, %68, %73, %78, %57, %83, %88, %93, %98 in 0 : vector<8x512xf32>, vector<8x512xf32>, vector<8x512xf32>, vector<8x512xf32>, vector<8x512xf32>, vector<8x512xf32>, vector<8x512xf32>, vector<8x512xf32>, vector<8x512xf32> -> vector<72x512xf32>
    %100 = arith.truncf %99 : vector<72x512xf32> to vector<72x512xbf16>
    %cst_23 = arith.constant dense<0.000000e+00> : vector<8x512xf32>
    %101 = tpu.matmul %58, %100, %cst_23 {dimension_numbers = #tpu.dot_dimension_numbers<[1], [0], [0], [1], [0, 0, 1, 1], [], []>} : vector<8x72xbf16>, vector<72x512xbf16>, vector<8x512xf32> -> vector<8x512xf32>
    %102 = vector.extract_strided_slice %101 {offsets = [0, 0], sizes = [8, 256], strides = [1, 1]} : vector<8x512xf32> to vector<8x256xf32>
    %cst_24 = arith.constant dense<0.000000e+00> : vector<8xf32>
    %103 = vector.multi_reduction <add>, %102, %cst_24 [1] : vector<8x256xf32> to vector<8xf32>
    %104 = vector.shape_cast %103 : vector<8xf32> to vector<8x1xf32>
    %cst_25 = arith.constant 3.906250e-03 : f32
    %105 = vector.broadcast %cst_25 : f32 to vector<8x1xf32>
    %106 = arith.mulf %104, %105 : vector<8x1xf32>
    %107 = arith.mulf %102, %102 : vector<8x256xf32>
    %cst_26 = arith.constant dense<0.000000e+00> : vector<8xf32>
    %108 = vector.multi_reduction <add>, %107, %cst_26 [1] : vector<8x256xf32> to vector<8xf32>
    %109 = vector.shape_cast %108 : vector<8xf32> to vector<8x1xf32>
    %cst_27 = arith.constant 3.906250e-03 : f32
    %110 = vector.broadcast %cst_27 : f32 to vector<8x1xf32>
    %111 = arith.mulf %109, %110 : vector<8x1xf32>
    %112 = arith.mulf %106, %106 : vector<8x1xf32>
    %113 = arith.subf %111, %112 : vector<8x1xf32>
    %cst_28 = arith.constant 0.000000e+00 : f32
    %114 = vector.broadcast %cst_28 : f32 to vector<8x1xf32>
    %115 = arith.maximumf %113, %114 : vector<8x1xf32>
    %116 = math.sqrt %115 : vector<8x1xf32>
    %117 = vector.extract_strided_slice %101 {offsets = [0, 256], sizes = [8, 256], strides = [1, 1]} : vector<8x512xf32> to vector<8x256xf32>
    %cst_29 = arith.constant dense<0.000000e+00> : vector<8xf32>
    %118 = vector.multi_reduction <add>, %117, %cst_29 [1] : vector<8x256xf32> to vector<8xf32>
    %119 = vector.shape_cast %118 : vector<8xf32> to vector<8x1xf32>
    %cst_30 = arith.constant 3.906250e-03 : f32
    %120 = vector.broadcast %cst_30 : f32 to vector<8x1xf32>
    %121 = arith.mulf %119, %120 : vector<8x1xf32>
    %122 = arith.mulf %117, %117 : vector<8x256xf32>
    %cst_31 = arith.constant dense<0.000000e+00> : vector<8xf32>
    %123 = vector.multi_reduction <add>, %122, %cst_31 [1] : vector<8x256xf32> to vector<8xf32>
    %124 = vector.shape_cast %123 : vector<8xf32> to vector<8x1xf32>
    %cst_32 = arith.constant 3.906250e-03 : f32
    %125 = vector.broadcast %cst_32 : f32 to vector<8x1xf32>
    %126 = arith.mulf %124, %125 : vector<8x1xf32>
    %127 = arith.mulf %121, %121 : vector<8x1xf32>
    %128 = arith.subf %126, %127 : vector<8x1xf32>
    %cst_33 = arith.constant 0.000000e+00 : f32
    %129 = vector.broadcast %cst_33 : f32 to vector<8x1xf32>
    %130 = arith.maximumf %128, %129 : vector<8x1xf32>
    %131 = math.sqrt %130 : vector<8x1xf32>
    %132 = tpu.concatenate %116, %131 in 1 : vector<8x1xf32>, vector<8x1xf32> -> vector<8x2xf32>
    %c0_34 = arith.constant 0 : index
    %c0_35 = arith.constant 0 : index
    %133 = vector.load %arg9[%c0_34, %c0_35] : memref<2x8xf32, #tpu.memory_space<vmem>>, vector<2x8xf32>
    %cst_36 = arith.constant dense<0.000000e+00> : vector<2x2xf32>
    %134 = tpu.matmul %133, %132, %cst_36 {dimension_numbers = #tpu.dot_dimension_numbers<[1], [0], [0], [1], [0, 0, 1, 1], [], []>} : vector<2x8xf32>, vector<8x2xf32>, vector<2x2xf32> -> vector<2x2xf32>
    %c0_37 = arith.constant 0 : index
    %c0_38 = arith.constant 0 : index
    %135 = vector.load %arg10[%c0_37, %c0_38] : memref<2x1xf32, #tpu.memory_space<vmem>>, vector<2x1xf32>
    %136 = vector.broadcast %135 : vector<2x1xf32> to vector<2x2xf32>
    %137 = arith.addf %134, %136 : vector<2x2xf32>
    %cst_39 = arith.constant 0.000000e+00 : f32
    %138 = vector.broadcast %cst_39 : f32 to vector<2x2xf32>
    %139 = arith.maximumf %137, %138 : vector<2x2xf32>
    %c0_40 = arith.constant 0 : index
    %c0_41 = arith.constant 0 : index
    %140 = vector.load %arg11[%c0_40, %c0_41] : memref<8x2xf32, #tpu.memory_space<vmem>>, vector<8x2xf32>
    %cst_42 = arith.constant dense<0.000000e+00> : vector<8x2xf32>
    %141 = tpu.matmul %140, %139, %cst_42 {dimension_numbers = #tpu.dot_dimension_numbers<[1], [0], [0], [1], [0, 0, 1, 1], [], []>} : vector<8x2xf32>, vector<2x2xf32>, vector<8x2xf32> -> vector<8x2xf32>
    %c0_43 = arith.constant 0 : index
    %c0_44 = arith.constant 0 : index
    %142 = vector.load %arg12[%c0_43, %c0_44] : memref<8x1xf32, #tpu.memory_space<vmem>>, vector<8x1xf32>
    %143 = vector.broadcast %142 : vector<8x1xf32> to vector<8x2xf32>
    %144 = arith.addf %141, %143 : vector<8x2xf32>
    %145 = arith.negf %144 : vector<8x2xf32>
    %146 = math.exp %145 : vector<8x2xf32>
    %cst_45 = arith.constant 1.000000e+00 : f32
    %147 = vector.broadcast %cst_45 : f32 to vector<8x2xf32>
    %148 = arith.addf %147, %146 : vector<8x2xf32>
    %149 = arith.divf %147, %148 : vector<8x2xf32>
    %150 = vector.extract_strided_slice %149 {offsets = [0, 0], sizes = [8, 1], strides = [1, 1]} : vector<8x2xf32> to vector<8x1xf32>
    %151 = vector.shape_cast %150 : vector<8x1xf32> to vector<8x1xf32>
    %152 = vector.broadcast %151 : vector<8x1xf32> to vector<8x256xf32>
    %153 = vector.extract_strided_slice %149 {offsets = [0, 1], sizes = [8, 1], strides = [1, 1]} : vector<8x2xf32> to vector<8x1xf32>
    %154 = vector.shape_cast %153 : vector<8x1xf32> to vector<8x1xf32>
    %155 = vector.broadcast %154 : vector<8x1xf32> to vector<8x256xf32>
    %156 = tpu.concatenate %152, %155 in 1 : vector<8x256xf32>, vector<8x256xf32> -> vector<8x512xf32>
    %157 = arith.mulf %101, %156 : vector<8x512xf32>
    %cst_46 = arith.constant 0.000000e+00 : f32
    %158 = vector.broadcast %cst_46 : f32 to vector<8x512xf32>
    %159 = arith.maximumf %157, %158 : vector<8x512xf32>
    %160 = arith.truncf %10 : vector<16x512xf32> to vector<16x512xbf16>
    %c0_47 = arith.constant 0 : index
    %c0_48 = arith.constant 0 : index
    %161 = vector.load %arg3[%c0_47, %c0_48] : memref<512x32xbf16, #tpu.memory_space<vmem>>, vector<512x32xbf16>
    %cst_49 = arith.constant dense<0.000000e+00> : vector<16x32xf32>
    %162 = tpu.matmul %160, %161, %cst_49 {dimension_numbers = #tpu.dot_dimension_numbers<[1], [0], [0], [1], [0, 0, 1, 1], [], []>} : vector<16x512xbf16>, vector<512x32xbf16>, vector<16x32xf32> -> vector<16x32xf32>
    %163 = arith.truncf %162 : vector<16x32xf32> to vector<16x32xbf16>
    %c0_50 = arith.constant 0 : index
    %c0_51 = arith.constant 0 : index
    %164 = vector.load %arg4[%c0_50, %c0_51] : memref<32x512xbf16, #tpu.memory_space<vmem>>, vector<32x512xbf16>
    %cst_52 = arith.constant dense<0.000000e+00> : vector<16x512xf32>
    %165 = tpu.matmul %163, %164, %cst_52 {dimension_numbers = #tpu.dot_dimension_numbers<[1], [0], [0], [1], [0, 0, 1, 1], [], []>} : vector<16x32xbf16>, vector<32x512xbf16>, vector<16x512xf32> -> vector<16x512xf32>
    %cst_53 = arith.constant 6.250000e-02 : f32
    %166 = vector.broadcast %cst_53 : f32 to vector<16x512xf32>
    %167 = arith.mulf %165, %166 : vector<16x512xf32>
    %168 = arith.subf %10, %167 : vector<16x512xf32>
    %c0_54 = arith.constant 0 : index
    %c0_55 = arith.constant 0 : index
    %c0_56 = arith.constant 0 : index
    %169 = vector.load %arg13[%c0_54, %c0_55, %c0_56] : memref<3x16x144xbf16, #tpu.memory_space<vmem>>, vector<1x16x144xbf16>
    %170 = vector.shape_cast %169 : vector<1x16x144xbf16> to vector<16x144xbf16>
    %c17_i32_57 = arith.constant 17 : i32
    %171 = tpu.dynamic_rotate %168 by %c17_i32_57 dim 1 : vector<16x512xf32>, i32 -> vector<16x512xf32>
    %172 = vector.extract_strided_slice %2 {offsets = [0, 0, 0], sizes = [1, 1, 512], strides = [1, 1, 1]} : vector<9x1x512xf32> to vector<1x1x512xf32>
    %173 = vector.shape_cast %172 : vector<1x1x512xf32> to vector<1x512xf32>
    %174 = vector.broadcast %173 : vector<1x512xf32> to vector<16x512xf32>
    %175 = arith.mulf %171, %174 : vector<16x512xf32>
    %c16_i32_58 = arith.constant 16 : i32
    %176 = tpu.dynamic_rotate %168 by %c16_i32_58 dim 1 : vector<16x512xf32>, i32 -> vector<16x512xf32>
    %177 = vector.extract_strided_slice %2 {offsets = [1, 0, 0], sizes = [1, 1, 512], strides = [1, 1, 1]} : vector<9x1x512xf32> to vector<1x1x512xf32>
    %178 = vector.shape_cast %177 : vector<1x1x512xf32> to vector<1x512xf32>
    %179 = vector.broadcast %178 : vector<1x512xf32> to vector<16x512xf32>
    %180 = arith.mulf %176, %179 : vector<16x512xf32>
    %c15_i32_59 = arith.constant 15 : i32
    %181 = tpu.dynamic_rotate %168 by %c15_i32_59 dim 1 : vector<16x512xf32>, i32 -> vector<16x512xf32>
    %182 = vector.extract_strided_slice %2 {offsets = [2, 0, 0], sizes = [1, 1, 512], strides = [1, 1, 1]} : vector<9x1x512xf32> to vector<1x1x512xf32>
    %183 = vector.shape_cast %182 : vector<1x1x512xf32> to vector<1x512xf32>
    %184 = vector.broadcast %183 : vector<1x512xf32> to vector<16x512xf32>
    %185 = arith.mulf %181, %184 : vector<16x512xf32>
    %c1_i32_60 = arith.constant 1 : i32
    %186 = tpu.dynamic_rotate %168 by %c1_i32_60 dim 1 : vector<16x512xf32>, i32 -> vector<16x512xf32>
    %187 = vector.extract_strided_slice %2 {offsets = [3, 0, 0], sizes = [1, 1, 512], strides = [1, 1, 1]} : vector<9x1x512xf32> to vector<1x1x512xf32>
    %188 = vector.shape_cast %187 : vector<1x1x512xf32> to vector<1x512xf32>
    %189 = vector.broadcast %188 : vector<1x512xf32> to vector<16x512xf32>
    %190 = arith.mulf %186, %189 : vector<16x512xf32>
    %c511_i32_61 = arith.constant 511 : i32
    %191 = tpu.dynamic_rotate %168 by %c511_i32_61 dim 1 : vector<16x512xf32>, i32 -> vector<16x512xf32>
    %192 = vector.extract_strided_slice %2 {offsets = [5, 0, 0], sizes = [1, 1, 512], strides = [1, 1, 1]} : vector<9x1x512xf32> to vector<1x1x512xf32>
    %193 = vector.shape_cast %192 : vector<1x1x512xf32> to vector<1x512xf32>
    %194 = vector.broadcast %193 : vector<1x512xf32> to vector<16x512xf32>
    %195 = arith.mulf %191, %194 : vector<16x512xf32>
    %c497_i32_62 = arith.constant 497 : i32
    %196 = tpu.dynamic_rotate %168 by %c497_i32_62 dim 1 : vector<16x512xf32>, i32 -> vector<16x512xf32>
    %197 = vector.extract_strided_slice %2 {offsets = [6, 0, 0], sizes = [1, 1, 512], strides = [1, 1, 1]} : vector<9x1x512xf32> to vector<1x1x512xf32>
    %198 = vector.shape_cast %197 : vector<1x1x512xf32> to vector<1x512xf32>
    %199 = vector.broadcast %198 : vector<1x512xf32> to vector<16x512xf32>
    %200 = arith.mulf %196, %199 : vector<16x512xf32>
    %c496_i32_63 = arith.constant 496 : i32
    %201 = tpu.dynamic_rotate %168 by %c496_i32_63 dim 1 : vector<16x512xf32>, i32 -> vector<16x512xf32>
    %202 = vector.extract_strided_slice %2 {offsets = [7, 0, 0], sizes = [1, 1, 512], strides = [1, 1, 1]} : vector<9x1x512xf32> to vector<1x1x512xf32>
    %203 = vector.shape_cast %202 : vector<1x1x512xf32> to vector<1x512xf32>
    %204 = vector.broadcast %203 : vector<1x512xf32> to vector<16x512xf32>
    %205 = arith.mulf %201, %204 : vector<16x512xf32>
    %c495_i32_64 = arith.constant 495 : i32
    %206 = tpu.dynamic_rotate %168 by %c495_i32_64 dim 1 : vector<16x512xf32>, i32 -> vector<16x512xf32>
    %207 = vector.extract_strided_slice %2 {offsets = [8, 0, 0], sizes = [1, 1, 512], strides = [1, 1, 1]} : vector<9x1x512xf32> to vector<1x1x512xf32>
    %208 = vector.shape_cast %207 : vector<1x1x512xf32> to vector<1x512xf32>
    %209 = vector.broadcast %208 : vector<1x512xf32> to vector<16x512xf32>
    %210 = arith.mulf %206, %209 : vector<16x512xf32>
    %211 = tpu.concatenate %175, %180, %185, %190, %168, %195, %200, %205, %210 in 0 : vector<16x512xf32>, vector<16x512xf32>, vector<16x512xf32>, vector<16x512xf32>, vector<16x512xf32>, vector<16x512xf32>, vector<16x512xf32>, vector<16x512xf32>, vector<16x512xf32> -> vector<144x512xf32>
    %212 = arith.truncf %211 : vector<144x512xf32> to vector<144x512xbf16>
    %cst_65 = arith.constant dense<0.000000e+00> : vector<16x512xf32>
    %213 = tpu.matmul %170, %212, %cst_65 {dimension_numbers = #tpu.dot_dimension_numbers<[1], [0], [0], [1], [0, 0, 1, 1], [], []>} : vector<16x144xbf16>, vector<144x512xbf16>, vector<16x512xf32> -> vector<16x512xf32>
    %214 = arith.addf %213, %10 : vector<16x512xf32>
    %215 = arith.negf %214 : vector<16x512xf32>
    %216 = math.exp %215 : vector<16x512xf32>
    %cst_66 = arith.constant 1.000000e+00 : f32
    %217 = vector.broadcast %cst_66 : f32 to vector<16x512xf32>
    %218 = arith.addf %217, %216 : vector<16x512xf32>
    %219 = arith.divf %217, %218 : vector<16x512xf32>
    %c1 = arith.constant 1 : index
    %c0_67 = arith.constant 0 : index
    %c0_68 = arith.constant 0 : index
    %220 = vector.load %arg13[%c1, %c0_67, %c0_68] : memref<3x16x144xbf16, #tpu.memory_space<vmem>>, vector<1x16x144xbf16>
    %221 = vector.shape_cast %220 : vector<1x16x144xbf16> to vector<16x144xbf16>
    %c17_i32_69 = arith.constant 17 : i32
    %222 = tpu.dynamic_rotate %10 by %c17_i32_69 dim 1 : vector<16x512xf32>, i32 -> vector<16x512xf32>
    %223 = vector.extract_strided_slice %2 {offsets = [0, 0, 0], sizes = [1, 1, 512], strides = [1, 1, 1]} : vector<9x1x512xf32> to vector<1x1x512xf32>
    %224 = vector.shape_cast %223 : vector<1x1x512xf32> to vector<1x512xf32>
    %225 = vector.broadcast %224 : vector<1x512xf32> to vector<16x512xf32>
    %226 = arith.mulf %222, %225 : vector<16x512xf32>
    %c16_i32_70 = arith.constant 16 : i32
    %227 = tpu.dynamic_rotate %10 by %c16_i32_70 dim 1 : vector<16x512xf32>, i32 -> vector<16x512xf32>
    %228 = vector.extract_strided_slice %2 {offsets = [1, 0, 0], sizes = [1, 1, 512], strides = [1, 1, 1]} : vector<9x1x512xf32> to vector<1x1x512xf32>
    %229 = vector.shape_cast %228 : vector<1x1x512xf32> to vector<1x512xf32>
    %230 = vector.broadcast %229 : vector<1x512xf32> to vector<16x512xf32>
    %231 = arith.mulf %227, %230 : vector<16x512xf32>
    %c15_i32_71 = arith.constant 15 : i32
    %232 = tpu.dynamic_rotate %10 by %c15_i32_71 dim 1 : vector<16x512xf32>, i32 -> vector<16x512xf32>
    %233 = vector.extract_strided_slice %2 {offsets = [2, 0, 0], sizes = [1, 1, 512], strides = [1, 1, 1]} : vector<9x1x512xf32> to vector<1x1x512xf32>
    %234 = vector.shape_cast %233 : vector<1x1x512xf32> to vector<1x512xf32>
    %235 = vector.broadcast %234 : vector<1x512xf32> to vector<16x512xf32>
    %236 = arith.mulf %232, %235 : vector<16x512xf32>
    %c1_i32_72 = arith.constant 1 : i32
    %237 = tpu.dynamic_rotate %10 by %c1_i32_72 dim 1 : vector<16x512xf32>, i32 -> vector<16x512xf32>
    %238 = vector.extract_strided_slice %2 {offsets = [3, 0, 0], sizes = [1, 1, 512], strides = [1, 1, 1]} : vector<9x1x512xf32> to vector<1x1x512xf32>
    %239 = vector.shape_cast %238 : vector<1x1x512xf32> to vector<1x512xf32>
    %240 = vector.broadcast %239 : vector<1x512xf32> to vector<16x512xf32>
    %241 = arith.mulf %237, %240 : vector<16x512xf32>
    %c511_i32_73 = arith.constant 511 : i32
    %242 = tpu.dynamic_rotate %10 by %c511_i32_73 dim 1 : vector<16x512xf32>, i32 -> vector<16x512xf32>
    %243 = vector.extract_strided_slice %2 {offsets = [5, 0, 0], sizes = [1, 1, 512], strides = [1, 1, 1]} : vector<9x1x512xf32> to vector<1x1x512xf32>
    %244 = vector.shape_cast %243 : vector<1x1x512xf32> to vector<1x512xf32>
    %245 = vector.broadcast %244 : vector<1x512xf32> to vector<16x512xf32>
    %246 = arith.mulf %242, %245 : vector<16x512xf32>
    %c497_i32_74 = arith.constant 497 : i32
    %247 = tpu.dynamic_rotate %10 by %c497_i32_74 dim 1 : vector<16x512xf32>, i32 -> vector<16x512xf32>
    %248 = vector.extract_strided_slice %2 {offsets = [6, 0, 0], sizes = [1, 1, 512], strides = [1, 1, 1]} : vector<9x1x512xf32> to vector<1x1x512xf32>
    %249 = vector.shape_cast %248 : vector<1x1x512xf32> to vector<1x512xf32>
    %250 = vector.broadcast %249 : vector<1x512xf32> to vector<16x512xf32>
    %251 = arith.mulf %247, %250 : vector<16x512xf32>
    %c496_i32_75 = arith.constant 496 : i32
    %252 = tpu.dynamic_rotate %10 by %c496_i32_75 dim 1 : vector<16x512xf32>, i32 -> vector<16x512xf32>
    %253 = vector.extract_strided_slice %2 {offsets = [7, 0, 0], sizes = [1, 1, 512], strides = [1, 1, 1]} : vector<9x1x512xf32> to vector<1x1x512xf32>
    %254 = vector.shape_cast %253 : vector<1x1x512xf32> to vector<1x512xf32>
    %255 = vector.broadcast %254 : vector<1x512xf32> to vector<16x512xf32>
    %256 = arith.mulf %252, %255 : vector<16x512xf32>
    %c495_i32_76 = arith.constant 495 : i32
    %257 = tpu.dynamic_rotate %10 by %c495_i32_76 dim 1 : vector<16x512xf32>, i32 -> vector<16x512xf32>
    %258 = vector.extract_strided_slice %2 {offsets = [8, 0, 0], sizes = [1, 1, 512], strides = [1, 1, 1]} : vector<9x1x512xf32> to vector<1x1x512xf32>
    %259 = vector.shape_cast %258 : vector<1x1x512xf32> to vector<1x512xf32>
    %260 = vector.broadcast %259 : vector<1x512xf32> to vector<16x512xf32>
    %261 = arith.mulf %257, %260 : vector<16x512xf32>
    %262 = tpu.concatenate %226, %231, %236, %241, %10, %246, %251, %256, %261 in 0 : vector<16x512xf32>, vector<16x512xf32>, vector<16x512xf32>, vector<16x512xf32>, vector<16x512xf32>, vector<16x512xf32>, vector<16x512xf32>, vector<16x512xf32>, vector<16x512xf32> -> vector<144x512xf32>
    %263 = arith.truncf %262 : vector<144x512xf32> to vector<144x512xbf16>
    %cst_77 = arith.constant dense<0.000000e+00> : vector<16x512xf32>
    %264 = tpu.matmul %221, %263, %cst_77 {dimension_numbers = #tpu.dot_dimension_numbers<[1], [0], [0], [1], [0, 0, 1, 1], [], []>} : vector<16x144xbf16>, vector<144x512xbf16>, vector<16x512xf32> -> vector<16x512xf32>
    %265 = arith.mulf %264, %219 : vector<16x512xf32>
    %c2 = arith.constant 2 : index
    %c0_78 = arith.constant 0 : index
    %c0_79 = arith.constant 0 : index
    %266 = vector.load %arg13[%c2, %c0_78, %c0_79] : memref<3x16x144xbf16, #tpu.memory_space<vmem>>, vector<1x16x144xbf16>
    %267 = vector.shape_cast %266 : vector<1x16x144xbf16> to vector<16x144xbf16>
    %c17_i32_80 = arith.constant 17 : i32
    %268 = tpu.dynamic_rotate %265 by %c17_i32_80 dim 1 : vector<16x512xf32>, i32 -> vector<16x512xf32>
    %269 = vector.extract_strided_slice %2 {offsets = [0, 0, 0], sizes = [1, 1, 512], strides = [1, 1, 1]} : vector<9x1x512xf32> to vector<1x1x512xf32>
    %270 = vector.shape_cast %269 : vector<1x1x512xf32> to vector<1x512xf32>
    %271 = vector.broadcast %270 : vector<1x512xf32> to vector<16x512xf32>
    %272 = arith.mulf %268, %271 : vector<16x512xf32>
    %c16_i32_81 = arith.constant 16 : i32
    %273 = tpu.dynamic_rotate %265 by %c16_i32_81 dim 1 : vector<16x512xf32>, i32 -> vector<16x512xf32>
    %274 = vector.extract_strided_slice %2 {offsets = [1, 0, 0], sizes = [1, 1, 512], strides = [1, 1, 1]} : vector<9x1x512xf32> to vector<1x1x512xf32>
    %275 = vector.shape_cast %274 : vector<1x1x512xf32> to vector<1x512xf32>
    %276 = vector.broadcast %275 : vector<1x512xf32> to vector<16x512xf32>
    %277 = arith.mulf %273, %276 : vector<16x512xf32>
    %c15_i32_82 = arith.constant 15 : i32
    %278 = tpu.dynamic_rotate %265 by %c15_i32_82 dim 1 : vector<16x512xf32>, i32 -> vector<16x512xf32>
    %279 = vector.extract_strided_slice %2 {offsets = [2, 0, 0], sizes = [1, 1, 512], strides = [1, 1, 1]} : vector<9x1x512xf32> to vector<1x1x512xf32>
    %280 = vector.shape_cast %279 : vector<1x1x512xf32> to vector<1x512xf32>
    %281 = vector.broadcast %280 : vector<1x512xf32> to vector<16x512xf32>
    %282 = arith.mulf %278, %281 : vector<16x512xf32>
    %c1_i32_83 = arith.constant 1 : i32
    %283 = tpu.dynamic_rotate %265 by %c1_i32_83 dim 1 : vector<16x512xf32>, i32 -> vector<16x512xf32>
    %284 = vector.extract_strided_slice %2 {offsets = [3, 0, 0], sizes = [1, 1, 512], strides = [1, 1, 1]} : vector<9x1x512xf32> to vector<1x1x512xf32>
    %285 = vector.shape_cast %284 : vector<1x1x512xf32> to vector<1x512xf32>
    %286 = vector.broadcast %285 : vector<1x512xf32> to vector<16x512xf32>
    %287 = arith.mulf %283, %286 : vector<16x512xf32>
    %c511_i32_84 = arith.constant 511 : i32
    %288 = tpu.dynamic_rotate %265 by %c511_i32_84 dim 1 : vector<16x512xf32>, i32 -> vector<16x512xf32>
    %289 = vector.extract_strided_slice %2 {offsets = [5, 0, 0], sizes = [1, 1, 512], strides = [1, 1, 1]} : vector<9x1x512xf32> to vector<1x1x512xf32>
    %290 = vector.shape_cast %289 : vector<1x1x512xf32> to vector<1x512xf32>
    %291 = vector.broadcast %290 : vector<1x512xf32> to vector<16x512xf32>
    %292 = arith.mulf %288, %291 : vector<16x512xf32>
    %c497_i32_85 = arith.constant 497 : i32
    %293 = tpu.dynamic_rotate %265 by %c497_i32_85 dim 1 : vector<16x512xf32>, i32 -> vector<16x512xf32>
    %294 = vector.extract_strided_slice %2 {offsets = [6, 0, 0], sizes = [1, 1, 512], strides = [1, 1, 1]} : vector<9x1x512xf32> to vector<1x1x512xf32>
    %295 = vector.shape_cast %294 : vector<1x1x512xf32> to vector<1x512xf32>
    %296 = vector.broadcast %295 : vector<1x512xf32> to vector<16x512xf32>
    %297 = arith.mulf %293, %296 : vector<16x512xf32>
    %c496_i32_86 = arith.constant 496 : i32
    %298 = tpu.dynamic_rotate %265 by %c496_i32_86 dim 1 : vector<16x512xf32>, i32 -> vector<16x512xf32>
    %299 = vector.extract_strided_slice %2 {offsets = [7, 0, 0], sizes = [1, 1, 512], strides = [1, 1, 1]} : vector<9x1x512xf32> to vector<1x1x512xf32>
    %300 = vector.shape_cast %299 : vector<1x1x512xf32> to vector<1x512xf32>
    %301 = vector.broadcast %300 : vector<1x512xf32> to vector<16x512xf32>
    %302 = arith.mulf %298, %301 : vector<16x512xf32>
    %c495_i32_87 = arith.constant 495 : i32
    %303 = tpu.dynamic_rotate %265 by %c495_i32_87 dim 1 : vector<16x512xf32>, i32 -> vector<16x512xf32>
    %304 = vector.extract_strided_slice %2 {offsets = [8, 0, 0], sizes = [1, 1, 512], strides = [1, 1, 1]} : vector<9x1x512xf32> to vector<1x1x512xf32>
    %305 = vector.shape_cast %304 : vector<1x1x512xf32> to vector<1x512xf32>
    %306 = vector.broadcast %305 : vector<1x512xf32> to vector<16x512xf32>
    %307 = arith.mulf %303, %306 : vector<16x512xf32>
    %308 = tpu.concatenate %272, %277, %282, %287, %265, %292, %297, %302, %307 in 0 : vector<16x512xf32>, vector<16x512xf32>, vector<16x512xf32>, vector<16x512xf32>, vector<16x512xf32>, vector<16x512xf32>, vector<16x512xf32>, vector<16x512xf32>, vector<16x512xf32> -> vector<144x512xf32>
    %309 = arith.truncf %308 : vector<144x512xf32> to vector<144x512xbf16>
    %cst_88 = arith.constant dense<0.000000e+00> : vector<16x512xf32>
    %310 = tpu.matmul %267, %309, %cst_88 {dimension_numbers = #tpu.dot_dimension_numbers<[1], [0], [0], [1], [0, 0, 1, 1], [], []>} : vector<16x144xbf16>, vector<144x512xbf16>, vector<16x512xf32> -> vector<16x512xf32>
    %cst_89 = arith.constant 0.000000e+00 : f32
    %311 = vector.broadcast %cst_89 : f32 to vector<16x512xf32>
    %312 = arith.maximumf %310, %311 : vector<16x512xf32>
    %313 = tpu.concatenate %159, %9, %312 in 0 : vector<8x512xf32>, vector<8x512xf32>, vector<16x512xf32> -> vector<32x512xf32>
    %314 = arith.truncf %313 : vector<32x512xf32> to vector<32x512xbf16>
    %c0_90 = arith.constant 0 : index
    %c0_91 = arith.constant 0 : index
    %315 = vector.load %arg14[%c0_90, %c0_91] : memref<32x32xbf16, #tpu.memory_space<vmem>>, vector<32x32xbf16>
    %cst_92 = arith.constant dense<0.000000e+00> : vector<32x512xf32>
    %316 = tpu.matmul %315, %314, %cst_92 {dimension_numbers = #tpu.dot_dimension_numbers<[1], [0], [0], [1], [0, 0, 1, 1], [], []>} : vector<32x32xbf16>, vector<32x512xbf16>, vector<32x512xf32> -> vector<32x512xf32>
    %317 = arith.addf %316, %1 : vector<32x512xf32>
    %318 = vector.shape_cast %317 : vector<32x512xf32> to vector<1x32x512xf32>
    %c0_93 = arith.constant 0 : index
    %c0_94 = arith.constant 0 : index
    %c0_95 = arith.constant 0 : index
    %319 = vector.load %arg15[%c0_93, %c0_94, %c0_95] : memref<1x32x512xf32, #tpu.memory_space<vmem>>, vector<1x32x512xf32>
    tpu.vector_store %arg15[%c0_93, %c0_94, %c0_95], %318 {strides = array<i32>} : memref<1x32x512xf32, #tpu.memory_space<vmem>>, vector<1x32x512xf32>,
    return
  }
  func.func @transform_0(%arg0: i32) -> (i32, i32, i32) {
    %c0_i32 = arith.constant 0 : i32
    %c0_i32_0 = arith.constant 0 : i32
    %c0_i32_1 = arith.constant 0 : i32
    return %arg0, %c0_i32, %c0_i32_0 : i32, i32, i32
  }
  func.func @transform_1(%arg0: i32) -> (i32, i32, i32) {
    %c0_i32 = arith.constant 0 : i32
    %c0_i32_0 = arith.constant 0 : i32
    %c0_i32_1 = arith.constant 0 : i32
    %c0_i32_2 = arith.constant 0 : i32
    return %c0_i32, %c0_i32_0, %c0_i32_1 : i32, i32, i32
  }
  func.func @transform_2(%arg0: i32) -> (i32, i32) {
    %c0_i32 = arith.constant 0 : i32
    %c0_i32_0 = arith.constant 0 : i32
    %c0_i32_1 = arith.constant 0 : i32
    return %c0_i32, %c0_i32_0 : i32, i32
  }
  func.func @transform_3(%arg0: i32) -> (i32, i32) {
    %c0_i32 = arith.constant 0 : i32
    %c0_i32_0 = arith.constant 0 : i32
    %c0_i32_1 = arith.constant 0 : i32
    return %c0_i32, %c0_i32_0 : i32, i32
  }
  func.func @transform_4(%arg0: i32) -> (i32, i32) {
    %c0_i32 = arith.constant 0 : i32
    %c0_i32_0 = arith.constant 0 : i32
    %c0_i32_1 = arith.constant 0 : i32
    return %c0_i32, %c0_i32_0 : i32, i32
  }
  func.func @transform_5(%arg0: i32) -> (i32, i32) {
    %c0_i32 = arith.constant 0 : i32
    %c0_i32_0 = arith.constant 0 : i32
    %c0_i32_1 = arith.constant 0 : i32
    return %c0_i32, %c0_i32_0 : i32, i32
  }
  func.func @transform_6(%arg0: i32) -> (i32, i32) {
    %c0_i32 = arith.constant 0 : i32
    %c0_i32_0 = arith.constant 0 : i32
    %c0_i32_1 = arith.constant 0 : i32
    return %c0_i32, %c0_i32_0 : i32, i32
  }
  func.func @transform_7(%arg0: i32) -> (i32, i32) {
    %c0_i32 = arith.constant 0 : i32
    %c0_i32_0 = arith.constant 0 : i32
    %c0_i32_1 = arith.constant 0 : i32
    return %c0_i32, %c0_i32_0 : i32, i32
  }
  func.func @transform_8(%arg0: i32) -> (i32, i32) {
    %c0_i32 = arith.constant 0 : i32
    %c0_i32_0 = arith.constant 0 : i32
    %c0_i32_1 = arith.constant 0 : i32
    return %c0_i32, %c0_i32_0 : i32, i32
  }
  func.func @transform_9(%arg0: i32) -> (i32, i32) {
    %c0_i32 = arith.constant 0 : i32
    %c0_i32_0 = arith.constant 0 : i32
    %c0_i32_1 = arith.constant 0 : i32
    return %c0_i32, %c0_i32_0 : i32, i32
  }
  func.func @transform_10(%arg0: i32) -> (i32, i32) {
    %c0_i32 = arith.constant 0 : i32
    %c0_i32_0 = arith.constant 0 : i32
    %c0_i32_1 = arith.constant 0 : i32
    return %c0_i32, %c0_i32_0 : i32, i32
  }
  func.func @transform_11(%arg0: i32) -> (i32, i32) {
    %c0_i32 = arith.constant 0 : i32
    %c0_i32_0 = arith.constant 0 : i32
    %c0_i32_1 = arith.constant 0 : i32
    return %c0_i32, %c0_i32_0 : i32, i32
  }
  func.func @transform_12(%arg0: i32) -> (i32, i32, i32) {
    %c0_i32 = arith.constant 0 : i32
    %c0_i32_0 = arith.constant 0 : i32
    %c0_i32_1 = arith.constant 0 : i32
    %c0_i32_2 = arith.constant 0 : i32
    return %c0_i32, %c0_i32_0, %c0_i32_1 : i32, i32, i32
  }
  func.func @transform_13(%arg0: i32) -> (i32, i32) {
    %c0_i32 = arith.constant 0 : i32
    %c0_i32_0 = arith.constant 0 : i32
    %c0_i32_1 = arith.constant 0 : i32
    return %c0_i32, %c0_i32_0 : i32, i32
  }
  func.func @transform_14(%arg0: i32) -> (i32, i32, i32) {
    %c0_i32 = arith.constant 0 : i32
    %c0_i32_0 = arith.constant 0 : i32
    %c0_i32_1 = arith.constant 0 : i32
    return %arg0, %c0_i32, %c0_i32_0 : i32, i32, i32
  }
}

</mosaic_0001>

<llo_original>
// kernel: hffb_forward.1
$region0: #{hffb_forward.1}
  #allocation0 [shape = 'u32[]', space=smem, size = 0x4, offset = 0x4, fixed_abs, tag = 'smem constant byte address 0x4 - core index']
  #allocation1 [shape = 'u32[144,128]{1,0:T(1,128)}', space=vmem, size = 0x12000, scoped, tag = 'internal scratch']
  %s0 = inlined_call_operand.vmem [shape: f32[1,32,512], index: 0, kind: input, shape index: {}, may-alias: {0,14}]
  %s1 = inlined_call_operand.vmem [shape: f32[9,1,512], index: 1, kind: input, shape index: {}]
  %s2 = inlined_call_operand.vmem [shape: bf16[512,32], index: 2, kind: input, shape index: {}]
  %s3 = inlined_call_operand.vmem [shape: bf16[32,512], index: 3, kind: input, shape index: {}]
  %s4 = inlined_call_operand.vmem [shape: bf16[32,32], index: 4, kind: input, shape index: {}]
  %s5 = inlined_call_operand.vmem [shape: bf16[8,72], index: 5, kind: input, shape index: {}]
  %s6 = inlined_call_operand.vmem [shape: f32[8,1], index: 6, kind: input, shape index: {}]
  %s7 = inlined_call_operand.vmem [shape: bf16[8,72], index: 7, kind: input, shape index: {}]
  %s8 = inlined_call_operand.vmem [shape: f32[2,8], index: 8, kind: input, shape index: {}]
  %s9 = inlined_call_operand.vmem [shape: f32[2,1], index: 9, kind: input, shape index: {}]
  %s10 = inlined_call_operand.vmem [shape: f32[8,2], index: 10, kind: input, shape index: {}]
  %s11 = inlined_call_operand.vmem [shape: f32[8,1], index: 11, kind: input, shape index: {}]
  %s12 = inlined_call_operand.vmem [shape: bf16[3,16,144], index: 12, kind: input, shape index: {}]
  %s13 = inlined_call_operand.vmem [shape: bf16[32,32], index: 13, kind: input, shape index: {}]
  %s14 = inlined_call_operand.vmem [shape: f32[1,32,512], index: 14, kind: output, shape index: {}, may-alias: {0,14}]
  %s15 = sld [smem:[#allocation0]]
  $region66: #{hffb_forward.1} parent=0
    _
  %s17 = ssub.s32 1, %s15
  %s18 = scalar_select 0, %s17, %s15
  // Predicated region
  $region2: #{hffb_forward.1} parent=0 // pred_check
    _
  $region3: #{hffb_forward.1} parent=0 // pred_check_branch
    %20 = sbr.rel (0) target = $region5
  $region4: #{hffb_forward.1} parent=0 // pred_region
    _
  $region5: #{hffb_forward.1} parent=0 // pred_fallthru
    _
  // Predicated region
  $region6: #{hffb_forward.1} parent=0 // pred_check
    _
  $region7: #{hffb_forward.1} parent=0 // pred_check_branch
    %22 = sbr.rel (0) target = $region9
  $region8: #{hffb_forward.1} parent=0 // pred_region
    _
  $region9: #{hffb_forward.1} parent=0 // pred_fallthru
    _
  // Predicated region
  $region10: #{hffb_forward.1} parent=0 // pred_check
    _
  $region11: #{hffb_forward.1} parent=0 // pred_check_branch
    %24 = sbr.rel (0) target = $region13
  $region12: #{hffb_forward.1} parent=0 // pred_region
    _
  $region13: #{hffb_forward.1} parent=0 // pred_fallthru
    _
  // Predicated region
  $region14: #{hffb_forward.1} parent=0 // pred_check
    _
  $region15: #{hffb_forward.1} parent=0 // pred_check_branch
    %26 = sbr.rel (0) target = $region17
  $region16: #{hffb_forward.1} parent=0 // pred_region
    _
  $region17: #{hffb_forward.1} parent=0 // pred_fallthru
    _
  // Predicated region
  $region18: #{hffb_forward.1} parent=0 // pred_check
    _
  $region19: #{hffb_forward.1} parent=0 // pred_check_branch
    %28 = sbr.rel (0) target = $region21
  $region20: #{hffb_forward.1} parent=0 // pred_region
    _
  $region21: #{hffb_forward.1} parent=0 // pred_fallthru
    _
  // Predicated region
  $region22: #{hffb_forward.1} parent=0 // pred_check
    _
  $region23: #{hffb_forward.1} parent=0 // pred_check_branch
    %30 = sbr.rel (0) target = $region25
  $region24: #{hffb_forward.1} parent=0 // pred_region
    _
  $region25: #{hffb_forward.1} parent=0 // pred_fallthru
    _
  // Predicated region
  $region26: #{hffb_forward.1} parent=0 // pred_check
    _
  $region27: #{hffb_forward.1} parent=0 // pred_check_branch
    %32 = sbr.rel (0) target = $region29
  $region28: #{hffb_forward.1} parent=0 // pred_region
    _
  $region29: #{hffb_forward.1} parent=0 // pred_fallthru
    _
  // Predicated region
  $region30: #{hffb_forward.1} parent=0 // pred_check
    _
  $region31: #{hffb_forward.1} parent=0 // pred_check_branch
    %34 = sbr.rel (0) target = $region33
  $region32: #{hffb_forward.1} parent=0 // pred_region
    _
  $region33: #{hffb_forward.1} parent=0 // pred_fallthru
    _
  // Predicated region
  $region34: #{hffb_forward.1} parent=0 // pred_check
    _
  $region35: #{hffb_forward.1} parent=0 // pred_check_branch
    %36 = sbr.rel (0) target = $region37
  $region36: #{hffb_forward.1} parent=0 // pred_region
    _
  $region37: #{hffb_forward.1} parent=0 // pred_fallthru
    _
  // Predicated region
  $region38: #{hffb_forward.1} parent=0 // pred_check
    _
  $region39: #{hffb_forward.1} parent=0 // pred_check_branch
    %38 = sbr.rel (0) target = $region41
  $region40: #{hffb_forward.1} parent=0 // pred_region
    _
  $region41: #{hffb_forward.1} parent=0 // pred_fallthru
    _
  // Predicated region
  $region42: #{hffb_forward.1} parent=0 // pred_check
    _
  $region43: #{hffb_forward.1} parent=0 // pred_check_branch
    %40 = sbr.rel (0) target = $region45
  $region44: #{hffb_forward.1} parent=0 // pred_region
    _
  $region45: #{hffb_forward.1} parent=0 // pred_fallthru
    _
  // Predicated region
  $region46: #{hffb_forward.1} parent=0 // pred_check
    _
  $region47: #{hffb_forward.1} parent=0 // pred_check_branch
    %42 = sbr.rel (0) target = $region49
  $region48: #{hffb_forward.1} parent=0 // pred_region
    _
  $region49: #{hffb_forward.1} parent=0 // pred_fallthru
    _
  // Predicated region
  $region50: #{hffb_forward.1} parent=0 // pred_check
    _
  $region51: #{hffb_forward.1} parent=0 // pred_check_branch
    %44 = sbr.rel (0) target = $region53
  $region52: #{hffb_forward.1} parent=0 // pred_region
    _
  $region53: #{hffb_forward.1} parent=0 // pred_fallthru
    _
  // Predicated region
  $region54: #{hffb_forward.1} parent=0 // pred_check
    _
  $region55: #{hffb_forward.1} parent=0 // pred_check_branch
    %46 = sbr.rel (0) target = $region57
  $region56: #{hffb_forward.1} parent=0 // pred_region
    _
  $region57: #{hffb_forward.1} parent=0 // pred_fallthru
    _
  %v48 = vld [vmem:[%s0] sm:$0xff]
  %v49 = vld [vmem:[%s0 + $0x8] sm:$0xff]
  %v50 = vld [vmem:[%s0 + $0x10] sm:$0xff]
  %v51 = vld [vmem:[%s0 + $0x18] sm:$0xff]
  %v52 = vld [vmem:[%s0 + $0x20] sm:$0xff]
  %v53 = vld [vmem:[%s0 + $0x28] sm:$0xff]
  %v54 = vld [vmem:[%s0 + $0x30] sm:$0xff]
  %v55 = vld [vmem:[%s0 + $0x38] sm:$0xff]
  %v56 = vld [vmem:[%s0 + $0x40] sm:$0xff]
  %v57 = vld [vmem:[%s0 + $0x48] sm:$0xff]
  %v58 = vld [vmem:[%s0 + $0x50] sm:$0xff]
  %v59 = vld [vmem:[%s0 + $0x58] sm:$0xff]
  %v60 = vld [vmem:[%s0 + $0x60] sm:$0xff]
  %v61 = vld [vmem:[%s0 + $0x68] sm:$0xff]
  %v62 = vld [vmem:[%s0 + $0x70] sm:$0xff]
  %v63 = vld [vmem:[%s0 + $0x78] sm:$0xff]
  %v64 = vld [vmem:[%s1] sm:$0xf]
  %v65 = vld [vmem:[%s1 + $0x4] sm:$0xf]
  %v66 = vld [vmem:[%s1 + $0x8] sm:$0xf]
  %v67 = vld [vmem:[%s1 + $0xc] sm:$0xf]
  %v68 = vld [vmem:[%s1 + $0x14] sm:$0xf]
  %v69 = vld [vmem:[%s1 + $0x18] sm:$0xf]
  %v70 = vld [vmem:[%s1 + $0x1c] sm:$0xf]
  %v71 = vld [vmem:[%s1 + $0x20] sm:$0xf]
  %v72 = vld [vmem:[%s4] sm:$0xf]
  %v73 = vld [vmem:[%s4 + $0x4] sm:$0xf]
  %v74 = vld [vmem:[%s4 + $0x8] sm:$0xf]
  %v75 = vld [vmem:[%s4 + $0xc] sm:$0xf]
  %v76 = vpack.c.bf16 %v52, %v48
  %v77 = vpack.c.bf16 %v53, %v49
  %v78 = vpack.c.bf16 %v54, %v50
  %v79 = vpack.c.bf16 %v55, %v51
  %v80 = vpack.c.bf16 %v60, %v56
  %v81 = vpack.c.bf16 %v61, %v57
  %v82 = vpack.c.bf16 %v62, %v58
  %v83 = vpack.c.bf16 %v63, %v59
  %v88 = vunpack.c.l.b16 %v72
  %v89 = vunpack.c.l.b16 %v73
  %v90 = vunpack.c.l.b16 %v74
  %v91 = vunpack.c.l.b16 %v75
  %v92 = vpack.c.b16 %v89, %v88
  %v93 = vpack.c.b16 %v91, %v90
  %vm94 = vcmask 261120
  %v96 = vsel %vm94, %v92, 0
  %v99 = vsel %vm94, %v93, 0
  %101 = vmatprep.subr.bf16.mxu0 %v77
  %102 = vmatpush1.bf16.msra.mxu0 %v76
  %103 = vmatprep.subr.bf16.mxu0 %v81
  %104 = vmatpush1.bf16.msra.mxu0 %v80
  %105 = vmatprep.subr.bf16.mxu0 0
  %106 = vmatpush1.bf16.msra.mxu0 0
  %107 = vmatprep.subr.bf16.mxu0 0
  %108 = vmatpush1.bf16.msra.mxu0 0
  %109 = vmatprep.subr.bf16.mxu0 0
  %110 = vmatpush1.bf16.msra.mxu0 0
  %111 = vmatprep.subr.bf16.mxu0 0
  %112 = vmatpush1.bf16.msra.mxu0 0
  %113 = vmatprep.subr.bf16.mxu0 0
  %114 = vmatpush1.bf16.msra.mxu0 0
  %115 = vmatprep.subr.bf16.mxu0 0
  %116 = vmatpush1.bf16.msra.mxu0 0
  %117 = vmatprep.subr.bf16.mxu0 0
  %118 = vmatpush1.bf16.msra.mxu0 0
  %119 = vmatprep.subr.bf16.mxu0 0
  %120 = vmatpush1.bf16.msra.mxu0 0
  %121 = vmatprep.subr.bf16.mxu0 0
  %122 = vmatpush1.bf16.msra.mxu0 0
  %123 = vmatprep.subr.bf16.mxu0 0
  %124 = vmatpush1.bf16.msra.mxu0 0
  %125 = vmatprep.subr.bf16.mxu0 0
  %126 = vmatpush1.bf16.msra.mxu0 0
  %127 = vmatprep.subr.bf16.mxu0 0
  %128 = vmatpush1.bf16.msra.mxu0 0
  %129 = vmatprep.subr.bf16.mxu0 0
  %130 = vmatpush1.bf16.msra.mxu0 0
  %131 = vmatprep.subr.bf16.mxu0 0
  %132 = vmatpush1.bf16.msra.mxu0 0
  %133 = vmatprep.mubr.bf16.mxu0 0
  %134 = vmatmul.mubr.bf16.gmra.mrb[0].mxu0 %v96
  %v135 = vpop.f32.mrb[0].mxu0
  %v136 = vadd.f32 0.0, %v135
  %v137 = vpop.f32.mrb[0].mxu0
  %v138 = vadd.f32 0.0, %v137
  %v139 = vpop.f32.mrb[0].mxu0
  %v140 = vadd.f32 0.0, %v139
  %v141 = vpop.f32.mrb[0].mxu0
  %v142 = vadd.f32 0.0, %v141
  %143 = vmatprep.mubr.bf16.mxu0 0
  %144 = vmatmul.mubr.bf16.gmra.mrb[0].mxu0 %v99
  %v145 = vpop.f32.mrb[0].mxu0
  %v146 = vadd.f32 0.0, %v145
  %v147 = vpop.f32.mrb[0].mxu0
  %v148 = vadd.f32 0.0, %v147
  %v149 = vpop.f32.mrb[0].mxu0
  %v150 = vadd.f32 0.0, %v149
  %v151 = vpop.f32.mrb[0].mxu0
  %v152 = vadd.f32 0.0, %v151
  %153 = vdwg.mxu0
  %154 = vmatprep.subr.bf16.mxu0 %v79
  %155 = vmatpush1.bf16.msra.mxu0 %v78
  %156 = vmatprep.subr.bf16.mxu0 %v83
  %157 = vmatpush1.bf16.msra.mxu0 %v82
  %158 = vmatprep.subr.bf16.mxu0 0
  %159 = vmatpush1.bf16.msra.mxu0 0
  %160 = vmatprep.subr.bf16.mxu0 0
  %161 = vmatpush1.bf16.msra.mxu0 0
  %162 = vmatprep.subr.bf16.mxu0 0
  %163 = vmatpush1.bf16.msra.mxu0 0
  %164 = vmatprep.subr.bf16.mxu0 0
  %165 = vmatpush1.bf16.msra.mxu0 0
  %166 = vmatprep.subr.bf16.mxu0 0
  %167 = vmatpush1.bf16.msra.mxu0 0
  %168 = vmatprep.subr.bf16.mxu0 0
  %169 = vmatpush1.bf16.msra.mxu0 0
  %170 = vmatprep.subr.bf16.mxu0 0
  %171 = vmatpush1.bf16.msra.mxu0 0
  %172 = vmatprep.subr.bf16.mxu0 0
  %173 = vmatpush1.bf16.msra.mxu0 0
  %174 = vmatprep.subr.bf16.mxu0 0
  %175 = vmatpush1.bf16.msra.mxu0 0
  %176 = vmatprep.subr.bf16.mxu0 0
  %177 = vmatpush1.bf16.msra.mxu0 0
  %178 = vmatprep.subr.bf16.mxu0 0
  %179 = vmatpush1.bf16.msra.mxu0 0
  %180 = vmatprep.subr.bf16.mxu0 0
  %181 = vmatpush1.bf16.msra.mxu0 0
  %182 = vmatprep.subr.bf16.mxu0 0
  %183 = vmatpush1.bf16.msra.mxu0 0
  %184 = vmatprep.subr.bf16.mxu0 0
  %185 = vmatpush1.bf16.msra.mxu0 0
  %186 = vmatprep.mubr.bf16.mxu0 0
  %187 = vmatmul.mubr.bf16.gmra.mrb[0].mxu0 %v96
  %v188 = vpop.f32.mrb[0].mxu0
  %v189 = vadd.f32 0.0, %v188
  %v190 = vpop.f32.mrb[0].mxu0
  %v191 = vadd.f32 0.0, %v190
  %v192 = vpop.f32.mrb[0].mxu0
  %v193 = vadd.f32 0.0, %v192
  %v194 = vpop.f32.mrb[0].mxu0
  %v195 = vadd.f32 0.0, %v194
  %196 = vmatprep.mubr.bf16.mxu0 0
  %197 = vmatmul.mubr.bf16.gmra.mrb[0].mxu0 %v99
  %v198 = vpop.f32.mrb[0].mxu0
  %v199 = vadd.f32 0.0, %v198
  %v200 = vpop.f32.mrb[0].mxu0
  %v201 = vadd.f32 0.0, %v200
  %v202 = vpop.f32.mrb[0].mxu0
  %v203 = vadd.f32 0.0, %v202
  %v204 = vpop.f32.mrb[0].mxu0
  %v205 = vadd.f32 0.0, %v204
  %206 = vdwg.mxu0
  %v207 = vmax.f32 %v136, 0.0
  %v208 = vmax.f32 %v138, 0.0
  %v209 = vmax.f32 %v189, 0.0
  %v210 = vmax.f32 %v191, 0.0
  %v211 = vmax.f32 %v140, 0.0
  %v212 = vmax.f32 %v142, 0.0
  %v213 = vmax.f32 %v193, 0.0
  %v214 = vmax.f32 %v195, 0.0
  %v215 = vmax.f32 %v146, 0.0
  %v216 = vmax.f32 %v148, 0.0
  %v217 = vmax.f32 %v199, 0.0
  %v218 = vmax.f32 %v201, 0.0
  %v219 = vmax.f32 %v150, 0.0
  %v220 = vmax.f32 %v152, 0.0
  %v221 = vmax.f32 %v203, 0.0
  %v222 = vmax.f32 %v205, 0.0
  %v223 = vld [vmem:[%s5] sm:$0xf]
  %224 = vrot.lane.b32.xlu0 %v207, 17
  %v225 = vpop.permute.xlu0 %224
  %226 = vrot.lane.b32.xlu0 %v208, 17
  %v227 = vpop.permute.xlu0 %226
  %228 = vrot.lane.b32.xlu0 %v209, 17
  %v229 = vpop.permute.xlu0 %228
  %230 = vrot.lane.b32.xlu0 %v210, 17
  %v231 = vpop.permute.xlu0 %230
  %v232 = vlaneseq
  %v233 = vand.u32 %v232, 127
  %vm234 = vcmp.lt.s32.totalorder %v233, 17
  %v235 = vsel %vm234, %v229, %v231
  %v236 = vsel %vm234, %v227, %v229
  %v237 = vsel %vm234, %v225, %v227
  %v238 = vsel %vm234, %v231, %v225
  %v240 = vlaneseq
  %v241 = vshrl.u32 %v240, 7
  %v242 = vsub.s32 0, %v241
  %v243 = vrot.slane %v64, %v242
  %v244 = vlaneseq
  %v245 = vshrl.u32 %v244, 7
  %v246 = vsub.s32 1, %v245
  %v247 = vrot.slane %v64, %v246
  %v248 = vlaneseq
  %v249 = vshrl.u32 %v248, 7
  %v250 = vsub.s32 2, %v249
  %v251 = vrot.slane %v64, %v250
  %v252 = vlaneseq
  %v253 = vshrl.u32 %v252, 7
  %v254 = vsub.s32 3, %v253
  %v255 = vrot.slane %v64, %v254
  %v260 = vmul.f32 %v238, %v243
  %v261 = vmul.f32 %v237, %v247
  %v262 = vmul.f32 %v236, %v251
  %v263 = vmul.f32 %v235, %v255
  %264 = vrot.lane.b32.xlu0 %v207, 16
  %v265 = vpop.permute.xlu0 %264
  %266 = vrot.lane.b32.xlu0 %v208, 16
  %v267 = vpop.permute.xlu0 %266
  %268 = vrot.lane.b32.xlu0 %v209, 16
  %v269 = vpop.permute.xlu0 %268
  %270 = vrot.lane.b32.xlu0 %v210, 16
  %v271 = vpop.permute.xlu0 %270
  %vm272 = vcmp.lt.s32.totalorder %v233, 16
  %v273 = vsel %vm272, %v269, %v271
  %v274 = vsel %vm272, %v267, %v269
  %v275 = vsel %vm272, %v265, %v267
  %v276 = vsel %vm272, %v271, %v265
  %v278 = vlaneseq
  %v279 = vshrl.u32 %v278, 7
  %v280 = vsub.s32 0, %v279
  %v281 = vrot.slane %v65, %v280
  %v282 = vlaneseq
  %v283 = vshrl.u32 %v282, 7
  %v284 = vsub.s32 1, %v283
  %v285 = vrot.slane %v65, %v284
  %v286 = vlaneseq
  %v287 = vshrl.u32 %v286, 7
  %v288 = vsub.s32 2, %v287
  %v289 = vrot.slane %v65, %v288
  %v290 = vlaneseq
  %v291 = vshrl.u32 %v290, 7
  %v292 = vsub.s32 3, %v291
  %v293 = vrot.slane %v65, %v292
  %v298 = vmul.f32 %v276, %v281
  %v299 = vmul.f32 %v275, %v285
  %v300 = vmul.f32 %v274, %v289
  %v301 = vmul.f32 %v273, %v293
  %302 = vrot.lane.b32.xlu0 %v207, 15
  %v303 = vpop.permute.xlu0 %302
  %304 = vrot.lane.b32.xlu0 %v208, 15
  %v305 = vpop.permute.xlu0 %304
  %306 = vrot.lane.b32.xlu0 %v209, 15
  %v307 = vpop.permute.xlu0 %306
  %308 = vrot.lane.b32.xlu0 %v210, 15
  %v309 = vpop.permute.xlu0 %308
  %vm310 = vcmp.lt.s32.totalorder %v233, 15
  %v311 = vsel %vm310, %v307, %v309
  %v312 = vsel %vm310, %v305, %v307
  %v313 = vsel %vm310, %v303, %v305
  %v314 = vsel %vm310, %v309, %v303
  %v316 = vlaneseq
  %v317 = vshrl.u32 %v316, 7
  %v318 = vsub.s32 0, %v317
  %v319 = vrot.slane %v66, %v318
  %v320 = vlaneseq
  %v321 = vshrl.u32 %v320, 7
  %v322 = vsub.s32 1, %v321
  %v323 = vrot.slane %v66, %v322
  %v324 = vlaneseq
  %v325 = vshrl.u32 %v324, 7
  %v326 = vsub.s32 2, %v325
  %v327 = vrot.slane %v66, %v326
  %v328 = vlaneseq
  %v329 = vshrl.u32 %v328, 7
  %v330 = vsub.s32 3, %v329
  %v331 = vrot.slane %v66, %v330
  %v336 = vmul.f32 %v314, %v319
  %v337 = vmul.f32 %v313, %v323
  %v338 = vmul.f32 %v312, %v327
  %v339 = vmul.f32 %v311, %v331
  %340 = vrot.lane.b32.xlu0 %v207, 1
  %v341 = vpop.permute.xlu0 %340
  %342 = vrot.lane.b32.xlu0 %v208, 1
  %v343 = vpop.permute.xlu0 %342
  %344 = vrot.lane.b32.xlu0 %v209, 1
  %v345 = vpop.permute.xlu0 %344
  %346 = vrot.lane.b32.xlu0 %v210, 1
  %v347 = vpop.permute.xlu0 %346
  %vm348 = vcmp.lt.s32.totalorder %v233, 1
  %v349 = vsel %vm348, %v345, %v347
  %v350 = vsel %vm348, %v343, %v345
  %v351 = vsel %vm348, %v341, %v343
  %v352 = vsel %vm348, %v347, %v341
  %v354 = vlaneseq
  %v355 = vshrl.u32 %v354, 7
  %v356 = vsub.s32 0, %v355
  %v357 = vrot.slane %v67, %v356
  %v358 = vlaneseq
  %v359 = vshrl.u32 %v358, 7
  %v360 = vsub.s32 1, %v359
  %v361 = vrot.slane %v67, %v360
  %v362 = vlaneseq
  %v363 = vshrl.u32 %v362, 7
  %v364 = vsub.s32 2, %v363
  %v365 = vrot.slane %v67, %v364
  %v366 = vlaneseq
  %v367 = vshrl.u32 %v366, 7
  %v368 = vsub.s32 3, %v367
  %v369 = vrot.slane %v67, %v368
  %v374 = vmul.f32 %v352, %v357
  %v375 = vmul.f32 %v351, %v361
  %v376 = vmul.f32 %v350, %v365
  %v377 = vmul.f32 %v349, %v369
  %378 = vrot.lane.b32.xlu0 %v207, 127
  %v379 = vpop.permute.xlu0 %378
  %380 = vrot.lane.b32.xlu0 %v208, 127
  %v381 = vpop.permute.xlu0 %380
  %382 = vrot.lane.b32.xlu0 %v209, 127
  %v383 = vpop.permute.xlu0 %382
  %384 = vrot.lane.b32.xlu0 %v210, 127
  %v385 = vpop.permute.xlu0 %384
  %vm386 = vcmp.lt.s32.totalorder %v233, 127
  %v387 = vsel %vm386, %v383, %v385
  %v388 = vsel %vm386, %v381, %v383
  %v389 = vsel %vm386, %v379, %v381
  %v390 = vsel %vm386, %v385, %v379
  %v392 = vlaneseq
  %v393 = vshrl.u32 %v392, 7
  %v394 = vsub.s32 0, %v393
  %v395 = vrot.slane %v68, %v394
  %v396 = vlaneseq
  %v397 = vshrl.u32 %v396, 7
  %v398 = vsub.s32 1, %v397
  %v399 = vrot.slane %v68, %v398
  %v400 = vlaneseq
  %v401 = vshrl.u32 %v400, 7
  %v402 = vsub.s32 2, %v401
  %v403 = vrot.slane %v68, %v402
  %v404 = vlaneseq
  %v405 = vshrl.u32 %v404, 7
  %v406 = vsub.s32 3, %v405
  %v407 = vrot.slane %v68, %v406
  %v412 = vmul.f32 %v389, %v395
  %v413 = vmul.f32 %v388, %v399
  %v414 = vmul.f32 %v387, %v403
  %v415 = vmul.f32 %v390, %v407
  %416 = vrot.lane.b32.xlu0 %v207, 113
  %v417 = vpop.permute.xlu0 %416
  %418 = vrot.lane.b32.xlu0 %v208, 113
  %v419 = vpop.permute.xlu0 %418
  %420 = vrot.lane.b32.xlu0 %v209, 113
  %v421 = vpop.permute.xlu0 %420
  %422 = vrot.lane.b32.xlu0 %v210, 113
  %v423 = vpop.permute.xlu0 %422
  %vm424 = vcmp.lt.s32.totalorder %v233, 113
  %v425 = vsel %vm424, %v421, %v423
  %v426 = vsel %vm424, %v419, %v421
  %v427 = vsel %vm424, %v417, %v419
  %v428 = vsel %vm424, %v423, %v417
  %v430 = vlaneseq
  %v431 = vshrl.u32 %v430, 7
  %v432 = vsub.s32 0, %v431
  %v433 = vrot.slane %v69, %v432
  %v434 = vlaneseq
  %v435 = vshrl.u32 %v434, 7
  %v436 = vsub.s32 1, %v435
  %v437 = vrot.slane %v69, %v436
  %v438 = vlaneseq
  %v439 = vshrl.u32 %v438, 7
  %v440 = vsub.s32 2, %v439
  %v441 = vrot.slane %v69, %v440
  %v442 = vlaneseq
  %v443 = vshrl.u32 %v442, 7
  %v444 = vsub.s32 3, %v443
  %v445 = vrot.slane %v69, %v444
  %v450 = vmul.f32 %v427, %v433
  %v451 = vmul.f32 %v426, %v437
  %v452 = vmul.f32 %v425, %v441
  %v453 = vmul.f32 %v428, %v445
  %454 = vrot.lane.b32.xlu0 %v207, 112
  %v455 = vpop.permute.xlu0 %454
  %456 = vrot.lane.b32.xlu0 %v208, 112
  %v457 = vpop.permute.xlu0 %456
  %458 = vrot.lane.b32.xlu0 %v209, 112
  %v459 = vpop.permute.xlu0 %458
  %460 = vrot.lane.b32.xlu0 %v210, 112
  %v461 = vpop.permute.xlu0 %460
  %vm462 = vcmp.lt.s32.totalorder %v233, 112
  %v463 = vsel %vm462, %v459, %v461
  %v464 = vsel %vm462, %v457, %v459
  %v465 = vsel %vm462, %v455, %v457
  %v466 = vsel %vm462, %v461, %v455
  %v468 = vlaneseq
  %v469 = vshrl.u32 %v468, 7
  %v470 = vsub.s32 0, %v469
  %v471 = vrot.slane %v70, %v470
  %v472 = vlaneseq
  %v473 = vshrl.u32 %v472, 7
  %v474 = vsub.s32 1, %v473
  %v475 = vrot.slane %v70, %v474
  %v476 = vlaneseq
  %v477 = vshrl.u32 %v476, 7
  %v478 = vsub.s32 2, %v477
  %v479 = vrot.slane %v70, %v478
  %v480 = vlaneseq
  %v481 = vshrl.u32 %v480, 7
  %v482 = vsub.s32 3, %v481
  %v483 = vrot.slane %v70, %v482
  %v488 = vmul.f32 %v465, %v471
  %v489 = vmul.f32 %v464, %v475
  %v490 = vmul.f32 %v463, %v479
  %v491 = vmul.f32 %v466, %v483
  %492 = vrot.lane.b32.xlu0 %v207, 111
  %v493 = vpop.permute.xlu0 %492
  %494 = vrot.lane.b32.xlu0 %v208, 111
  %v495 = vpop.permute.xlu0 %494
  %496 = vrot.lane.b32.xlu0 %v209, 111
  %v497 = vpop.permute.xlu0 %496
  %498 = vrot.lane.b32.xlu0 %v210, 111
  %v499 = vpop.permute.xlu0 %498
  %vm500 = vcmp.lt.s32.totalorder %v233, 111
  %v501 = vsel %vm500, %v497, %v499
  %v502 = vsel %vm500, %v495, %v497
  %v503 = vsel %vm500, %v493, %v495
  %v504 = vsel %vm500, %v499, %v493
  %v506 = vlaneseq
  %v507 = vshrl.u32 %v506, 7
  %v508 = vsub.s32 0, %v507
  %v509 = vrot.slane %v71, %v508
  %v510 = vlaneseq
  %v511 = vshrl.u32 %v510, 7
  %v512 = vsub.s32 1, %v511
  %v513 = vrot.slane %v71, %v512
  %v514 = vlaneseq
  %v515 = vshrl.u32 %v514, 7
  %v516 = vsub.s32 2, %v515
  %v517 = vrot.slane %v71, %v516
  %v518 = vlaneseq
  %v519 = vshrl.u32 %v518, 7
  %v520 = vsub.s32 3, %v519
  %v521 = vrot.slane %v71, %v520
  %v526 = vmul.f32 %v503, %v509
  %v527 = vmul.f32 %v502, %v513
  %v528 = vmul.f32 %v501, %v517
  %v529 = vmul.f32 %v504, %v521
  %v530 = vpack.c.bf16 %v298, %v260
  %v531 = vpack.c.bf16 %v299, %v261
  %v532 = vpack.c.bf16 %v300, %v262
  %v533 = vpack.c.bf16 %v301, %v263
  %v534 = vpack.c.bf16 %v374, %v336
  %v535 = vpack.c.bf16 %v375, %v337
  %v536 = vpack.c.bf16 %v376, %v338
  %v537 = vpack.c.bf16 %v377, %v339
  %v538 = vpack.c.bf16 %v412, %v207
  %v539 = vpack.c.bf16 %v413, %v208
  %v540 = vpack.c.bf16 %v414, %v209
  %v541 = vpack.c.bf16 %v415, %v210
  %v542 = vpack.c.bf16 %v488, %v450
  %v543 = vpack.c.bf16 %v489, %v451
  %v544 = vpack.c.bf16 %v490, %v452
  %v545 = vpack.c.bf16 %v491, %v453
  %v546 = vpack.c.bf16 %v526, %v526
  %v547 = vpack.c.bf16 %v527, %v527
  %v548 = vpack.c.bf16 %v528, %v528
  %v549 = vpack.c.bf16 %v529, %v529
  %v550 = vld [vmem:[%s6] sm:$0xff]
  %552 = vset.pattern.permute.xlu0 0
  %553 = vperm.xlu0 %552, %v550
  %v554 = vpop.permute.xlu0 %553
  %vm556 = vcmask 588800
  %v558 = vsel %vm556, %v223, 0
  %vm560 = vcmask 1043456
  %v562 = vsel %vm560, %v546, 0
  %v565 = vsel %vm560, %v547, 0
  %v568 = vsel %vm560, %v548, 0
  %v571 = vsel %vm560, %v549, 0
  %573 = vmatprep.subr.bf16.mxu0 %v531
  %574 = vmatpush1.bf16.msra.mxu0 %v530
  %575 = vmatprep.subr.bf16.mxu0 %v535
  %576 = vmatpush1.bf16.msra.mxu0 %v534
  %577 = vmatprep.subr.bf16.mxu0 %v539
  %578 = vmatpush1.bf16.msra.mxu0 %v538
  %579 = vmatprep.subr.bf16.mxu0 %v543
  %580 = vmatpush1.bf16.msra.mxu0 %v542
  %581 = vmatprep.subr.bf16.mxu0 %v565
  %582 = vmatpush1.bf16.msra.mxu0 %v562
  %583 = vmatprep.subr.bf16.mxu0 0
  %584 = vmatpush1.bf16.msra.mxu0 0
  %585 = vmatprep.subr.bf16.mxu0 0
  %586 = vmatpush1.bf16.msra.mxu0 0
  %587 = vmatprep.subr.bf16.mxu0 0
  %588 = vmatpush1.bf16.msra.mxu0 0
  %589 = vmatprep.subr.bf16.mxu0 0
  %590 = vmatpush1.bf16.msra.mxu0 0
  %591 = vmatprep.subr.bf16.mxu0 0
  %592 = vmatpush1.bf16.msra.mxu0 0
  %593 = vmatprep.subr.bf16.mxu0 0
  %594 = vmatpush1.bf16.msra.mxu0 0
  %595 = vmatprep.subr.bf16.mxu0 0
  %596 = vmatpush1.bf16.msra.mxu0 0
  %597 = vmatprep.subr.bf16.mxu0 0
  %598 = vmatpush1.bf16.msra.mxu0 0
  %599 = vmatprep.subr.bf16.mxu0 0
  %600 = vmatpush1.bf16.msra.mxu0 0
  %601 = vmatprep.subr.bf16.mxu0 0
  %602 = vmatpush1.bf16.msra.mxu0 0
  %603 = vmatprep.subr.bf16.mxu0 0
  %604 = vmatpush1.bf16.msra.mxu0 0
  %605 = vmatprep.mubr.bf16.mxu0 0
  %606 = vmatmul.mubr.bf16.gmra.mrb[0].mxu0 %v558
  %v607 = vpop.f32.mrb[0].mxu0
  %v608 = vadd.f32 %v554, %v607
  %v609 = vpop.f32.mrb[0].mxu0
  %v610 = vadd.f32 %v554, %v609
  %v611 = vpop.f32.mrb[0].mxu0
  %v612 = vpop.f32.mrb[0].mxu0
  %613 = vdwg.mxu0
  %614 = vmatprep.subr.bf16.mxu0 %v533
  %615 = vmatpush1.bf16.msra.mxu0 %v532
  %616 = vmatprep.subr.bf16.mxu0 %v537
  %617 = vmatpush1.bf16.msra.mxu0 %v536
  %618 = vmatprep.subr.bf16.mxu0 %v541
  %619 = vmatpush1.bf16.msra.mxu0 %v540
  %620 = vmatprep.subr.bf16.mxu0 %v545
  %621 = vmatpush1.bf16.msra.mxu0 %v544
  %622 = vmatprep.subr.bf16.mxu0 %v571
  %623 = vmatpush1.bf16.msra.mxu0 %v568
  %624 = vmatprep.subr.bf16.mxu0 0
  %625 = vmatpush1.bf16.msra.mxu0 0
  %626 = vmatprep.subr.bf16.mxu0 0
  %627 = vmatpush1.bf16.msra.mxu0 0
  %628 = vmatprep.subr.bf16.mxu0 0
  %629 = vmatpush1.bf16.msra.mxu0 0
  %630 = vmatprep.subr.bf16.mxu0 0
  %631 = vmatpush1.bf16.msra.mxu0 0
  %632 = vmatprep.subr.bf16.mxu0 0
  %633 = vmatpush1.bf16.msra.mxu0 0
  %634 = vmatprep.subr.bf16.mxu0 0
  %635 = vmatpush1.bf16.msra.mxu0 0
  %636 = vmatprep.subr.bf16.mxu0 0
  %637 = vmatpush1.bf16.msra.mxu0 0
  %638 = vmatprep.subr.bf16.mxu0 0
  %639 = vmatpush1.bf16.msra.mxu0 0
  %640 = vmatprep.subr.bf16.mxu0 0
  %641 = vmatpush1.bf16.msra.mxu0 0
  %642 = vmatprep.subr.bf16.mxu0 0
  %643 = vmatpush1.bf16.msra.mxu0 0
  %644 = vmatprep.subr.bf16.mxu0 0
  %645 = vmatpush1.bf16.msra.mxu0 0
  %646 = vmatprep.mubr.bf16.mxu0 0
  %647 = vmatmul.mubr.bf16.gmra.mrb[0].mxu0 %v558
  %v648 = vpop.f32.mrb[0].mxu0
  %v649 = vadd.f32 %v554, %v648
  %v650 = vpop.f32.mrb[0].mxu0
  %v651 = vadd.f32 %v554, %v650
  %v652 = vpop.f32.mrb[0].mxu0
  %v653 = vpop.f32.mrb[0].mxu0
  %654 = vdwg.mxu0
  %v655 = vld [vmem:[%s7] sm:$0xf]
  %656 = vrot.lane.b32.xlu0 %v608, 17
  %v657 = vpop.permute.xlu0 %656
  %658 = vrot.lane.b32.xlu0 %v610, 17
  %v659 = vpop.permute.xlu0 %658
  %660 = vrot.lane.b32.xlu0 %v649, 17
  %v661 = vpop.permute.xlu0 %660
  %662 = vrot.lane.b32.xlu0 %v651, 17
  %v663 = vpop.permute.xlu0 %662
  %v664 = vsel %vm234, %v661, %v663
  %v665 = vsel %vm234, %v659, %v661
  %v666 = vsel %vm234, %v657, %v659
  %v667 = vsel %vm234, %v663, %v657
  %v668 = vmul.f32 %v667, %v243
  %v669 = vmul.f32 %v666, %v247
  %v670 = vmul.f32 %v665, %v251
  %v671 = vmul.f32 %v664, %v255
  %672 = vrot.lane.b32.xlu0 %v608, 16
  %v673 = vpop.permute.xlu0 %672
  %674 = vrot.lane.b32.xlu0 %v610, 16
  %v675 = vpop.permute.xlu0 %674
  %676 = vrot.lane.b32.xlu0 %v649, 16
  %v677 = vpop.permute.xlu0 %676
  %678 = vrot.lane.b32.xlu0 %v651, 16
  %v679 = vpop.permute.xlu0 %678
  %v680 = vsel %vm272, %v677, %v679
  %v681 = vsel %vm272, %v675, %v677
  %v682 = vsel %vm272, %v673, %v675
  %v683 = vsel %vm272, %v679, %v673
  %v684 = vmul.f32 %v683, %v281
  %v685 = vmul.f32 %v682, %v285
  %v686 = vmul.f32 %v681, %v289
  %v687 = vmul.f32 %v680, %v293
  %688 = vrot.lane.b32.xlu0 %v608, 15
  %v689 = vpop.permute.xlu0 %688
  %690 = vrot.lane.b32.xlu0 %v610, 15
  %v691 = vpop.permute.xlu0 %690
  %692 = vrot.lane.b32.xlu0 %v649, 15
  %v693 = vpop.permute.xlu0 %692
  %694 = vrot.lane.b32.xlu0 %v651, 15
  %v695 = vpop.permute.xlu0 %694
  %v696 = vsel %vm310, %v693, %v695
  %v697 = vsel %vm310, %v691, %v693
  %v698 = vsel %vm310, %v689, %v691
  %v699 = vsel %vm310, %v695, %v689
  %v700 = vmul.f32 %v699, %v319
  %v701 = vmul.f32 %v698, %v323
  %v702 = vmul.f32 %v697, %v327
  %v703 = vmul.f32 %v696, %v331
  %704 = vrot.lane.b32.xlu0 %v608, 1
  %v705 = vpop.permute.xlu0 %704
  %706 = vrot.lane.b32.xlu0 %v610, 1
  %v707 = vpop.permute.xlu0 %706
  %708 = vrot.lane.b32.xlu0 %v649, 1
  %v709 = vpop.permute.xlu0 %708
  %710 = vrot.lane.b32.xlu0 %v651, 1
  %v711 = vpop.permute.xlu0 %710
  %v712 = vsel %vm348, %v709, %v711
  %v713 = vsel %vm348, %v707, %v709
  %v714 = vsel %vm348, %v705, %v707
  %v715 = vsel %vm348, %v711, %v705
  %v716 = vmul.f32 %v715, %v357
  %v717 = vmul.f32 %v714, %v361
  %v718 = vmul.f32 %v713, %v365
  %v719 = vmul.f32 %v712, %v369
  %720 = vrot.lane.b32.xlu0 %v608, 127
  %v721 = vpop.permute.xlu0 %720
  %722 = vrot.lane.b32.xlu0 %v610, 127
  %v723 = vpop.permute.xlu0 %722
  %724 = vrot.lane.b32.xlu0 %v649, 127
  %v725 = vpop.permute.xlu0 %724
  %726 = vrot.lane.b32.xlu0 %v651, 127
  %v727 = vpop.permute.xlu0 %726
  %v728 = vsel %vm386, %v725, %v727
  %v729 = vsel %vm386, %v723, %v725
  %v730 = vsel %vm386, %v721, %v723
  %v731 = vsel %vm386, %v727, %v721
  %v732 = vmul.f32 %v730, %v395
  %v733 = vmul.f32 %v729, %v399
  %v734 = vmul.f32 %v728, %v403
  %v735 = vmul.f32 %v731, %v407
  %736 = vrot.lane.b32.xlu0 %v608, 113
  %v737 = vpop.permute.xlu0 %736
  %738 = vrot.lane.b32.xlu0 %v610, 113
  %v739 = vpop.permute.xlu0 %738
  %740 = vrot.lane.b32.xlu0 %v649, 113
  %v741 = vpop.permute.xlu0 %740
  %742 = vrot.lane.b32.xlu0 %v651, 113
  %v743 = vpop.permute.xlu0 %742
  %v744 = vsel %vm424, %v741, %v743
  %v745 = vsel %vm424, %v739, %v741
  %v746 = vsel %vm424, %v737, %v739
  %v747 = vsel %vm424, %v743, %v737
  %v748 = vmul.f32 %v746, %v433
  %v749 = vmul.f32 %v745, %v437
  %v750 = vmul.f32 %v744, %v441
  %v751 = vmul.f32 %v747, %v445
  %752 = vrot.lane.b32.xlu0 %v608, 112
  %v753 = vpop.permute.xlu0 %752
  %754 = vrot.lane.b32.xlu0 %v610, 112
  %v755 = vpop.permute.xlu0 %754
  %756 = vrot.lane.b32.xlu0 %v649, 112
  %v757 = vpop.permute.xlu0 %756
  %758 = vrot.lane.b32.xlu0 %v651, 112
  %v759 = vpop.permute.xlu0 %758
  %v760 = vsel %vm462, %v757, %v759
  %v761 = vsel %vm462, %v755, %v757
  %v762 = vsel %vm462, %v753, %v755
  %v763 = vsel %vm462, %v759, %v753
  %v764 = vmul.f32 %v762, %v471
  %v765 = vmul.f32 %v761, %v475
  %v766 = vmul.f32 %v760, %v479
  %v767 = vmul.f32 %v763, %v483
  %768 = vrot.lane.b32.xlu0 %v608, 111
  %v769 = vpop.permute.xlu0 %768
  %770 = vrot.lane.b32.xlu0 %v610, 111
  %v771 = vpop.permute.xlu0 %770
  %772 = vrot.lane.b32.xlu0 %v649, 111
  %v773 = vpop.permute.xlu0 %772
  %774 = vrot.lane.b32.xlu0 %v651, 111
  %v775 = vpop.permute.xlu0 %774
  %v776 = vsel %vm500, %v773, %v775
  %v777 = vsel %vm500, %v771, %v773
  %v778 = vsel %vm500, %v769, %v771
  %v779 = vsel %vm500, %v775, %v769
  %v780 = vmul.f32 %v778, %v509
  %v781 = vmul.f32 %v777, %v513
  %v782 = vmul.f32 %v776, %v517
  %v783 = vmul.f32 %v779, %v521
  %v784 = vpack.c.bf16 %v684, %v668
  %v785 = vpack.c.bf16 %v685, %v669
  %v786 = vpack.c.bf16 %v686, %v670
  %v787 = vpack.c.bf16 %v687, %v671
  %v788 = vpack.c.bf16 %v716, %v700
  %v789 = vpack.c.bf16 %v717, %v701
  %v790 = vpack.c.bf16 %v718, %v702
  %v791 = vpack.c.bf16 %v719, %v703
  %v792 = vpack.c.bf16 %v732, %v608
  %v793 = vpack.c.bf16 %v733, %v610
  %v794 = vpack.c.bf16 %v734, %v649
  %v795 = vpack.c.bf16 %v735, %v651
  %v796 = vpack.c.bf16 %v764, %v748
  %v797 = vpack.c.bf16 %v765, %v749
  %v798 = vpack.c.bf16 %v766, %v750
  %v799 = vpack.c.bf16 %v767, %v751
  %v800 = vpack.c.bf16 %v780, %v780
  %v801 = vpack.c.bf16 %v781, %v781
  %v802 = vpack.c.bf16 %v782, %v782
  %v803 = vpack.c.bf16 %v783, %v783
  %v805 = vsel %vm556, %v655, 0
  %v808 = vsel %vm560, %v800, 0
  %v811 = vsel %vm560, %v801, 0
  %v814 = vsel %vm560, %v802, 0
  %v817 = vsel %vm560, %v803, 0
  %819 = vmatprep.subr.bf16.mxu0 %v785
  %820 = vmatpush1.bf16.msra.mxu0 %v784
  %821 = vmatprep.subr.bf16.mxu0 %v789
  %822 = vmatpush1.bf16.msra.mxu0 %v788
  %823 = vmatprep.subr.bf16.mxu0 %v793
  %824 = vmatpush1.bf16.msra.mxu0 %v792
  %825 = vmatprep.subr.bf16.mxu0 %v797
  %826 = vmatpush1.bf16.msra.mxu0 %v796
  %827 = vmatprep.subr.bf16.mxu0 %v811
  %828 = vmatpush1.bf16.msra.mxu0 %v808
  %829 = vmatprep.subr.bf16.mxu0 0
  %830 = vmatpush1.bf16.msra.mxu0 0
  %831 = vmatprep.subr.bf16.mxu0 0
  %832 = vmatpush1.bf16.msra.mxu0 0
  %833 = vmatprep.subr.bf16.mxu0 0
  %834 = vmatpush1.bf16.msra.mxu0 0
  %835 = vmatprep.subr.bf16.mxu0 0
  %836 = vmatpush1.bf16.msra.mxu0 0
  %837 = vmatprep.subr.bf16.mxu0 0
  %838 = vmatpush1.bf16.msra.mxu0 0
  %839 = vmatprep.subr.bf16.mxu0 0
  %840 = vmatpush1.bf16.msra.mxu0 0
  %841 = vmatprep.subr.bf16.mxu0 0
  %842 = vmatpush1.bf16.msra.mxu0 0
  %843 = vmatprep.subr.bf16.mxu0 0
  %844 = vmatpush1.bf16.msra.mxu0 0
  %845 = vmatprep.subr.bf16.mxu0 0
  %846 = vmatpush1.bf16.msra.mxu0 0
  %847 = vmatprep.subr.bf16.mxu0 0
  %848 = vmatpush1.bf16.msra.mxu0 0
  %849 = vmatprep.subr.bf16.mxu0 0
  %850 = vmatpush1.bf16.msra.mxu0 0
  %851 = vmatprep.mubr.bf16.mxu0 0
  %852 = vmatmul.mubr.bf16.gmra.mrb[0].mxu0 %v805
  %v853 = vpop.f32.mrb[0].mxu0
  %v854 = vadd.f32 0.0, %v853
  %v855 = vpop.f32.mrb[0].mxu0
  %v856 = vadd.f32 0.0, %v855
  %v857 = vpop.f32.mrb[0].mxu0
  %v858 = vpop.f32.mrb[0].mxu0
  %859 = vdwg.mxu0
  %860 = vmatprep.subr.bf16.mxu0 %v787
  %861 = vmatpush1.bf16.msra.mxu0 %v786
  %862 = vmatprep.subr.bf16.mxu0 %v791
  %863 = vmatpush1.bf16.msra.mxu0 %v790
  %864 = vmatprep.subr.bf16.mxu0 %v795
  %865 = vmatpush1.bf16.msra.mxu0 %v794
  %866 = vmatprep.subr.bf16.mxu0 %v799
  %867 = vmatpush1.bf16.msra.mxu0 %v798
  %868 = vmatprep.subr.bf16.mxu0 %v817
  %869 = vmatpush1.bf16.msra.mxu0 %v814
  %870 = vmatprep.subr.bf16.mxu0 0
  %871 = vmatpush1.bf16.msra.mxu0 0
  %872 = vmatprep.subr.bf16.mxu0 0
  %873 = vmatpush1.bf16.msra.mxu0 0
  %874 = vmatprep.subr.bf16.mxu0 0
  %875 = vmatpush1.bf16.msra.mxu0 0
  %876 = vmatprep.subr.bf16.mxu0 0
  %877 = vmatpush1.bf16.msra.mxu0 0
  %878 = vmatprep.subr.bf16.mxu0 0
  %879 = vmatpush1.bf16.msra.mxu0 0
  %880 = vmatprep.subr.bf16.mxu0 0
  %881 = vmatpush1.bf16.msra.mxu0 0
  %882 = vmatprep.subr.bf16.mxu0 0
  %883 = vmatpush1.bf16.msra.mxu0 0
  %884 = vmatprep.subr.bf16.mxu0 0
  %885 = vmatpush1.bf16.msra.mxu0 0
  %886 = vmatprep.subr.bf16.mxu0 0
  %887 = vmatpush1.bf16.msra.mxu0 0
  %888 = vmatprep.subr.bf16.mxu0 0
  %889 = vmatpush1.bf16.msra.mxu0 0
  %890 = vmatprep.subr.bf16.mxu0 0
  %891 = vmatpush1.bf16.msra.mxu0 0
  %892 = vmatprep.mubr.bf16.mxu0 0
  %893 = vmatmul.mubr.bf16.gmra.mrb[0].mxu0 %v805
  %v894 = vpop.f32.mrb[0].mxu0
  %v895 = vadd.f32 0.0, %v894
  %v896 = vpop.f32.mrb[0].mxu0
  %v897 = vadd.f32 0.0, %v896
  %v898 = vpop.f32.mrb[0].mxu0
  %v899 = vpop.f32.mrb[0].mxu0
  %900 = vdwg.mxu0
  %v901 = vadd.f32 %v854, %v856
  %902 = vadd.xlane.f32.xlu0 %v901
  %v903 = vpop.xlane.xlu0 %902
  %v904 = vmul.f32 %v903, 0.00390625
  %v905 = vmul.f32 %v854, %v854
  %v906 = vmul.f32 %v856, %v856
  %v907 = vadd.f32 %v905, %v906
  %908 = vadd.xlane.f32.xlu0 %v907
  %v909 = vpop.xlane.xlu0 %908
  %v910 = vmul.f32 %v909, 0.00390625
  %v911 = vmul.f32 %v904, %v904
  %v912 = vsub.f32 %v910, %v911
  %v913 = vmax.f32 %v912, 0.0
  %v914 = vrsqrt.pop %v913
  %v915 = vmul.f32 %v913, %v914
  %vm916 = vcmp.eq.f32.partialorder %v913, inf
  %v917 = vsel %vm916, %v913, %v915
  %vm918 = vcmp.eq.f32.partialorder %v913, 0.0
  %v919 = vand.u32 %v913, 2147483648
  %v920 = vsel %vm918, %v919, %v917
  %v921 = vadd.f32 %v895, %v897
  %922 = vadd.xlane.f32.xlu0 %v921
  %v923 = vpop.xlane.xlu0 %922
  %v924 = vmul.f32 %v923, 0.00390625
  %v925 = vmul.f32 %v895, %v895
  %v926 = vmul.f32 %v897, %v897
  %v927 = vadd.f32 %v925, %v926
  %928 = vadd.xlane.f32.xlu0 %v927
  %v929 = vpop.xlane.xlu0 %928
  %v930 = vmul.f32 %v929, 0.00390625
  %v931 = vmul.f32 %v924, %v924
  %v932 = vsub.f32 %v930, %v931
  %v933 = vmax.f32 %v932, 0.0
  %v934 = vrsqrt.pop %v933
  %v935 = vmul.f32 %v933, %v934
  %vm936 = vcmp.eq.f32.partialorder %v933, inf
  %v937 = vsel %vm936, %v933, %v935
  %vm938 = vcmp.eq.f32.partialorder %v933, 0.0
  %v939 = vand.u32 %v933, 2147483648
  %v940 = vsel %vm938, %v939, %v937
  %vm941 = vcmask 7168
  %v942 = vsel %vm941, %v920, %v940
  %v943 = vld [vmem:[%s8] sm:$0x3]
  %v944 = vld [vmem:[%s9] sm:$0x3]
  %946 = vset.pattern.permute.xlu0 0
  %947 = vperm.xlu0 %946, %v944
  %v948 = vpop.permute.xlu0 %947
  %vm950 = vcmask 64512
  %v952 = vsel %vm950, %v943, 0
  %954 = vmatprep.subr.mxu0 0.0
  %955 = vmatpush1.msra.mxu0 %v942
  %956 = vmatprep.subr.mxu0 0.0
  %957 = vmatpush1.msra.mxu0 0.0
  %958 = vmatprep.subr.mxu0 0.0
  %959 = vmatpush1.msra.mxu0 0.0
  %960 = vmatprep.subr.mxu0 0.0
  %961 = vmatpush1.msra.mxu0 0.0
  %962 = vmatprep.subr.mxu0 0.0
  %963 = vmatpush1.msra.mxu0 0.0
  %964 = vmatprep.subr.mxu0 0.0
  %965 = vmatpush1.msra.mxu0 0.0
  %966 = vmatprep.subr.mxu0 0.0
  %967 = vmatpush1.msra.mxu0 0.0
  %968 = vmatprep.subr.mxu0 0.0
  %969 = vmatpush1.msra.mxu0 0.0
  %970 = vmatprep.subr.mxu0 0.0
  %971 = vmatpush1.msra.mxu0 0.0
  %972 = vmatprep.subr.mxu0 0.0
  %973 = vmatpush1.msra.mxu0 0.0
  %974 = vmatprep.subr.mxu0 0.0
  %975 = vmatpush1.msra.mxu0 0.0
  %976 = vmatprep.subr.mxu0 0.0
  %977 = vmatpush1.msra.mxu0 0.0
  %978 = vmatprep.subr.mxu0 0.0
  %979 = vmatpush1.msra.mxu0 0.0
  %980 = vmatprep.subr.mxu0 0.0
  %981 = vmatpush1.msra.mxu0 0.0
  %982 = vmatprep.subr.mxu0 0.0
  %983 = vmatpush1.msra.mxu0 0.0
  %984 = vmatprep.subr.mxu0 0.0
  %985 = vmatpush1.msra.mxu0 0.0
  %986 = vmatprep.subr.mxu0 0.0
  %987 = vmatpush1.msra.mxu0 0.0
  %988 = vmatprep.subr.mxu0 0.0
  %989 = vmatpush1.msra.mxu0 0.0
  %990 = vmatprep.subr.mxu0 0.0
  %991 = vmatpush1.msra.mxu0 0.0
  %992 = vmatprep.subr.mxu0 0.0
  %993 = vmatpush1.msra.mxu0 0.0
  %994 = vmatprep.subr.mxu0 0.0
  %995 = vmatpush1.msra.mxu0 0.0
  %996 = vmatprep.subr.mxu0 0.0
  %997 = vmatpush1.msra.mxu0 0.0
  %998 = vmatprep.subr.mxu0 0.0
  %999 = vmatpush1.msra.mxu0 0.0
  %1000 = vmatprep.subr.mxu0 0.0
  %1001 = vmatpush1.msra.mxu0 0.0
  %1002 = vmatprep.subr.mxu0 0.0
  %1003 = vmatpush1.msra.mxu0 0.0
  %1004 = vmatprep.subr.mxu0 0.0
  %1005 = vmatpush1.msra.mxu0 0.0
  %1006 = vmatprep.subr.mxu0 0.0
  %1007 = vmatpush1.msra.mxu0 0.0
  %1008 = vmatprep.subr.mxu0 0.0
  %1009 = vmatpush1.msra.mxu0 0.0
  %1010 = vmatprep.subr.mxu0 0.0
  %1011 = vmatpush1.msra.mxu0 0.0
  %1012 = vmatprep.subr.mxu0 0.0
  %1013 = vmatpush1.msra.mxu0 0.0
  %1014 = vmatprep.subr.mxu0 0.0
  %1015 = vmatpush1.msra.mxu0 0.0
  %1016 = vmatprep.subr.mxu0 0.0
  %1017 = vmatpush1.msra.mxu0 0.0
  %1018 = vmatprep.mubr.f32.mxu0 0.0
  %1019 = vmatmul.mubr.f32.gmra.mrb[0].mxu0 %v952
  %v1020 = vpop.f32.mrb[0].mxu0
  %v1021 = vadd.f32 %v948, %v1020
  %v1022 = vpop.f32.mrb[0].mxu0
  %1023 = vdwg.mxu0
  %v1024 = vmax.f32 %v1021, 0.0
  %v1025 = vld [vmem:[%s10] sm:$0xff]
  %v1026 = vld [vmem:[%s11] sm:$0xff]
  %1028 = vset.pattern.permute.xlu0 0
  %1029 = vperm.xlu0 %1028, %v1026
  %v1030 = vpop.permute.xlu0 %1029
  %vm1032 = vcmask 15360
  %v1034 = vsel %vm1032, %v1025, 0
  %vm1036 = vcmask 1041408
  %v1038 = vsel %vm1036, %v1024, 0
  %1040 = vmatprep.subr.mxu0 0.0
  %1041 = vmatpush1.msra.mxu0 %v1038
  %1042 = vmatprep.subr.mxu0 0.0
  %1043 = vmatpush1.msra.mxu0 0.0
  %1044 = vmatprep.subr.mxu0 0.0
  %1045 = vmatpush1.msra.mxu0 0.0
  %1046 = vmatprep.subr.mxu0 0.0
  %1047 = vmatpush1.msra.mxu0 0.0
  %1048 = vmatprep.subr.mxu0 0.0
  %1049 = vmatpush1.msra.mxu0 0.0
  %1050 = vmatprep.subr.mxu0 0.0
  %1051 = vmatpush1.msra.mxu0 0.0
  %1052 = vmatprep.subr.mxu0 0.0
  %1053 = vmatpush1.msra.mxu0 0.0
  %1054 = vmatprep.subr.mxu0 0.0
  %1055 = vmatpush1.msra.mxu0 0.0
  %1056 = vmatprep.subr.mxu0 0.0
  %1057 = vmatpush1.msra.mxu0 0.0
  %1058 = vmatprep.subr.mxu0 0.0
  %1059 = vmatpush1.msra.mxu0 0.0
  %1060 = vmatprep.subr.mxu0 0.0
  %1061 = vmatpush1.msra.mxu0 0.0
  %1062 = vmatprep.subr.mxu0 0.0
  %1063 = vmatpush1.msra.mxu0 0.0
  %1064 = vmatprep.subr.mxu0 0.0
  %1065 = vmatpush1.msra.mxu0 0.0
  %1066 = vmatprep.subr.mxu0 0.0
  %1067 = vmatpush1.msra.mxu0 0.0
  %1068 = vmatprep.subr.mxu0 0.0
  %1069 = vmatpush1.msra.mxu0 0.0
  %1070 = vmatprep.subr.mxu0 0.0
  %1071 = vmatpush1.msra.mxu0 0.0
  %1072 = vmatprep.subr.mxu0 0.0
  %1073 = vmatpush1.msra.mxu0 0.0
  %1074 = vmatprep.subr.mxu0 0.0
  %1075 = vmatpush1.msra.mxu0 0.0
  %1076 = vmatprep.subr.mxu0 0.0
  %1077 = vmatpush1.msra.mxu0 0.0
  %1078 = vmatprep.subr.mxu0 0.0
  %1079 = vmatpush1.msra.mxu0 0.0
  %1080 = vmatprep.subr.mxu0 0.0
  %1081 = vmatpush1.msra.mxu0 0.0
  %1082 = vmatprep.subr.mxu0 0.0
  %1083 = vmatpush1.msra.mxu0 0.0
  %1084 = vmatprep.subr.mxu0 0.0
  %1085 = vmatpush1.msra.mxu0 0.0
  %1086 = vmatprep.subr.mxu0 0.0
  %1087 = vmatpush1.msra.mxu0 0.0
  %1088 = vmatprep.subr.mxu0 0.0
  %1089 = vmatpush1.msra.mxu0 0.0
  %1090 = vmatprep.subr.mxu0 0.0
  %1091 = vmatpush1.msra.mxu0 0.0
  %1092 = vmatprep.subr.mxu0 0.0
  %1093 = vmatpush1.msra.mxu0 0.0
  %1094 = vmatprep.subr.mxu0 0.0
  %1095 = vmatpush1.msra.mxu0 0.0
  %1096 = vmatprep.subr.mxu0 0.0
  %1097 = vmatpush1.msra.mxu0 0.0
  %1098 = vmatprep.subr.mxu0 0.0
  %1099 = vmatpush1.msra.mxu0 0.0
  %1100 = vmatprep.subr.mxu0 0.0
  %1101 = vmatpush1.msra.mxu0 0.0
  %1102 = vmatprep.subr.mxu0 0.0
  %1103 = vmatpush1.msra.mxu0 0.0
  %1104 = vmatprep.mubr.f32.mxu0 0.0
  %1105 = vmatmul.mubr.f32.gmra.mrb[0].mxu0 %v1034
  %v1106 = vpop.f32.mrb[0].mxu0
  %v1107 = vadd.f32 %v1030, %v1106
  %v1108 = vpop.f32.mrb[0].mxu0
  %1109 = vdwg.mxu0
  %v1110 = vxor.u32 %v1107, 2147483648
  %v1111 = vmul.f32 %v1110, 1.442695
  %v1112 = vpow.pop %v1111
  %v1113 = vadd.f32 %v1112, 1.0
  %v1114 = vrcp.pop %v1113
  %v1115 = vmul.f32 1.0, %v1114
  %1117 = vset.pattern.permute.xlu0 0
  %1118 = vperm.xlu0 %1117, %v1115
  %v1119 = vpop.permute.xlu0 %1118
  %1121 = vset.pattern.permute.xlu0 1
  %1122 = vperm.xlu0 %1121, %v1115
  %v1123 = vpop.permute.xlu0 %1122
  %v1125 = vmul.f32 %v854, %v1119
  %v1126 = vmul.f32 %v856, %v1119
  %v1127 = vmul.f32 %v895, %v1123
  %v1128 = vmul.f32 %v897, %v1123
  %v1129 = vmax.f32 %v1125, 0.0
  %v1130 = vmax.f32 %v1126, 0.0
  %v1131 = vmax.f32 %v1127, 0.0
  %v1132 = vmax.f32 %v1128, 0.0
  %v1133 = vpack.c.bf16 %v219, %v215
  %v1134 = vpack.c.bf16 %v220, %v216
  %v1135 = vpack.c.bf16 %v221, %v217
  %v1136 = vpack.c.bf16 %v222, %v218
  %v1137 = vld [vmem:[%s2] sm:$0xf]
  %v1138 = vld [vmem:[%s2 + $0x4] sm:$0xf]
  %v1139 = vld [vmem:[%s2 + $0x8] sm:$0xf]
  %v1140 = vld [vmem:[%s2 + $0xc] sm:$0xf]
  %v1141 = vld [vmem:[%s2 + $0x10] sm:$0xf]
  %v1142 = vld [vmem:[%s2 + $0x14] sm:$0xf]
  %v1143 = vld [vmem:[%s2 + $0x18] sm:$0xf]
  %v1144 = vld [vmem:[%s2 + $0x1c] sm:$0xf]
  %v1145 = vld [vmem:[%s2 + $0x20] sm:$0xf]
  %v1146 = vld [vmem:[%s2 + $0x24] sm:$0xf]
  %v1147 = vld [vmem:[%s2 + $0x28] sm:$0xf]
  %v1148 = vld [vmem:[%s2 + $0x2c] sm:$0xf]
  %v1149 = vld [vmem:[%s2 + $0x30] sm:$0xf]
  %v1150 = vld [vmem:[%s2 + $0x34] sm:$0xf]
  %v1151 = vld [vmem:[%s2 + $0x38] sm:$0xf]
  %v1152 = vld [vmem:[%s2 + $0x3c] sm:$0xf]
  %v1153 = vld [vmem:[%s2 + $0x40] sm:$0xf]
  %v1154 = vld [vmem:[%s2 + $0x44] sm:$0xf]
  %v1155 = vld [vmem:[%s2 + $0x48] sm:$0xf]
  %v1156 = vld [vmem:[%s2 + $0x4c] sm:$0xf]
  %v1157 = vld [vmem:[%s2 + $0x50] sm:$0xf]
  %v1158 = vld [vmem:[%s2 + $0x54] sm:$0xf]
  %v1159 = vld [vmem:[%s2 + $0x58] sm:$0xf]
  %v1160 = vld [vmem:[%s2 + $0x5c] sm:$0xf]
  %v1161 = vld [vmem:[%s2 + $0x60] sm:$0xf]
  %v1162 = vld [vmem:[%s2 + $0x64] sm:$0xf]
  %v1163 = vld [vmem:[%s2 + $0x68] sm:$0xf]
  %v1164 = vld [vmem:[%s2 + $0x6c] sm:$0xf]
  %v1165 = vld [vmem:[%s2 + $0x70] sm:$0xf]
  %v1166 = vld [vmem:[%s2 + $0x74] sm:$0xf]
  %v1167 = vld [vmem:[%s2 + $0x78] sm:$0xf]
  %v1168 = vld [vmem:[%s2 + $0x7c] sm:$0xf]
  %v1169 = vld [vmem:[%s2 + $0x80] sm:$0xf]
  %v1170 = vld [vmem:[%s2 + $0x84] sm:$0xf]
  %v1171 = vld [vmem:[%s2 + $0x88] sm:$0xf]
  %v1172 = vld [vmem:[%s2 + $0x8c] sm:$0xf]
  %v1173 = vld [vmem:[%s2 + $0x90] sm:$0xf]
  %v1174 = vld [vmem:[%s2 + $0x94] sm:$0xf]
  %v1175 = vld [vmem:[%s2 + $0x98] sm:$0xf]
  %v1176 = vld [vmem:[%s2 + $0x9c] sm:$0xf]
  %v1177 = vld [vmem:[%s2 + $0xa0] sm:$0xf]
  %v1178 = vld [vmem:[%s2 + $0xa4] sm:$0xf]
  %v1179 = vld [vmem:[%s2 + $0xa8] sm:$0xf]
  %v1180 = vld [vmem:[%s2 + $0xac] sm:$0xf]
  %v1181 = vld [vmem:[%s2 + $0xb0] sm:$0xf]
  %v1182 = vld [vmem:[%s2 + $0xb4] sm:$0xf]
  %v1183 = vld [vmem:[%s2 + $0xb8] sm:$0xf]
  %v1184 = vld [vmem:[%s2 + $0xbc] sm:$0xf]
  %v1185 = vld [vmem:[%s2 + $0xc0] sm:$0xf]
  %v1186 = vld [vmem:[%s2 + $0xc4] sm:$0xf]
  %v1187 = vld [vmem:[%s2 + $0xc8] sm:$0xf]
  %v1188 = vld [vmem:[%s2 + $0xcc] sm:$0xf]
  %v1189 = vld [vmem:[%s2 + $0xd0] sm:$0xf]
  %v1190 = vld [vmem:[%s2 + $0xd4] sm:$0xf]
  %v1191 = vld [vmem:[%s2 + $0xd8] sm:$0xf]
  %v1192 = vld [vmem:[%s2 + $0xdc] sm:$0xf]
  %v1193 = vld [vmem:[%s2 + $0xe0] sm:$0xf]
  %v1194 = vld [vmem:[%s2 + $0xe4] sm:$0xf]
  %v1195 = vld [vmem:[%s2 + $0xe8] sm:$0xf]
  %v1196 = vld [vmem:[%s2 + $0xec] sm:$0xf]
  %v1197 = vld [vmem:[%s2 + $0xf0] sm:$0xf]
  %v1198 = vld [vmem:[%s2 + $0xf4] sm:$0xf]
  %v1199 = vld [vmem:[%s2 + $0xf8] sm:$0xf]
  %v1200 = vld [vmem:[%s2 + $0xfc] sm:$0xf]
  %v1265 = vunpack.c.l.b16 %v1137
  %v1266 = vunpack.c.l.b16 %v1138
  %v1267 = vunpack.c.l.b16 %v1139
  %v1268 = vunpack.c.l.b16 %v1140
  %v1269 = vunpack.c.l.b16 %v1141
  %v1270 = vunpack.c.l.b16 %v1142
  %v1271 = vunpack.c.l.b16 %v1143
  %v1272 = vunpack.c.l.b16 %v1144
  %v1273 = vunpack.c.l.b16 %v1145
  %v1274 = vunpack.c.l.b16 %v1146
  %v1275 = vunpack.c.l.b16 %v1147
  %v1276 = vunpack.c.l.b16 %v1148
  %v1277 = vunpack.c.l.b16 %v1149
  %v1278 = vunpack.c.l.b16 %v1150
  %v1279 = vunpack.c.l.b16 %v1151
  %v1280 = vunpack.c.l.b16 %v1152
  %v1281 = vunpack.c.l.b16 %v1153
  %v1282 = vunpack.c.l.b16 %v1154
  %v1283 = vunpack.c.l.b16 %v1155
  %v1284 = vunpack.c.l.b16 %v1156
  %v1285 = vunpack.c.l.b16 %v1157
  %v1286 = vunpack.c.l.b16 %v1158
  %v1287 = vunpack.c.l.b16 %v1159
  %v1288 = vunpack.c.l.b16 %v1160
  %v1289 = vunpack.c.l.b16 %v1161
  %v1290 = vunpack.c.l.b16 %v1162
  %v1291 = vunpack.c.l.b16 %v1163
  %v1292 = vunpack.c.l.b16 %v1164
  %v1293 = vunpack.c.l.b16 %v1165
  %v1294 = vunpack.c.l.b16 %v1166
  %v1295 = vunpack.c.l.b16 %v1167
  %v1296 = vunpack.c.l.b16 %v1168
  %v1297 = vunpack.c.l.b16 %v1169
  %v1298 = vunpack.c.l.b16 %v1170
  %v1299 = vunpack.c.l.b16 %v1171
  %v1300 = vunpack.c.l.b16 %v1172
  %v1301 = vunpack.c.l.b16 %v1173
  %v1302 = vunpack.c.l.b16 %v1174
  %v1303 = vunpack.c.l.b16 %v1175
  %v1304 = vunpack.c.l.b16 %v1176
  %v1305 = vunpack.c.l.b16 %v1177
  %v1306 = vunpack.c.l.b16 %v1178
  %v1307 = vunpack.c.l.b16 %v1179
  %v1308 = vunpack.c.l.b16 %v1180
  %v1309 = vunpack.c.l.b16 %v1181
  %v1310 = vunpack.c.l.b16 %v1182
  %v1311 = vunpack.c.l.b16 %v1183
  %v1312 = vunpack.c.l.b16 %v1184
  %v1313 = vunpack.c.l.b16 %v1185
  %v1314 = vunpack.c.l.b16 %v1186
  %v1315 = vunpack.c.l.b16 %v1187
  %v1316 = vunpack.c.l.b16 %v1188
  %v1317 = vunpack.c.l.b16 %v1189
  %v1318 = vunpack.c.l.b16 %v1190
  %v1319 = vunpack.c.l.b16 %v1191
  %v1320 = vunpack.c.l.b16 %v1192
  %v1321 = vunpack.c.l.b16 %v1193
  %v1322 = vunpack.c.l.b16 %v1194
  %v1323 = vunpack.c.l.b16 %v1195
  %v1324 = vunpack.c.l.b16 %v1196
  %v1325 = vunpack.c.l.b16 %v1197
  %v1326 = vunpack.c.l.b16 %v1198
  %v1327 = vunpack.c.l.b16 %v1199
  %v1328 = vunpack.c.l.b16 %v1200
  %v1329 = vpack.c.b16 %v1266, %v1265
  %v1330 = vpack.c.b16 %v1268, %v1267
  %v1331 = vpack.c.b16 %v1270, %v1269
  %v1332 = vpack.c.b16 %v1272, %v1271
  %v1333 = vpack.c.b16 %v1274, %v1273
  %v1334 = vpack.c.b16 %v1276, %v1275
  %v1335 = vpack.c.b16 %v1278, %v1277
  %v1336 = vpack.c.b16 %v1280, %v1279
  %v1337 = vpack.c.b16 %v1282, %v1281
  %v1338 = vpack.c.b16 %v1284, %v1283
  %v1339 = vpack.c.b16 %v1286, %v1285
  %v1340 = vpack.c.b16 %v1288, %v1287
  %v1341 = vpack.c.b16 %v1290, %v1289
  %v1342 = vpack.c.b16 %v1292, %v1291
  %v1343 = vpack.c.b16 %v1294, %v1293
  %v1344 = vpack.c.b16 %v1296, %v1295
  %v1345 = vpack.c.b16 %v1298, %v1297
  %v1346 = vpack.c.b16 %v1300, %v1299
  %v1347 = vpack.c.b16 %v1302, %v1301
  %v1348 = vpack.c.b16 %v1304, %v1303
  %v1349 = vpack.c.b16 %v1306, %v1305
  %v1350 = vpack.c.b16 %v1308, %v1307
  %v1351 = vpack.c.b16 %v1310, %v1309
  %v1352 = vpack.c.b16 %v1312, %v1311
  %v1353 = vpack.c.b16 %v1314, %v1313
  %v1354 = vpack.c.b16 %v1316, %v1315
  %v1355 = vpack.c.b16 %v1318, %v1317
  %v1356 = vpack.c.b16 %v1320, %v1319
  %v1357 = vpack.c.b16 %v1322, %v1321
  %v1358 = vpack.c.b16 %v1324, %v1323
  %v1359 = vpack.c.b16 %v1326, %v1325
  %v1360 = vpack.c.b16 %v1328, %v1327
  %1393 = vmatprep.subr.bf16.mxu0 0
  %1394 = vmatpush1.bf16.msra.mxu0 %v1329
  %1395 = vmatprep.subr.bf16.mxu0 0
  %1396 = vmatpush1.bf16.msra.mxu0 %v1330
  %1397 = vmatprep.subr.bf16.mxu0 0
  %1398 = vmatpush1.bf16.msra.mxu0 %v1331
  %1399 = vmatprep.subr.bf16.mxu0 0
  %1400 = vmatpush1.bf16.msra.mxu0 %v1332
  %1401 = vmatprep.subr.bf16.mxu0 0
  %1402 = vmatpush1.bf16.msra.mxu0 %v1333
  %1403 = vmatprep.subr.bf16.mxu0 0
  %1404 = vmatpush1.bf16.msra.mxu0 %v1334
  %1405 = vmatprep.subr.bf16.mxu0 0
  %1406 = vmatpush1.bf16.msra.mxu0 %v1335
  %1407 = vmatprep.subr.bf16.mxu0 0
  %1408 = vmatpush1.bf16.msra.mxu0 %v1336
  %1409 = vmatprep.subr.bf16.mxu0 0
  %1410 = vmatpush1.bf16.msra.mxu0 %v1337
  %1411 = vmatprep.subr.bf16.mxu0 0
  %1412 = vmatpush1.bf16.msra.mxu0 %v1338
  %1413 = vmatprep.subr.bf16.mxu0 0
  %1414 = vmatpush1.bf16.msra.mxu0 %v1339
  %1415 = vmatprep.subr.bf16.mxu0 0
  %1416 = vmatpush1.bf16.msra.mxu0 %v1340
  %1417 = vmatprep.subr.bf16.mxu0 0
  %1418 = vmatpush1.bf16.msra.mxu0 %v1341
  %1419 = vmatprep.subr.bf16.mxu0 0
  %1420 = vmatpush1.bf16.msra.mxu0 %v1342
  %1421 = vmatprep.subr.bf16.mxu0 0
  %1422 = vmatpush1.bf16.msra.mxu0 %v1343
  %1423 = vmatprep.subr.bf16.mxu0 0
  %1424 = vmatpush1.bf16.msra.mxu0 %v1344
  %1425 = vmatprep.mubr.bf16.mxu0 %v1134
  %1426 = vmatmul.mubr.bf16.gmra.mrb[0].mxu0 %v1133
  %v1427 = vpop.f32.mrb[0].mxu0
  %v1428 = vadd.f32 0.0, %v1427
  %v1429 = vpop.f32.mrb[0].mxu0
  %v1430 = vpop.f32.mrb[0].mxu0
  %v1431 = vadd.f32 0.0, %v1430
  %v1432 = vpop.f32.mrb[0].mxu0
  %1433 = vdwg.mxu0
  %1434 = vmatprep.subr.bf16.mxu0 0
  %1435 = vmatpush1.bf16.msra.mxu0 %v1345
  %1436 = vmatprep.subr.bf16.mxu0 0
  %1437 = vmatpush1.bf16.msra.mxu0 %v1346
  %1438 = vmatprep.subr.bf16.mxu0 0
  %1439 = vmatpush1.bf16.msra.mxu0 %v1347
  %1440 = vmatprep.subr.bf16.mxu0 0
  %1441 = vmatpush1.bf16.msra.mxu0 %v1348
  %1442 = vmatprep.subr.bf16.mxu0 0
  %1443 = vmatpush1.bf16.msra.mxu0 %v1349
  %1444 = vmatprep.subr.bf16.mxu0 0
  %1445 = vmatpush1.bf16.msra.mxu0 %v1350
  %1446 = vmatprep.subr.bf16.mxu0 0
  %1447 = vmatpush1.bf16.msra.mxu0 %v1351
  %1448 = vmatprep.subr.bf16.mxu0 0
  %1449 = vmatpush1.bf16.msra.mxu0 %v1352
  %1450 = vmatprep.subr.bf16.mxu0 0
  %1451 = vmatpush1.bf16.msra.mxu0 %v1353
  %1452 = vmatprep.subr.bf16.mxu0 0
  %1453 = vmatpush1.bf16.msra.mxu0 %v1354
  %1454 = vmatprep.subr.bf16.mxu0 0
  %1455 = vmatpush1.bf16.msra.mxu0 %v1355
  %1456 = vmatprep.subr.bf16.mxu0 0
  %1457 = vmatpush1.bf16.msra.mxu0 %v1356
  %1458 = vmatprep.subr.bf16.mxu0 0
  %1459 = vmatpush1.bf16.msra.mxu0 %v1357
  %1460 = vmatprep.subr.bf16.mxu0 0
  %1461 = vmatpush1.bf16.msra.mxu0 %v1358
  %1462 = vmatprep.subr.bf16.mxu0 0
  %1463 = vmatpush1.bf16.msra.mxu0 %v1359
  %1464 = vmatprep.subr.bf16.mxu0 0
  %1465 = vmatpush1.bf16.msra.mxu0 %v1360
  %1466 = vmatprep.mubr.bf16.mxu0 %v1136
  %1467 = vmatmul.mubr.bf16.gmra.mrb[0].mxu0 %v1135
  %v1468 = vpop.f32.mrb[0].mxu0
  %v1469 = vadd.f32 %v1428, %v1468
  %v1470 = vpop.f32.mrb[0].mxu0
  %v1471 = vpop.f32.mrb[0].mxu0
  %v1472 = vadd.f32 %v1431, %v1471
  %v1473 = vpop.f32.mrb[0].mxu0
  %1474 = vdwg.mxu0
  %v1475 = vpack.c.bf16 %v1472, %v1469
  %v1476 = vld [vmem:[%s3] sm:$0xff]
  %v1477 = vld [vmem:[%s3 + $0x8] sm:$0xff]
  %v1478 = vld [vmem:[%s3 + $0x10] sm:$0xff]
  %v1479 = vld [vmem:[%s3 + $0x18] sm:$0xff]
  %v1480 = vld [vmem:[%s3 + $0x20] sm:$0xff]
  %v1481 = vld [vmem:[%s3 + $0x28] sm:$0xff]
  %v1482 = vld [vmem:[%s3 + $0x30] sm:$0xff]
  %v1483 = vld [vmem:[%s3 + $0x38] sm:$0xff]
  %v1492 = vunpack.c.l.b16 %v1476
  %v1493 = vunpack.c.h.b16 %v1476
  %v1494 = vunpack.c.l.b16 %v1477
  %v1495 = vunpack.c.h.b16 %v1477
  %v1496 = vunpack.c.l.b16 %v1478
  %v1497 = vunpack.c.h.b16 %v1478
  %v1498 = vunpack.c.l.b16 %v1479
  %v1499 = vunpack.c.h.b16 %v1479
  %v1500 = vunpack.c.l.b16 %v1480
  %v1501 = vunpack.c.h.b16 %v1480
  %v1502 = vunpack.c.l.b16 %v1481
  %v1503 = vunpack.c.h.b16 %v1481
  %v1504 = vunpack.c.l.b16 %v1482
  %v1505 = vunpack.c.h.b16 %v1482
  %v1506 = vunpack.c.l.b16 %v1483
  %v1507 = vunpack.c.h.b16 %v1483
  %v1508 = vpack.c.b16 %v1496, %v1492
  %v1509 = vpack.c.b16 %v1497, %v1493
  %v1510 = vpack.c.b16 %v1498, %v1494
  %v1511 = vpack.c.b16 %v1499, %v1495
  %v1512 = vpack.c.b16 %v1504, %v1500
  %v1513 = vpack.c.b16 %v1505, %v1501
  %v1514 = vpack.c.b16 %v1506, %v1502
  %v1515 = vpack.c.b16 %v1507, %v1503
  %v1525 = vsel %vm94, %v1475, 0
  %1527 = vmatprep.subr.bf16.mxu0 %v1509
  %1528 = vmatpush1.bf16.msra.mxu0 %v1508
  %1529 = vmatprep.subr.bf16.mxu0 %v1513
  %1530 = vmatpush1.bf16.msra.mxu0 %v1512
  %1531 = vmatprep.subr.bf16.mxu0 0
  %1532 = vmatpush1.bf16.msra.mxu0 0
  %1533 = vmatprep.subr.bf16.mxu0 0
  %1534 = vmatpush1.bf16.msra.mxu0 0
  %1535 = vmatprep.subr.bf16.mxu0 0
  %1536 = vmatpush1.bf16.msra.mxu0 0
  %1537 = vmatprep.subr.bf16.mxu0 0
  %1538 = vmatpush1.bf16.msra.mxu0 0
  %1539 = vmatprep.subr.bf16.mxu0 0
  %1540 = vmatpush1.bf16.msra.mxu0 0
  %1541 = vmatprep.subr.bf16.mxu0 0
  %1542 = vmatpush1.bf16.msra.mxu0 0
  %1543 = vmatprep.subr.bf16.mxu0 0
  %1544 = vmatpush1.bf16.msra.mxu0 0
  %1545 = vmatprep.subr.bf16.mxu0 0
  %1546 = vmatpush1.bf16.msra.mxu0 0
  %1547 = vmatprep.subr.bf16.mxu0 0
  %1548 = vmatpush1.bf16.msra.mxu0 0
  %1549 = vmatprep.subr.bf16.mxu0 0
  %1550 = vmatpush1.bf16.msra.mxu0 0
  %1551 = vmatprep.subr.bf16.mxu0 0
  %1552 = vmatpush1.bf16.msra.mxu0 0
  %1553 = vmatprep.subr.bf16.mxu0 0
  %1554 = vmatpush1.bf16.msra.mxu0 0
  %1555 = vmatprep.subr.bf16.mxu0 0
  %1556 = vmatpush1.bf16.msra.mxu0 0
  %1557 = vmatprep.subr.bf16.mxu0 0
  %1558 = vmatpush1.bf16.msra.mxu0 0
  %1559 = vmatprep.mubr.bf16.mxu0 0
  %1560 = vmatmul.mubr.bf16.gmra.mrb[0].mxu0 %v1525
  %v1561 = vpop.f32.mrb[0].mxu0
  %v1562 = vadd.f32 0.0, %v1561
  %v1563 = vpop.f32.mrb[0].mxu0
  %v1564 = vadd.f32 0.0, %v1563
  %v1565 = vpop.f32.mrb[0].mxu0
  %v1566 = vadd.f32 0.0, %v1565
  %v1567 = vpop.f32.mrb[0].mxu0
  %v1568 = vadd.f32 0.0, %v1567
  %1569 = vdwg.mxu0
  %1570 = vmatprep.subr.bf16.mxu0 %v1511
  %1571 = vmatpush1.bf16.msra.mxu0 %v1510
  %1572 = vmatprep.subr.bf16.mxu0 %v1515
  %1573 = vmatpush1.bf16.msra.mxu0 %v1514
  %1574 = vmatprep.subr.bf16.mxu0 0
  %1575 = vmatpush1.bf16.msra.mxu0 0
  %1576 = vmatprep.subr.bf16.mxu0 0
  %1577 = vmatpush1.bf16.msra.mxu0 0
  %1578 = vmatprep.subr.bf16.mxu0 0
  %1579 = vmatpush1.bf16.msra.mxu0 0
  %1580 = vmatprep.subr.bf16.mxu0 0
  %1581 = vmatpush1.bf16.msra.mxu0 0
  %1582 = vmatprep.subr.bf16.mxu0 0
  %1583 = vmatpush1.bf16.msra.mxu0 0
  %1584 = vmatprep.subr.bf16.mxu0 0
  %1585 = vmatpush1.bf16.msra.mxu0 0
  %1586 = vmatprep.subr.bf16.mxu0 0
  %1587 = vmatpush1.bf16.msra.mxu0 0
  %1588 = vmatprep.subr.bf16.mxu0 0
  %1589 = vmatpush1.bf16.msra.mxu0 0
  %1590 = vmatprep.subr.bf16.mxu0 0
  %1591 = vmatpush1.bf16.msra.mxu0 0
  %1592 = vmatprep.subr.bf16.mxu0 0
  %1593 = vmatpush1.bf16.msra.mxu0 0
  %1594 = vmatprep.subr.bf16.mxu0 0
  %1595 = vmatpush1.bf16.msra.mxu0 0
  %1596 = vmatprep.subr.bf16.mxu0 0
  %1597 = vmatpush1.bf16.msra.mxu0 0
  %1598 = vmatprep.subr.bf16.mxu0 0
  %1599 = vmatpush1.bf16.msra.mxu0 0
  %1600 = vmatprep.subr.bf16.mxu0 0
  %1601 = vmatpush1.bf16.msra.mxu0 0
  %1602 = vmatprep.mubr.bf16.mxu0 0
  %1603 = vmatmul.mubr.bf16.gmra.mrb[0].mxu0 %v1525
  %v1604 = vpop.f32.mrb[0].mxu0
  %v1605 = vadd.f32 0.0, %v1604
  %v1606 = vpop.f32.mrb[0].mxu0
  %v1607 = vadd.f32 0.0, %v1606
  %v1608 = vpop.f32.mrb[0].mxu0
  %v1609 = vadd.f32 0.0, %v1608
  %v1610 = vpop.f32.mrb[0].mxu0
  %v1611 = vadd.f32 0.0, %v1610
  %1612 = vdwg.mxu0
  %v1613 = vmul.f32 %v1562, 0.0625
  %v1614 = vmul.f32 %v1564, 0.0625
  %v1615 = vmul.f32 %v1605, 0.0625
  %v1616 = vmul.f32 %v1607, 0.0625
  %v1617 = vmul.f32 %v1566, 0.0625
  %v1618 = vmul.f32 %v1568, 0.0625
  %v1619 = vmul.f32 %v1609, 0.0625
  %v1620 = vmul.f32 %v1611, 0.0625
  %v1621 = vsub.f32 %v215, %v1613
  %v1622 = vsub.f32 %v216, %v1614
  %v1623 = vsub.f32 %v217, %v1615
  %v1624 = vsub.f32 %v218, %v1616
  %v1625 = vsub.f32 %v219, %v1617
  %v1626 = vsub.f32 %v220, %v1618
  %v1627 = vsub.f32 %v221, %v1619
  %v1628 = vsub.f32 %v222, %v1620
  %v1629 = vld [vmem:[%s12] sm:$0xff]
  %v1630 = vld [vmem:[%s12 + $0x8] sm:$0xff]
  %1631 = vrot.lane.b32.xlu0 %v1621, 17
  %v1632 = vpop.permute.xlu0 %1631
  %1633 = vrot.lane.b32.xlu0 %v1625, 17
  %v1634 = vpop.permute.xlu0 %1633
  %1635 = vrot.lane.b32.xlu0 %v1622, 17
  %v1636 = vpop.permute.xlu0 %1635
  %1637 = vrot.lane.b32.xlu0 %v1626, 17
  %v1638 = vpop.permute.xlu0 %1637
  %1639 = vrot.lane.b32.xlu0 %v1623, 17
  %v1640 = vpop.permute.xlu0 %1639
  %1641 = vrot.lane.b32.xlu0 %v1627, 17
  %v1642 = vpop.permute.xlu0 %1641
  %1643 = vrot.lane.b32.xlu0 %v1624, 17
  %v1644 = vpop.permute.xlu0 %1643
  %1645 = vrot.lane.b32.xlu0 %v1628, 17
  %v1646 = vpop.permute.xlu0 %1645
  %v1647 = vsel %vm234, %v1640, %v1644
  %v1648 = vsel %vm234, %v1642, %v1646
  %v1649 = vsel %vm234, %v1636, %v1640
  %v1650 = vsel %vm234, %v1638, %v1642
  %v1651 = vsel %vm234, %v1632, %v1636
  %v1652 = vsel %vm234, %v1634, %v1638
  %v1653 = vsel %vm234, %v1644, %v1632
  %v1654 = vsel %vm234, %v1646, %v1634
  %v1655 = vmul.f32 %v1653, %v243
  %v1656 = vmul.f32 %v1651, %v247
  %v1657 = vmul.f32 %v1649, %v251
  %v1658 = vmul.f32 %v1647, %v255
  %v1659 = vmul.f32 %v1654, %v243
  %v1660 = vmul.f32 %v1652, %v247
  %v1661 = vmul.f32 %v1650, %v251
  %v1662 = vmul.f32 %v1648, %v255
  %1663 = vrot.lane.b32.xlu0 %v1621, 16
  %v1664 = vpop.permute.xlu0 %1663
  %1665 = vrot.lane.b32.xlu0 %v1625, 16
  %v1666 = vpop.permute.xlu0 %1665
  %1667 = vrot.lane.b32.xlu0 %v1622, 16
  %v1668 = vpop.permute.xlu0 %1667
  %1669 = vrot.lane.b32.xlu0 %v1626, 16
  %v1670 = vpop.permute.xlu0 %1669
  %1671 = vrot.lane.b32.xlu0 %v1623, 16
  %v1672 = vpop.permute.xlu0 %1671
  %1673 = vrot.lane.b32.xlu0 %v1627, 16
  %v1674 = vpop.permute.xlu0 %1673
  %1675 = vrot.lane.b32.xlu0 %v1624, 16
  %v1676 = vpop.permute.xlu0 %1675
  %1677 = vrot.lane.b32.xlu0 %v1628, 16
  %v1678 = vpop.permute.xlu0 %1677
  %v1679 = vsel %vm272, %v1672, %v1676
  %v1680 = vsel %vm272, %v1674, %v1678
  %v1681 = vsel %vm272, %v1668, %v1672
  %v1682 = vsel %vm272, %v1670, %v1674
  %v1683 = vsel %vm272, %v1664, %v1668
  %v1684 = vsel %vm272, %v1666, %v1670
  %v1685 = vsel %vm272, %v1676, %v1664
  %v1686 = vsel %vm272, %v1678, %v1666
  %v1687 = vmul.f32 %v1685, %v281
  %v1688 = vmul.f32 %v1683, %v285
  %v1689 = vmul.f32 %v1681, %v289
  %v1690 = vmul.f32 %v1679, %v293
  %v1691 = vmul.f32 %v1686, %v281
  %v1692 = vmul.f32 %v1684, %v285
  %v1693 = vmul.f32 %v1682, %v289
  %v1694 = vmul.f32 %v1680, %v293
  %1695 = vrot.lane.b32.xlu0 %v1621, 15
  %v1696 = vpop.permute.xlu0 %1695
  %1697 = vrot.lane.b32.xlu0 %v1625, 15
  %v1698 = vpop.permute.xlu0 %1697
  %1699 = vrot.lane.b32.xlu0 %v1622, 15
  %v1700 = vpop.permute.xlu0 %1699
  %1701 = vrot.lane.b32.xlu0 %v1626, 15
  %v1702 = vpop.permute.xlu0 %1701
  %1703 = vrot.lane.b32.xlu0 %v1623, 15
  %v1704 = vpop.permute.xlu0 %1703
  %1705 = vrot.lane.b32.xlu0 %v1627, 15
  %v1706 = vpop.permute.xlu0 %1705
  %1707 = vrot.lane.b32.xlu0 %v1624, 15
  %v1708 = vpop.permute.xlu0 %1707
  %1709 = vrot.lane.b32.xlu0 %v1628, 15
  %v1710 = vpop.permute.xlu0 %1709
  %v1711 = vsel %vm310, %v1704, %v1708
  %v1712 = vsel %vm310, %v1706, %v1710
  %v1713 = vsel %vm310, %v1700, %v1704
  %v1714 = vsel %vm310, %v1702, %v1706
  %v1715 = vsel %vm310, %v1696, %v1700
  %v1716 = vsel %vm310, %v1698, %v1702
  %v1717 = vsel %vm310, %v1708, %v1696
  %v1718 = vsel %vm310, %v1710, %v1698
  %v1719 = vmul.f32 %v1717, %v319
  %v1720 = vmul.f32 %v1715, %v323
  %v1721 = vmul.f32 %v1713, %v327
  %v1722 = vmul.f32 %v1711, %v331
  %v1723 = vmul.f32 %v1718, %v319
  %v1724 = vmul.f32 %v1716, %v323
  %v1725 = vmul.f32 %v1714, %v327
  %v1726 = vmul.f32 %v1712, %v331
  %1727 = vrot.lane.b32.xlu0 %v1621, 1
  %v1728 = vpop.permute.xlu0 %1727
  %1729 = vrot.lane.b32.xlu0 %v1625, 1
  %v1730 = vpop.permute.xlu0 %1729
  %1731 = vrot.lane.b32.xlu0 %v1622, 1
  %v1732 = vpop.permute.xlu0 %1731
  %1733 = vrot.lane.b32.xlu0 %v1626, 1
  %v1734 = vpop.permute.xlu0 %1733
  %1735 = vrot.lane.b32.xlu0 %v1623, 1
  %v1736 = vpop.permute.xlu0 %1735
  %1737 = vrot.lane.b32.xlu0 %v1627, 1
  %v1738 = vpop.permute.xlu0 %1737
  %1739 = vrot.lane.b32.xlu0 %v1624, 1
  %v1740 = vpop.permute.xlu0 %1739
  %1741 = vrot.lane.b32.xlu0 %v1628, 1
  %v1742 = vpop.permute.xlu0 %1741
  %v1743 = vsel %vm348, %v1736, %v1740
  %v1744 = vsel %vm348, %v1738, %v1742
  %v1745 = vsel %vm348, %v1732, %v1736
  %v1746 = vsel %vm348, %v1734, %v1738
  %v1747 = vsel %vm348, %v1728, %v1732
  %v1748 = vsel %vm348, %v1730, %v1734
  %v1749 = vsel %vm348, %v1740, %v1728
  %v1750 = vsel %vm348, %v1742, %v1730
  %v1751 = vmul.f32 %v1749, %v357
  %v1752 = vmul.f32 %v1747, %v361
  %v1753 = vmul.f32 %v1745, %v365
  %v1754 = vmul.f32 %v1743, %v369
  %v1755 = vmul.f32 %v1750, %v357
  %v1756 = vmul.f32 %v1748, %v361
  %v1757 = vmul.f32 %v1746, %v365
  %v1758 = vmul.f32 %v1744, %v369
  %1759 = vrot.lane.b32.xlu0 %v1621, 127
  %v1760 = vpop.permute.xlu0 %1759
  %1761 = vrot.lane.b32.xlu0 %v1625, 127
  %v1762 = vpop.permute.xlu0 %1761
  %1763 = vrot.lane.b32.xlu0 %v1622, 127
  %v1764 = vpop.permute.xlu0 %1763
  %1765 = vrot.lane.b32.xlu0 %v1626, 127
  %v1766 = vpop.permute.xlu0 %1765
  %1767 = vrot.lane.b32.xlu0 %v1623, 127
  %v1768 = vpop.permute.xlu0 %1767
  %1769 = vrot.lane.b32.xlu0 %v1627, 127
  %v1770 = vpop.permute.xlu0 %1769
  %1771 = vrot.lane.b32.xlu0 %v1624, 127
  %v1772 = vpop.permute.xlu0 %1771
  %1773 = vrot.lane.b32.xlu0 %v1628, 127
  %v1774 = vpop.permute.xlu0 %1773
  %v1775 = vsel %vm386, %v1768, %v1772
  %v1776 = vsel %vm386, %v1770, %v1774
  %v1777 = vsel %vm386, %v1764, %v1768
  %v1778 = vsel %vm386, %v1766, %v1770
  %v1779 = vsel %vm386, %v1760, %v1764
  %v1780 = vsel %vm386, %v1762, %v1766
  %v1781 = vsel %vm386, %v1772, %v1760
  %v1782 = vsel %vm386, %v1774, %v1762
  %v1783 = vmul.f32 %v1779, %v395
  %v1784 = vmul.f32 %v1777, %v399
  %v1785 = vmul.f32 %v1775, %v403
  %v1786 = vmul.f32 %v1781, %v407
  %v1787 = vmul.f32 %v1780, %v395
  %v1788 = vmul.f32 %v1778, %v399
  %v1789 = vmul.f32 %v1776, %v403
  %v1790 = vmul.f32 %v1782, %v407
  %1791 = vrot.lane.b32.xlu0 %v1621, 113
  %v1792 = vpop.permute.xlu0 %1791
  %1793 = vrot.lane.b32.xlu0 %v1625, 113
  %v1794 = vpop.permute.xlu0 %1793
  %1795 = vrot.lane.b32.xlu0 %v1622, 113
  %v1796 = vpop.permute.xlu0 %1795
  %1797 = vrot.lane.b32.xlu0 %v1626, 113
  %v1798 = vpop.permute.xlu0 %1797
  %1799 = vrot.lane.b32.xlu0 %v1623, 113
  %v1800 = vpop.permute.xlu0 %1799
  %1801 = vrot.lane.b32.xlu0 %v1627, 113
  %v1802 = vpop.permute.xlu0 %1801
  %1803 = vrot.lane.b32.xlu0 %v1624, 113
  %v1804 = vpop.permute.xlu0 %1803
  %1805 = vrot.lane.b32.xlu0 %v1628, 113
  %v1806 = vpop.permute.xlu0 %1805
  %v1807 = vsel %vm424, %v1800, %v1804
  %v1808 = vsel %vm424, %v1802, %v1806
  %v1809 = vsel %vm424, %v1796, %v1800
  %v1810 = vsel %vm424, %v1798, %v1802
  %v1811 = vsel %vm424, %v1792, %v1796
  %v1812 = vsel %vm424, %v1794, %v1798
  %v1813 = vsel %vm424, %v1804, %v1792
  %v1814 = vsel %vm424, %v1806, %v1794
  %v1815 = vmul.f32 %v1811, %v433
  %v1816 = vmul.f32 %v1809, %v437
  %v1817 = vmul.f32 %v1807, %v441
  %v1818 = vmul.f32 %v1813, %v445
  %v1819 = vmul.f32 %v1812, %v433
  %v1820 = vmul.f32 %v1810, %v437
  %v1821 = vmul.f32 %v1808, %v441
  %v1822 = vmul.f32 %v1814, %v445
  %1823 = vrot.lane.b32.xlu0 %v1621, 112
  %v1824 = vpop.permute.xlu0 %1823
  %1825 = vrot.lane.b32.xlu0 %v1625, 112
  %v1826 = vpop.permute.xlu0 %1825
  %1827 = vrot.lane.b32.xlu0 %v1622, 112
  %v1828 = vpop.permute.xlu0 %1827
  %1829 = vrot.lane.b32.xlu0 %v1626, 112
  %v1830 = vpop.permute.xlu0 %1829
  %1831 = vrot.lane.b32.xlu0 %v1623, 112
  %v1832 = vpop.permute.xlu0 %1831
  %1833 = vrot.lane.b32.xlu0 %v1627, 112
  %v1834 = vpop.permute.xlu0 %1833
  %1835 = vrot.lane.b32.xlu0 %v1624, 112
  %v1836 = vpop.permute.xlu0 %1835
  %1837 = vrot.lane.b32.xlu0 %v1628, 112
  %v1838 = vpop.permute.xlu0 %1837
  %v1839 = vsel %vm462, %v1832, %v1836
  %v1840 = vsel %vm462, %v1834, %v1838
  %v1841 = vsel %vm462, %v1828, %v1832
  %v1842 = vsel %vm462, %v1830, %v1834
  %v1843 = vsel %vm462, %v1824, %v1828
  %v1844 = vsel %vm462, %v1826, %v1830
  %v1845 = vsel %vm462, %v1836, %v1824
  %v1846 = vsel %vm462, %v1838, %v1826
  %v1847 = vmul.f32 %v1843, %v471
  %v1848 = vmul.f32 %v1841, %v475
  %v1849 = vmul.f32 %v1839, %v479
  %v1850 = vmul.f32 %v1845, %v483
  %v1851 = vmul.f32 %v1844, %v471
  %v1852 = vmul.f32 %v1842, %v475
  %v1853 = vmul.f32 %v1840, %v479
  %v1854 = vmul.f32 %v1846, %v483
  %1855 = vrot.lane.b32.xlu0 %v1621, 111
  %v1856 = vpop.permute.xlu0 %1855
  %1857 = vrot.lane.b32.xlu0 %v1625, 111
  %v1858 = vpop.permute.xlu0 %1857
  %1859 = vrot.lane.b32.xlu0 %v1622, 111
  %v1860 = vpop.permute.xlu0 %1859
  %1861 = vrot.lane.b32.xlu0 %v1626, 111
  %v1862 = vpop.permute.xlu0 %1861
  %1863 = vrot.lane.b32.xlu0 %v1623, 111
  %v1864 = vpop.permute.xlu0 %1863
  %1865 = vrot.lane.b32.xlu0 %v1627, 111
  %v1866 = vpop.permute.xlu0 %1865
  %1867 = vrot.lane.b32.xlu0 %v1624, 111
  %v1868 = vpop.permute.xlu0 %1867
  %1869 = vrot.lane.b32.xlu0 %v1628, 111
  %v1870 = vpop.permute.xlu0 %1869
  %v1871 = vsel %vm500, %v1864, %v1868
  %v1872 = vsel %vm500, %v1866, %v1870
  %v1873 = vsel %vm500, %v1860, %v1864
  %v1874 = vsel %vm500, %v1862, %v1866
  %v1875 = vsel %vm500, %v1856, %v1860
  %v1876 = vsel %vm500, %v1858, %v1862
  %v1877 = vsel %vm500, %v1868, %v1856
  %v1878 = vsel %vm500, %v1870, %v1858
  %v1879 = vmul.f32 %v1875, %v509
  %v1880 = vmul.f32 %v1873, %v513
  %v1881 = vmul.f32 %v1871, %v517
  %v1882 = vmul.f32 %v1877, %v521
  %v1883 = vmul.f32 %v1876, %v509
  %v1884 = vmul.f32 %v1874, %v513
  %v1885 = vmul.f32 %v1872, %v517
  %v1886 = vmul.f32 %v1878, %v521
  %v1887 = vpack.c.bf16 %v1659, %v1655
  %v1888 = vpack.c.bf16 %v1660, %v1656
  %v1889 = vpack.c.bf16 %v1661, %v1657
  %v1890 = vpack.c.bf16 %v1662, %v1658
  %v1891 = vpack.c.bf16 %v1691, %v1687
  %v1892 = vpack.c.bf16 %v1692, %v1688
  %v1893 = vpack.c.bf16 %v1693, %v1689
  %v1894 = vpack.c.bf16 %v1694, %v1690
  %v1895 = vpack.c.bf16 %v1723, %v1719
  %v1896 = vpack.c.bf16 %v1724, %v1720
  %v1897 = vpack.c.bf16 %v1725, %v1721
  %v1898 = vpack.c.bf16 %v1726, %v1722
  %v1899 = vpack.c.bf16 %v1755, %v1751
  %v1900 = vpack.c.bf16 %v1756, %v1752
  %v1901 = vpack.c.bf16 %v1757, %v1753
  %v1902 = vpack.c.bf16 %v1758, %v1754
  %v1903 = vpack.c.bf16 %v1625, %v1621
  %v1904 = vpack.c.bf16 %v1626, %v1622
  %v1905 = vpack.c.bf16 %v1627, %v1623
  %v1906 = vpack.c.bf16 %v1628, %v1624
  %v1907 = vpack.c.bf16 %v1787, %v1783
  %v1908 = vpack.c.bf16 %v1788, %v1784
  %v1909 = vpack.c.bf16 %v1789, %v1785
  %v1910 = vpack.c.bf16 %v1790, %v1786
  %v1911 = vpack.c.bf16 %v1819, %v1815
  %v1912 = vpack.c.bf16 %v1820, %v1816
  %v1913 = vpack.c.bf16 %v1821, %v1817
  %v1914 = vpack.c.bf16 %v1822, %v1818
  %v1915 = vpack.c.bf16 %v1851, %v1847
  %v1916 = vpack.c.bf16 %v1852, %v1848
  %v1917 = vpack.c.bf16 %v1853, %v1849
  %v1918 = vpack.c.bf16 %v1854, %v1850
  %v1919 = vpack.c.bf16 %v1883, %v1879
  %v1920 = vpack.c.bf16 %v1884, %v1880
  %v1921 = vpack.c.bf16 %v1885, %v1881
  %v1922 = vpack.c.bf16 %v1886, %v1882
  %v1925 = vunpack.c.l.b16 %v1629
  %v1926 = vunpack.c.h.b16 %v1629
  %v1927 = vunpack.c.l.b16 %v1630
  %v1928 = vunpack.c.h.b16 %v1630
  %v1929 = vpack.c.b16 %v1927, %v1925
  %v1930 = vpack.c.b16 %v1928, %v1926
  %vm1932 = vcmask 130048
  %v1934 = vsel %vm1932, %v1930, 0
  %1936 = vmatprep.subr.bf16.mxu0 %v1888
  %1937 = vmatpush1.bf16.msra.mxu0 %v1887
  %1938 = vmatprep.subr.bf16.mxu0 %v1892
  %1939 = vmatpush1.bf16.msra.mxu0 %v1891
  %1940 = vmatprep.subr.bf16.mxu0 %v1896
  %1941 = vmatpush1.bf16.msra.mxu0 %v1895
  %1942 = vmatprep.subr.bf16.mxu0 %v1900
  %1943 = vmatpush1.bf16.msra.mxu0 %v1899
  %1944 = vmatprep.subr.bf16.mxu0 %v1904
  %1945 = vmatpush1.bf16.msra.mxu0 %v1903
  %1946 = vmatprep.subr.bf16.mxu0 %v1908
  %1947 = vmatpush1.bf16.msra.mxu0 %v1907
  %1948 = vmatprep.subr.bf16.mxu0 %v1912
  %1949 = vmatpush1.bf16.msra.mxu0 %v1911
  %1950 = vmatprep.subr.bf16.mxu0 %v1916
  %1951 = vmatpush1.bf16.msra.mxu0 %v1915
  %1952 = vmatprep.subr.bf16.mxu0 %v1920
  %1953 = vmatpush1.bf16.msra.mxu0 %v1919
  %1954 = vmatprep.subr.bf16.mxu0 0
  %1955 = vmatpush1.bf16.msra.mxu0 0
  %1956 = vmatprep.subr.bf16.mxu0 0
  %1957 = vmatpush1.bf16.msra.mxu0 0
  %1958 = vmatprep.subr.bf16.mxu0 0
  %1959 = vmatpush1.bf16.msra.mxu0 0
  %1960 = vmatprep.subr.bf16.mxu0 0
  %1961 = vmatpush1.bf16.msra.mxu0 0
  %1962 = vmatprep.subr.bf16.mxu0 0
  %1963 = vmatpush1.bf16.msra.mxu0 0
  %1964 = vmatprep.subr.bf16.mxu0 0
  %1965 = vmatpush1.bf16.msra.mxu0 0
  %1966 = vmatprep.subr.bf16.mxu0 0
  %1967 = vmatpush1.bf16.msra.mxu0 0
  %1968 = vmatprep.mubr.bf16.mxu0 %v1934
  %1969 = vmatmul.mubr.bf16.gmra.mrb[0].mxu0 %v1929
  %v1970 = vpop.f32.mrb[0].mxu0
  %v1971 = vadd.f32 %v215, %v1970
  %v1972 = vpop.f32.mrb[0].mxu0
  %v1973 = vadd.f32 %v216, %v1972
  %v1974 = vpop.f32.mrb[0].mxu0
  %v1975 = vadd.f32 %v219, %v1974
  %v1976 = vpop.f32.mrb[0].mxu0
  %v1977 = vadd.f32 %v220, %v1976
  %1978 = vdwg.mxu0
  %1979 = vmatprep.subr.bf16.mxu0 %v1890
  %1980 = vmatpush1.bf16.msra.mxu0 %v1889
  %1981 = vmatprep.subr.bf16.mxu0 %v1894
  %1982 = vmatpush1.bf16.msra.mxu0 %v1893
  %1983 = vmatprep.subr.bf16.mxu0 %v1898
  %1984 = vmatpush1.bf16.msra.mxu0 %v1897
  %1985 = vmatprep.subr.bf16.mxu0 %v1902
  %1986 = vmatpush1.bf16.msra.mxu0 %v1901
  %1987 = vmatprep.subr.bf16.mxu0 %v1906
  %1988 = vmatpush1.bf16.msra.mxu0 %v1905
  %1989 = vmatprep.subr.bf16.mxu0 %v1910
  %1990 = vmatpush1.bf16.msra.mxu0 %v1909
  %1991 = vmatprep.subr.bf16.mxu0 %v1914
  %1992 = vmatpush1.bf16.msra.mxu0 %v1913
  %1993 = vmatprep.subr.bf16.mxu0 %v1918
  %1994 = vmatpush1.bf16.msra.mxu0 %v1917
  %1995 = vmatprep.subr.bf16.mxu0 %v1922
  %1996 = vmatpush1.bf16.msra.mxu0 %v1921
  %1997 = vmatprep.subr.bf16.mxu0 0
  %1998 = vmatpush1.bf16.msra.mxu0 0
  %1999 = vmatprep.subr.bf16.mxu0 0
  %2000 = vmatpush1.bf16.msra.mxu0 0
  %2001 = vmatprep.subr.bf16.mxu0 0
  %2002 = vmatpush1.bf16.msra.mxu0 0
  %2003 = vmatprep.subr.bf16.mxu0 0
  %2004 = vmatpush1.bf16.msra.mxu0 0
  %2005 = vmatprep.subr.bf16.mxu0 0
  %2006 = vmatpush1.bf16.msra.mxu0 0
  %2007 = vmatprep.subr.bf16.mxu0 0
  %2008 = vmatpush1.bf16.msra.mxu0 0
  %2009 = vmatprep.subr.bf16.mxu0 0
  %2010 = vmatpush1.bf16.msra.mxu0 0
  %2011 = vmatprep.mubr.bf16.mxu0 %v1934
  %2012 = vmatmul.mubr.bf16.gmra.mrb[0].mxu0 %v1929
  %v2013 = vpop.f32.mrb[0].mxu0
  %v2014 = vadd.f32 %v217, %v2013
  %v2015 = vpop.f32.mrb[0].mxu0
  %v2016 = vadd.f32 %v218, %v2015
  %v2017 = vpop.f32.mrb[0].mxu0
  %v2018 = vadd.f32 %v221, %v2017
  %v2019 = vpop.f32.mrb[0].mxu0
  %v2020 = vadd.f32 %v222, %v2019
  %2021 = vdwg.mxu0
  %v2022 = vxor.u32 %v1971, 2147483648
  %v2023 = vxor.u32 %v1973, 2147483648
  %v2024 = vxor.u32 %v2014, 2147483648
  %v2025 = vxor.u32 %v2016, 2147483648
  %v2026 = vxor.u32 %v1975, 2147483648
  %v2027 = vxor.u32 %v1977, 2147483648
  %v2028 = vxor.u32 %v2018, 2147483648
  %v2029 = vxor.u32 %v2020, 2147483648
  %v2030 = vmul.f32 %v2022, 1.442695
  %v2031 = vpow.pop %v2030
  %v2032 = vmul.f32 %v2023, 1.442695
  %v2033 = vpow.pop %v2032
  %v2034 = vmul.f32 %v2024, 1.442695
  %v2035 = vpow.pop %v2034
  %v2036 = vmul.f32 %v2025, 1.442695
  %v2037 = vpow.pop %v2036
  %v2038 = vmul.f32 %v2026, 1.442695
  %v2039 = vpow.pop %v2038
  %v2040 = vmul.f32 %v2027, 1.442695
  %v2041 = vpow.pop %v2040
  %v2042 = vmul.f32 %v2028, 1.442695
  %v2043 = vpow.pop %v2042
  %v2044 = vmul.f32 %v2029, 1.442695
  %v2045 = vpow.pop %v2044
  %v2046 = vadd.f32 %v2031, 1.0
  %v2047 = vadd.f32 %v2033, 1.0
  %v2048 = vadd.f32 %v2035, 1.0
  %v2049 = vadd.f32 %v2037, 1.0
  %v2050 = vadd.f32 %v2039, 1.0
  %v2051 = vadd.f32 %v2041, 1.0
  %v2052 = vadd.f32 %v2043, 1.0
  %v2053 = vadd.f32 %v2045, 1.0
  %v2054 = vrcp.pop %v2046
  %v2055 = vmul.f32 1.0, %v2054
  %v2056 = vrcp.pop %v2047
  %v2057 = vmul.f32 1.0, %v2056
  %v2058 = vrcp.pop %v2048
  %v2059 = vmul.f32 1.0, %v2058
  %v2060 = vrcp.pop %v2049
  %v2061 = vmul.f32 1.0, %v2060
  %v2062 = vrcp.pop %v2050
  %v2063 = vmul.f32 1.0, %v2062
  %v2064 = vrcp.pop %v2051
  %v2065 = vmul.f32 1.0, %v2064
  %v2066 = vrcp.pop %v2052
  %v2067 = vmul.f32 1.0, %v2066
  %v2068 = vrcp.pop %v2053
  %v2069 = vmul.f32 1.0, %v2068
  %s2070 = scalar_lea.vmem %s12, 16
  %v2071 = vld [vmem:[%s2070] sm:$0xff]
  %v2072 = vld [vmem:[%s2070 + $0x8] sm:$0xff]
  %2073 = vrot.lane.b32.xlu0 %v215, 17
  %v2074 = vpop.permute.xlu0 %2073
  %2075 = vrot.lane.b32.xlu0 %v219, 17
  %v2076 = vpop.permute.xlu0 %2075
  %2077 = vrot.lane.b32.xlu0 %v216, 17
  %v2078 = vpop.permute.xlu0 %2077
  %2079 = vrot.lane.b32.xlu0 %v220, 17
  %v2080 = vpop.permute.xlu0 %2079
  %2081 = vrot.lane.b32.xlu0 %v217, 17
  %v2082 = vpop.permute.xlu0 %2081
  %2083 = vrot.lane.b32.xlu0 %v221, 17
  %v2084 = vpop.permute.xlu0 %2083
  %2085 = vrot.lane.b32.xlu0 %v218, 17
  %v2086 = vpop.permute.xlu0 %2085
  %2087 = vrot.lane.b32.xlu0 %v222, 17
  %v2088 = vpop.permute.xlu0 %2087
  %v2089 = vsel %vm234, %v2082, %v2086
  %v2090 = vsel %vm234, %v2084, %v2088
  %v2091 = vsel %vm234, %v2078, %v2082
  %v2092 = vsel %vm234, %v2080, %v2084
  %v2093 = vsel %vm234, %v2074, %v2078
  %v2094 = vsel %vm234, %v2076, %v2080
  %v2095 = vsel %vm234, %v2086, %v2074
  %v2096 = vsel %vm234, %v2088, %v2076
  %v2097 = vmul.f32 %v2095, %v243
  %v2098 = vmul.f32 %v2093, %v247
  %v2099 = vmul.f32 %v2091, %v251
  %v2100 = vmul.f32 %v2089, %v255
  %v2101 = vmul.f32 %v2096, %v243
  %v2102 = vmul.f32 %v2094, %v247
  %v2103 = vmul.f32 %v2092, %v251
  %v2104 = vmul.f32 %v2090, %v255
  %2105 = vrot.lane.b32.xlu0 %v215, 16
  %v2106 = vpop.permute.xlu0 %2105
  %2107 = vrot.lane.b32.xlu0 %v219, 16
  %v2108 = vpop.permute.xlu0 %2107
  %2109 = vrot.lane.b32.xlu0 %v216, 16
  %v2110 = vpop.permute.xlu0 %2109
  %2111 = vrot.lane.b32.xlu0 %v220, 16
  %v2112 = vpop.permute.xlu0 %2111
  %2113 = vrot.lane.b32.xlu0 %v217, 16
  %v2114 = vpop.permute.xlu0 %2113
  %2115 = vrot.lane.b32.xlu0 %v221, 16
  %v2116 = vpop.permute.xlu0 %2115
  %2117 = vrot.lane.b32.xlu0 %v218, 16
  %v2118 = vpop.permute.xlu0 %2117
  %2119 = vrot.lane.b32.xlu0 %v222, 16
  %v2120 = vpop.permute.xlu0 %2119
  %v2121 = vsel %vm272, %v2114, %v2118
  %v2122 = vsel %vm272, %v2116, %v2120
  %v2123 = vsel %vm272, %v2110, %v2114
  %v2124 = vsel %vm272, %v2112, %v2116
  %v2125 = vsel %vm272, %v2106, %v2110
  %v2126 = vsel %vm272, %v2108, %v2112
  %v2127 = vsel %vm272, %v2118, %v2106
  %v2128 = vsel %vm272, %v2120, %v2108
  %v2129 = vmul.f32 %v2127, %v281
  %v2130 = vmul.f32 %v2125, %v285
  %v2131 = vmul.f32 %v2123, %v289
  %v2132 = vmul.f32 %v2121, %v293
  %v2133 = vmul.f32 %v2128, %v281
  %v2134 = vmul.f32 %v2126, %v285
  %v2135 = vmul.f32 %v2124, %v289
  %v2136 = vmul.f32 %v2122, %v293
  %2137 = vrot.lane.b32.xlu0 %v215, 15
  %v2138 = vpop.permute.xlu0 %2137
  %2139 = vrot.lane.b32.xlu0 %v219, 15
  %v2140 = vpop.permute.xlu0 %2139
  %2141 = vrot.lane.b32.xlu0 %v216, 15
  %v2142 = vpop.permute.xlu0 %2141
  %2143 = vrot.lane.b32.xlu0 %v220, 15
  %v2144 = vpop.permute.xlu0 %2143
  %2145 = vrot.lane.b32.xlu0 %v217, 15
  %v2146 = vpop.permute.xlu0 %2145
  %2147 = vrot.lane.b32.xlu0 %v221, 15
  %v2148 = vpop.permute.xlu0 %2147
  %2149 = vrot.lane.b32.xlu0 %v218, 15
  %v2150 = vpop.permute.xlu0 %2149
  %2151 = vrot.lane.b32.xlu0 %v222, 15
  %v2152 = vpop.permute.xlu0 %2151
  %v2153 = vsel %vm310, %v2146, %v2150
  %v2154 = vsel %vm310, %v2148, %v2152
  %v2155 = vsel %vm310, %v2142, %v2146
  %v2156 = vsel %vm310, %v2144, %v2148
  %v2157 = vsel %vm310, %v2138, %v2142
  %v2158 = vsel %vm310, %v2140, %v2144
  %v2159 = vsel %vm310, %v2150, %v2138
  %v2160 = vsel %vm310, %v2152, %v2140
  %v2161 = vmul.f32 %v2159, %v319
  %v2162 = vmul.f32 %v2157, %v323
  %v2163 = vmul.f32 %v2155, %v327
  %v2164 = vmul.f32 %v2153, %v331
  %v2165 = vmul.f32 %v2160, %v319
  %v2166 = vmul.f32 %v2158, %v323
  %v2167 = vmul.f32 %v2156, %v327
  %v2168 = vmul.f32 %v2154, %v331
  %2169 = vrot.lane.b32.xlu0 %v215, 1
  %v2170 = vpop.permute.xlu0 %2169
  %2171 = vrot.lane.b32.xlu0 %v219, 1
  %v2172 = vpop.permute.xlu0 %2171
  %2173 = vrot.lane.b32.xlu0 %v216, 1
  %v2174 = vpop.permute.xlu0 %2173
  %2175 = vrot.lane.b32.xlu0 %v220, 1
  %v2176 = vpop.permute.xlu0 %2175
  %2177 = vrot.lane.b32.xlu0 %v217, 1
  %v2178 = vpop.permute.xlu0 %2177
  %2179 = vrot.lane.b32.xlu0 %v221, 1
  %v2180 = vpop.permute.xlu0 %2179
  %2181 = vrot.lane.b32.xlu0 %v218, 1
  %v2182 = vpop.permute.xlu0 %2181
  %2183 = vrot.lane.b32.xlu0 %v222, 1
  %v2184 = vpop.permute.xlu0 %2183
  %v2185 = vsel %vm348, %v2178, %v2182
  %v2186 = vsel %vm348, %v2180, %v2184
  %v2187 = vsel %vm348, %v2174, %v2178
  %v2188 = vsel %vm348, %v2176, %v2180
  %v2189 = vsel %vm348, %v2170, %v2174
  %v2190 = vsel %vm348, %v2172, %v2176
  %v2191 = vsel %vm348, %v2182, %v2170
  %v2192 = vsel %vm348, %v2184, %v2172
  %v2193 = vmul.f32 %v2191, %v357
  %v2194 = vmul.f32 %v2189, %v361
  %v2195 = vmul.f32 %v2187, %v365
  %v2196 = vmul.f32 %v2185, %v369
  %v2197 = vmul.f32 %v2192, %v357
  %v2198 = vmul.f32 %v2190, %v361
  %v2199 = vmul.f32 %v2188, %v365
  %v2200 = vmul.f32 %v2186, %v369
  %2201 = vrot.lane.b32.xlu0 %v215, 127
  %v2202 = vpop.permute.xlu0 %2201
  %2203 = vrot.lane.b32.xlu0 %v219, 127
  %v2204 = vpop.permute.xlu0 %2203
  %2205 = vrot.lane.b32.xlu0 %v216, 127
  %v2206 = vpop.permute.xlu0 %2205
  %2207 = vrot.lane.b32.xlu0 %v220, 127
  %v2208 = vpop.permute.xlu0 %2207
  %2209 = vrot.lane.b32.xlu0 %v217, 127
  %v2210 = vpop.permute.xlu0 %2209
  %2211 = vrot.lane.b32.xlu0 %v221, 127
  %v2212 = vpop.permute.xlu0 %2211
  %2213 = vrot.lane.b32.xlu0 %v218, 127
  %v2214 = vpop.permute.xlu0 %2213
  %2215 = vrot.lane.b32.xlu0 %v222, 127
  %v2216 = vpop.permute.xlu0 %2215
  %v2217 = vsel %vm386, %v2210, %v2214
  %v2218 = vsel %vm386, %v2212, %v2216
  %v2219 = vsel %vm386, %v2206, %v2210
  %v2220 = vsel %vm386, %v2208, %v2212
  %v2221 = vsel %vm386, %v2202, %v2206
  %v2222 = vsel %vm386, %v2204, %v2208
  %v2223 = vsel %vm386, %v2214, %v2202
  %v2224 = vsel %vm386, %v2216, %v2204
  %v2225 = vmul.f32 %v2221, %v395
  %v2226 = vmul.f32 %v2219, %v399
  %v2227 = vmul.f32 %v2217, %v403
  %v2228 = vmul.f32 %v2223, %v407
  %v2229 = vmul.f32 %v2222, %v395
  %v2230 = vmul.f32 %v2220, %v399
  %v2231 = vmul.f32 %v2218, %v403
  %v2232 = vmul.f32 %v2224, %v407
  %2233 = vrot.lane.b32.xlu0 %v215, 113
  %v2234 = vpop.permute.xlu0 %2233
  %2235 = vrot.lane.b32.xlu0 %v219, 113
  %v2236 = vpop.permute.xlu0 %2235
  %2237 = vrot.lane.b32.xlu0 %v216, 113
  %v2238 = vpop.permute.xlu0 %2237
  %2239 = vrot.lane.b32.xlu0 %v220, 113
  %v2240 = vpop.permute.xlu0 %2239
  %2241 = vrot.lane.b32.xlu0 %v217, 113
  %v2242 = vpop.permute.xlu0 %2241
  %2243 = vrot.lane.b32.xlu0 %v221, 113
  %v2244 = vpop.permute.xlu0 %2243
  %2245 = vrot.lane.b32.xlu0 %v218, 113
  %v2246 = vpop.permute.xlu0 %2245
  %2247 = vrot.lane.b32.xlu0 %v222, 113
  %v2248 = vpop.permute.xlu0 %2247
  %v2249 = vsel %vm424, %v2242, %v2246
  %v2250 = vsel %vm424, %v2244, %v2248
  %v2251 = vsel %vm424, %v2238, %v2242
  %v2252 = vsel %vm424, %v2240, %v2244
  %v2253 = vsel %vm424, %v2234, %v2238
  %v2254 = vsel %vm424, %v2236, %v2240
  %v2255 = vsel %vm424, %v2246, %v2234
  %v2256 = vsel %vm424, %v2248, %v2236
  %v2257 = vmul.f32 %v2253, %v433
  %v2258 = vmul.f32 %v2251, %v437
  %v2259 = vmul.f32 %v2249, %v441
  %v2260 = vmul.f32 %v2255, %v445
  %v2261 = vmul.f32 %v2254, %v433
  %v2262 = vmul.f32 %v2252, %v437
  %v2263 = vmul.f32 %v2250, %v441
  %v2264 = vmul.f32 %v2256, %v445
  %2265 = vrot.lane.b32.xlu0 %v215, 112
  %v2266 = vpop.permute.xlu0 %2265
  %2267 = vrot.lane.b32.xlu0 %v219, 112
  %v2268 = vpop.permute.xlu0 %2267
  %2269 = vrot.lane.b32.xlu0 %v216, 112
  %v2270 = vpop.permute.xlu0 %2269
  %2271 = vrot.lane.b32.xlu0 %v220, 112
  %v2272 = vpop.permute.xlu0 %2271
  %2273 = vrot.lane.b32.xlu0 %v217, 112
  %v2274 = vpop.permute.xlu0 %2273
  %2275 = vrot.lane.b32.xlu0 %v221, 112
  %v2276 = vpop.permute.xlu0 %2275
  %2277 = vrot.lane.b32.xlu0 %v218, 112
  %v2278 = vpop.permute.xlu0 %2277
  %2279 = vrot.lane.b32.xlu0 %v222, 112
  %v2280 = vpop.permute.xlu0 %2279
  %v2281 = vsel %vm462, %v2274, %v2278
  %v2282 = vsel %vm462, %v2276, %v2280
  %v2283 = vsel %vm462, %v2270, %v2274
  %v2284 = vsel %vm462, %v2272, %v2276
  %v2285 = vsel %vm462, %v2266, %v2270
  %v2286 = vsel %vm462, %v2268, %v2272
  %v2287 = vsel %vm462, %v2278, %v2266
  %v2288 = vsel %vm462, %v2280, %v2268
  %v2289 = vmul.f32 %v2285, %v471
  %v2290 = vmul.f32 %v2283, %v475
  %v2291 = vmul.f32 %v2281, %v479
  %v2292 = vmul.f32 %v2287, %v483
  %v2293 = vmul.f32 %v2286, %v471
  %v2294 = vmul.f32 %v2284, %v475
  %v2295 = vmul.f32 %v2282, %v479
  %v2296 = vmul.f32 %v2288, %v483
  %2297 = vrot.lane.b32.xlu0 %v215, 111
  %v2298 = vpop.permute.xlu0 %2297
  %2299 = vrot.lane.b32.xlu0 %v219, 111
  %v2300 = vpop.permute.xlu0 %2299
  %2301 = vrot.lane.b32.xlu0 %v216, 111
  %v2302 = vpop.permute.xlu0 %2301
  %2303 = vrot.lane.b32.xlu0 %v220, 111
  %v2304 = vpop.permute.xlu0 %2303
  %2305 = vrot.lane.b32.xlu0 %v217, 111
  %v2306 = vpop.permute.xlu0 %2305
  %2307 = vrot.lane.b32.xlu0 %v221, 111
  %v2308 = vpop.permute.xlu0 %2307
  %2309 = vrot.lane.b32.xlu0 %v218, 111
  %v2310 = vpop.permute.xlu0 %2309
  %2311 = vrot.lane.b32.xlu0 %v222, 111
  %v2312 = vpop.permute.xlu0 %2311
  %v2313 = vsel %vm500, %v2306, %v2310
  %v2314 = vsel %vm500, %v2308, %v2312
  %v2315 = vsel %vm500, %v2302, %v2306
  %v2316 = vsel %vm500, %v2304, %v2308
  %v2317 = vsel %vm500, %v2298, %v2302
  %v2318 = vsel %vm500, %v2300, %v2304
  %v2319 = vsel %vm500, %v2310, %v2298
  %v2320 = vsel %vm500, %v2312, %v2300
  %v2321 = vmul.f32 %v2317, %v509
  %v2322 = vmul.f32 %v2315, %v513
  %v2323 = vmul.f32 %v2313, %v517
  %v2324 = vmul.f32 %v2319, %v521
  %v2325 = vmul.f32 %v2318, %v509
  %v2326 = vmul.f32 %v2316, %v513
  %v2327 = vmul.f32 %v2314, %v517
  %v2328 = vmul.f32 %v2320, %v521
  %v2329 = vpack.c.bf16 %v2101, %v2097
  %v2330 = vpack.c.bf16 %v2102, %v2098
  %v2331 = vpack.c.bf16 %v2103, %v2099
  %v2332 = vpack.c.bf16 %v2104, %v2100
  %v2333 = vpack.c.bf16 %v2133, %v2129
  %v2334 = vpack.c.bf16 %v2134, %v2130
  %v2335 = vpack.c.bf16 %v2135, %v2131
  %v2336 = vpack.c.bf16 %v2136, %v2132
  %v2337 = vpack.c.bf16 %v2165, %v2161
  %v2338 = vpack.c.bf16 %v2166, %v2162
  %v2339 = vpack.c.bf16 %v2167, %v2163
  %v2340 = vpack.c.bf16 %v2168, %v2164
  %v2341 = vpack.c.bf16 %v2197, %v2193
  %v2342 = vpack.c.bf16 %v2198, %v2194
  %v2343 = vpack.c.bf16 %v2199, %v2195
  %v2344 = vpack.c.bf16 %v2200, %v2196
  %v2345 = vpack.c.bf16 %v2229, %v2225
  %v2346 = vpack.c.bf16 %v2230, %v2226
  %v2347 = vpack.c.bf16 %v2231, %v2227
  %v2348 = vpack.c.bf16 %v2232, %v2228
  %v2349 = vpack.c.bf16 %v2261, %v2257
  %v2350 = vpack.c.bf16 %v2262, %v2258
  %v2351 = vpack.c.bf16 %v2263, %v2259
  %v2352 = vpack.c.bf16 %v2264, %v2260
  %v2353 = vpack.c.bf16 %v2293, %v2289
  %v2354 = vpack.c.bf16 %v2294, %v2290
  %v2355 = vpack.c.bf16 %v2295, %v2291
  %v2356 = vpack.c.bf16 %v2296, %v2292
  %v2357 = vpack.c.bf16 %v2325, %v2321
  %v2358 = vpack.c.bf16 %v2326, %v2322
  %v2359 = vpack.c.bf16 %v2327, %v2323
  %v2360 = vpack.c.bf16 %v2328, %v2324
  %v2363 = vunpack.c.l.b16 %v2071
  %v2364 = vunpack.c.h.b16 %v2071
  %v2365 = vunpack.c.l.b16 %v2072
  %v2366 = vunpack.c.h.b16 %v2072
  %v2367 = vpack.c.b16 %v2365, %v2363
  %v2368 = vpack.c.b16 %v2366, %v2364
  %v2371 = vsel %vm1932, %v2368, 0
  %2373 = vmatprep.subr.bf16.mxu0 %v2330
  %2374 = vmatpush1.bf16.msra.mxu0 %v2329
  %2375 = vmatprep.subr.bf16.mxu0 %v2334
  %2376 = vmatpush1.bf16.msra.mxu0 %v2333
  %2377 = vmatprep.subr.bf16.mxu0 %v2338
  %2378 = vmatpush1.bf16.msra.mxu0 %v2337
  %2379 = vmatprep.subr.bf16.mxu0 %v2342
  %2380 = vmatpush1.bf16.msra.mxu0 %v2341
  %2381 = vmatprep.subr.bf16.mxu0 %v1134
  %2382 = vmatpush1.bf16.msra.mxu0 %v1133
  %2383 = vmatprep.subr.bf16.mxu0 %v2346
  %2384 = vmatpush1.bf16.msra.mxu0 %v2345
  %2385 = vmatprep.subr.bf16.mxu0 %v2350
  %2386 = vmatpush1.bf16.msra.mxu0 %v2349
  %2387 = vmatprep.subr.bf16.mxu0 %v2354
  %2388 = vmatpush1.bf16.msra.mxu0 %v2353
  %2389 = vmatprep.subr.bf16.mxu0 %v2358
  %2390 = vmatpush1.bf16.msra.mxu0 %v2357
  %2391 = vmatprep.subr.bf16.mxu0 0
  %2392 = vmatpush1.bf16.msra.mxu0 0
  %2393 = vmatprep.subr.bf16.mxu0 0
  %2394 = vmatpush1.bf16.msra.mxu0 0
  %2395 = vmatprep.subr.bf16.mxu0 0
  %2396 = vmatpush1.bf16.msra.mxu0 0
  %2397 = vmatprep.subr.bf16.mxu0 0
  %2398 = vmatpush1.bf16.msra.mxu0 0
  %2399 = vmatprep.subr.bf16.mxu0 0
  %2400 = vmatpush1.bf16.msra.mxu0 0
  %2401 = vmatprep.subr.bf16.mxu0 0
  %2402 = vmatpush1.bf16.msra.mxu0 0
  %2403 = vmatprep.subr.bf16.mxu0 0
  %2404 = vmatpush1.bf16.msra.mxu0 0
  %2405 = vmatprep.mubr.bf16.mxu0 %v2371
  %2406 = vmatmul.mubr.bf16.gmra.mrb[0].mxu0 %v2367
  %v2407 = vpop.f32.mrb[0].mxu0
  %v2408 = vadd.f32 0.0, %v2407
  %v2409 = vpop.f32.mrb[0].mxu0
  %v2410 = vadd.f32 0.0, %v2409
  %v2411 = vpop.f32.mrb[0].mxu0
  %v2412 = vadd.f32 0.0, %v2411
  %v2413 = vpop.f32.mrb[0].mxu0
  %v2414 = vadd.f32 0.0, %v2413
  %2415 = vdwg.mxu0
  %2416 = vmatprep.subr.bf16.mxu0 %v2332
  %2417 = vmatpush1.bf16.msra.mxu0 %v2331
  %2418 = vmatprep.subr.bf16.mxu0 %v2336
  %2419 = vmatpush1.bf16.msra.mxu0 %v2335
  %2420 = vmatprep.subr.bf16.mxu0 %v2340
  %2421 = vmatpush1.bf16.msra.mxu0 %v2339
  %2422 = vmatprep.subr.bf16.mxu0 %v2344
  %2423 = vmatpush1.bf16.msra.mxu0 %v2343
  %2424 = vmatprep.subr.bf16.mxu0 %v1136
  %2425 = vmatpush1.bf16.msra.mxu0 %v1135
  %2426 = vmatprep.subr.bf16.mxu0 %v2348
  %2427 = vmatpush1.bf16.msra.mxu0 %v2347
  %2428 = vmatprep.subr.bf16.mxu0 %v2352
  %2429 = vmatpush1.bf16.msra.mxu0 %v2351
  %2430 = vmatprep.subr.bf16.mxu0 %v2356
  %2431 = vmatpush1.bf16.msra.mxu0 %v2355
  %2432 = vmatprep.subr.bf16.mxu0 %v2360
  %2433 = vmatpush1.bf16.msra.mxu0 %v2359
  %2434 = vmatprep.subr.bf16.mxu0 0
  %2435 = vmatpush1.bf16.msra.mxu0 0
  %2436 = vmatprep.subr.bf16.mxu0 0
  %2437 = vmatpush1.bf16.msra.mxu0 0
  %2438 = vmatprep.subr.bf16.mxu0 0
  %2439 = vmatpush1.bf16.msra.mxu0 0
  %2440 = vmatprep.subr.bf16.mxu0 0
  %2441 = vmatpush1.bf16.msra.mxu0 0
  %2442 = vmatprep.subr.bf16.mxu0 0
  %2443 = vmatpush1.bf16.msra.mxu0 0
  %2444 = vmatprep.subr.bf16.mxu0 0
  %2445 = vmatpush1.bf16.msra.mxu0 0
  %2446 = vmatprep.subr.bf16.mxu0 0
  %2447 = vmatpush1.bf16.msra.mxu0 0
  %2448 = vmatprep.mubr.bf16.mxu0 %v2371
  %2449 = vmatmul.mubr.bf16.gmra.mrb[0].mxu0 %v2367
  %v2450 = vpop.f32.mrb[0].mxu0
  %v2451 = vadd.f32 0.0, %v2450
  %v2452 = vpop.f32.mrb[0].mxu0
  %v2453 = vadd.f32 0.0, %v2452
  %v2454 = vpop.f32.mrb[0].mxu0
  %v2455 = vadd.f32 0.0, %v2454
  %v2456 = vpop.f32.mrb[0].mxu0
  %v2457 = vadd.f32 0.0, %v2456
  %2458 = vdwg.mxu0
  %v2459 = vmul.f32 %v2408, %v2055
  %v2460 = vmul.f32 %v2410, %v2057
  %v2461 = vmul.f32 %v2451, %v2059
  %v2462 = vmul.f32 %v2453, %v2061
  %v2463 = vmul.f32 %v2412, %v2063
  %v2464 = vmul.f32 %v2414, %v2065
  %v2465 = vmul.f32 %v2455, %v2067
  %v2466 = vmul.f32 %v2457, %v2069
  %s2467 = scalar_lea.vmem %s12, 32
  %v2468 = vld [vmem:[%s2467] sm:$0xff]
  %v2469 = vld [vmem:[%s2467 + $0x8] sm:$0xff]
  %2470 = vrot.lane.b32.xlu0 %v2459, 17
  %v2471 = vpop.permute.xlu0 %2470
  %2472 = vrot.lane.b32.xlu0 %v2463, 17
  %v2473 = vpop.permute.xlu0 %2472
  %2474 = vrot.lane.b32.xlu0 %v2460, 17
  %v2475 = vpop.permute.xlu0 %2474
  %2476 = vrot.lane.b32.xlu0 %v2464, 17
  %v2477 = vpop.permute.xlu0 %2476
  %2478 = vrot.lane.b32.xlu0 %v2461, 17
  %v2479 = vpop.permute.xlu0 %2478
  %2480 = vrot.lane.b32.xlu0 %v2465, 17
  %v2481 = vpop.permute.xlu0 %2480
  %2482 = vrot.lane.b32.xlu0 %v2462, 17
  %v2483 = vpop.permute.xlu0 %2482
  %2484 = vrot.lane.b32.xlu0 %v2466, 17
  %v2485 = vpop.permute.xlu0 %2484
  %v2486 = vsel %vm234, %v2479, %v2483
  %v2487 = vsel %vm234, %v2481, %v2485
  %v2488 = vsel %vm234, %v2475, %v2479
  %v2489 = vsel %vm234, %v2477, %v2481
  %v2490 = vsel %vm234, %v2471, %v2475
  %v2491 = vsel %vm234, %v2473, %v2477
  %v2492 = vsel %vm234, %v2483, %v2471
  %v2493 = vsel %vm234, %v2485, %v2473
  %v2494 = vmul.f32 %v2492, %v243
  %v2495 = vmul.f32 %v2490, %v247
  %v2496 = vmul.f32 %v2488, %v251
  %v2497 = vmul.f32 %v2486, %v255
  %v2498 = vmul.f32 %v2493, %v243
  %v2499 = vmul.f32 %v2491, %v247
  %v2500 = vmul.f32 %v2489, %v251
  %v2501 = vmul.f32 %v2487, %v255
  %2502 = vrot.lane.b32.xlu0 %v2459, 16
  %v2503 = vpop.permute.xlu0 %2502
  %2504 = vrot.lane.b32.xlu0 %v2463, 16
  %v2505 = vpop.permute.xlu0 %2504
  %2506 = vrot.lane.b32.xlu0 %v2460, 16
  %v2507 = vpop.permute.xlu0 %2506
  %2508 = vrot.lane.b32.xlu0 %v2464, 16
  %v2509 = vpop.permute.xlu0 %2508
  %2510 = vrot.lane.b32.xlu0 %v2461, 16
  %v2511 = vpop.permute.xlu0 %2510
  %2512 = vrot.lane.b32.xlu0 %v2465, 16
  %v2513 = vpop.permute.xlu0 %2512
  %2514 = vrot.lane.b32.xlu0 %v2462, 16
  %v2515 = vpop.permute.xlu0 %2514
  %2516 = vrot.lane.b32.xlu0 %v2466, 16
  %v2517 = vpop.permute.xlu0 %2516
  %v2518 = vsel %vm272, %v2511, %v2515
  %v2519 = vsel %vm272, %v2513, %v2517
  %v2520 = vsel %vm272, %v2507, %v2511
  %v2521 = vsel %vm272, %v2509, %v2513
  %v2522 = vsel %vm272, %v2503, %v2507
  %v2523 = vsel %vm272, %v2505, %v2509
  %v2524 = vsel %vm272, %v2515, %v2503
  %v2525 = vsel %vm272, %v2517, %v2505
  %v2526 = vmul.f32 %v2524, %v281
  %v2527 = vmul.f32 %v2522, %v285
  %v2528 = vmul.f32 %v2520, %v289
  %v2529 = vmul.f32 %v2518, %v293
  %v2530 = vmul.f32 %v2525, %v281
  %v2531 = vmul.f32 %v2523, %v285
  %v2532 = vmul.f32 %v2521, %v289
  %v2533 = vmul.f32 %v2519, %v293
  %2534 = vrot.lane.b32.xlu0 %v2459, 15
  %v2535 = vpop.permute.xlu0 %2534
  %2536 = vrot.lane.b32.xlu0 %v2463, 15
  %v2537 = vpop.permute.xlu0 %2536
  %2538 = vrot.lane.b32.xlu0 %v2460, 15
  %v2539 = vpop.permute.xlu0 %2538
  %2540 = vrot.lane.b32.xlu0 %v2464, 15
  %v2541 = vpop.permute.xlu0 %2540
  %2542 = vrot.lane.b32.xlu0 %v2461, 15
  %v2543 = vpop.permute.xlu0 %2542
  %2544 = vrot.lane.b32.xlu0 %v2465, 15
  %v2545 = vpop.permute.xlu0 %2544
  %2546 = vrot.lane.b32.xlu0 %v2462, 15
  %v2547 = vpop.permute.xlu0 %2546
  %2548 = vrot.lane.b32.xlu0 %v2466, 15
  %v2549 = vpop.permute.xlu0 %2548
  %v2550 = vsel %vm310, %v2543, %v2547
  %v2551 = vsel %vm310, %v2545, %v2549
  %v2552 = vsel %vm310, %v2539, %v2543
  %v2553 = vsel %vm310, %v2541, %v2545
  %v2554 = vsel %vm310, %v2535, %v2539
  %v2555 = vsel %vm310, %v2537, %v2541
  %v2556 = vsel %vm310, %v2547, %v2535
  %v2557 = vsel %vm310, %v2549, %v2537
  %v2558 = vmul.f32 %v2556, %v319
  %v2559 = vmul.f32 %v2554, %v323
  %v2560 = vmul.f32 %v2552, %v327
  %v2561 = vmul.f32 %v2550, %v331
  %v2562 = vmul.f32 %v2557, %v319
  %v2563 = vmul.f32 %v2555, %v323
  %v2564 = vmul.f32 %v2553, %v327
  %v2565 = vmul.f32 %v2551, %v331
  %2566 = vrot.lane.b32.xlu0 %v2459, 1
  %v2567 = vpop.permute.xlu0 %2566
  %2568 = vrot.lane.b32.xlu0 %v2463, 1
  %v2569 = vpop.permute.xlu0 %2568
  %2570 = vrot.lane.b32.xlu0 %v2460, 1
  %v2571 = vpop.permute.xlu0 %2570
  %2572 = vrot.lane.b32.xlu0 %v2464, 1
  %v2573 = vpop.permute.xlu0 %2572
  %2574 = vrot.lane.b32.xlu0 %v2461, 1
  %v2575 = vpop.permute.xlu0 %2574
  %2576 = vrot.lane.b32.xlu0 %v2465, 1
  %v2577 = vpop.permute.xlu0 %2576
  %2578 = vrot.lane.b32.xlu0 %v2462, 1
  %v2579 = vpop.permute.xlu0 %2578
  %2580 = vrot.lane.b32.xlu0 %v2466, 1
  %v2581 = vpop.permute.xlu0 %2580
  %v2582 = vsel %vm348, %v2575, %v2579
  %v2583 = vsel %vm348, %v2577, %v2581
  %v2584 = vsel %vm348, %v2571, %v2575
  %v2585 = vsel %vm348, %v2573, %v2577
  %v2586 = vsel %vm348, %v2567, %v2571
  %v2587 = vsel %vm348, %v2569, %v2573
  %v2588 = vsel %vm348, %v2579, %v2567
  %v2589 = vsel %vm348, %v2581, %v2569
  %v2590 = vmul.f32 %v2588, %v357
  %v2591 = vmul.f32 %v2586, %v361
  %v2592 = vmul.f32 %v2584, %v365
  %v2593 = vmul.f32 %v2582, %v369
  %v2594 = vmul.f32 %v2589, %v357
  %v2595 = vmul.f32 %v2587, %v361
  %v2596 = vmul.f32 %v2585, %v365
  %v2597 = vmul.f32 %v2583, %v369
  %2598 = vrot.lane.b32.xlu0 %v2459, 127
  %v2599 = vpop.permute.xlu0 %2598
  %2600 = vrot.lane.b32.xlu0 %v2463, 127
  %v2601 = vpop.permute.xlu0 %2600
  %2602 = vrot.lane.b32.xlu0 %v2460, 127
  %v2603 = vpop.permute.xlu0 %2602
  %2604 = vrot.lane.b32.xlu0 %v2464, 127
  %v2605 = vpop.permute.xlu0 %2604
  %2606 = vrot.lane.b32.xlu0 %v2461, 127
  %v2607 = vpop.permute.xlu0 %2606
  %2608 = vrot.lane.b32.xlu0 %v2465, 127
  %v2609 = vpop.permute.xlu0 %2608
  %2610 = vrot.lane.b32.xlu0 %v2462, 127
  %v2611 = vpop.permute.xlu0 %2610
  %2612 = vrot.lane.b32.xlu0 %v2466, 127
  %v2613 = vpop.permute.xlu0 %2612
  %v2614 = vsel %vm386, %v2607, %v2611
  %v2615 = vsel %vm386, %v2609, %v2613
  %v2616 = vsel %vm386, %v2603, %v2607
  %v2617 = vsel %vm386, %v2605, %v2609
  %v2618 = vsel %vm386, %v2599, %v2603
  %v2619 = vsel %vm386, %v2601, %v2605
  %v2620 = vsel %vm386, %v2611, %v2599
  %v2621 = vsel %vm386, %v2613, %v2601
  %v2622 = vmul.f32 %v2618, %v395
  %v2623 = vmul.f32 %v2616, %v399
  %v2624 = vmul.f32 %v2614, %v403
  %v2625 = vmul.f32 %v2620, %v407
  %v2626 = vmul.f32 %v2619, %v395
  %v2627 = vmul.f32 %v2617, %v399
  %v2628 = vmul.f32 %v2615, %v403
  %v2629 = vmul.f32 %v2621, %v407
  %2630 = vrot.lane.b32.xlu0 %v2459, 113
  %v2631 = vpop.permute.xlu0 %2630
  %2632 = vrot.lane.b32.xlu0 %v2463, 113
  %v2633 = vpop.permute.xlu0 %2632
  %2634 = vrot.lane.b32.xlu0 %v2460, 113
  %v2635 = vpop.permute.xlu0 %2634
  %2636 = vrot.lane.b32.xlu0 %v2464, 113
  %v2637 = vpop.permute.xlu0 %2636
  %2638 = vrot.lane.b32.xlu0 %v2461, 113
  %v2639 = vpop.permute.xlu0 %2638
  %2640 = vrot.lane.b32.xlu0 %v2465, 113
  %v2641 = vpop.permute.xlu0 %2640
  %2642 = vrot.lane.b32.xlu0 %v2462, 113
  %v2643 = vpop.permute.xlu0 %2642
  %2644 = vrot.lane.b32.xlu0 %v2466, 113
  %v2645 = vpop.permute.xlu0 %2644
  %v2646 = vsel %vm424, %v2639, %v2643
  %v2647 = vsel %vm424, %v2641, %v2645
  %v2648 = vsel %vm424, %v2635, %v2639
  %v2649 = vsel %vm424, %v2637, %v2641
  %v2650 = vsel %vm424, %v2631, %v2635
  %v2651 = vsel %vm424, %v2633, %v2637
  %v2652 = vsel %vm424, %v2643, %v2631
  %v2653 = vsel %vm424, %v2645, %v2633
  %v2654 = vmul.f32 %v2650, %v433
  %v2655 = vmul.f32 %v2648, %v437
  %v2656 = vmul.f32 %v2646, %v441
  %v2657 = vmul.f32 %v2652, %v445
  %v2658 = vmul.f32 %v2651, %v433
  %v2659 = vmul.f32 %v2649, %v437
  %v2660 = vmul.f32 %v2647, %v441
  %v2661 = vmul.f32 %v2653, %v445
  %2662 = vrot.lane.b32.xlu0 %v2459, 112
  %v2663 = vpop.permute.xlu0 %2662
  %2664 = vrot.lane.b32.xlu0 %v2463, 112
  %v2665 = vpop.permute.xlu0 %2664
  %2666 = vrot.lane.b32.xlu0 %v2460, 112
  %v2667 = vpop.permute.xlu0 %2666
  %2668 = vrot.lane.b32.xlu0 %v2464, 112
  %v2669 = vpop.permute.xlu0 %2668
  %2670 = vrot.lane.b32.xlu0 %v2461, 112
  %v2671 = vpop.permute.xlu0 %2670
  %2672 = vrot.lane.b32.xlu0 %v2465, 112
  %v2673 = vpop.permute.xlu0 %2672
  %2674 = vrot.lane.b32.xlu0 %v2462, 112
  %v2675 = vpop.permute.xlu0 %2674
  %2676 = vrot.lane.b32.xlu0 %v2466, 112
  %v2677 = vpop.permute.xlu0 %2676
  %v2678 = vsel %vm462, %v2671, %v2675
  %v2679 = vsel %vm462, %v2673, %v2677
  %v2680 = vsel %vm462, %v2667, %v2671
  %v2681 = vsel %vm462, %v2669, %v2673
  %v2682 = vsel %vm462, %v2663, %v2667
  %v2683 = vsel %vm462, %v2665, %v2669
  %v2684 = vsel %vm462, %v2675, %v2663
  %v2685 = vsel %vm462, %v2677, %v2665
  %v2686 = vmul.f32 %v2682, %v471
  %v2687 = vmul.f32 %v2680, %v475
  %v2688 = vmul.f32 %v2678, %v479
  %v2689 = vmul.f32 %v2684, %v483
  %v2690 = vmul.f32 %v2683, %v471
  %v2691 = vmul.f32 %v2681, %v475
  %v2692 = vmul.f32 %v2679, %v479
  %v2693 = vmul.f32 %v2685, %v483
  %2694 = vrot.lane.b32.xlu0 %v2459, 111
  %v2695 = vpop.permute.xlu0 %2694
  %2696 = vrot.lane.b32.xlu0 %v2463, 111
  %v2697 = vpop.permute.xlu0 %2696
  %2698 = vrot.lane.b32.xlu0 %v2460, 111
  %v2699 = vpop.permute.xlu0 %2698
  %2700 = vrot.lane.b32.xlu0 %v2464, 111
  %v2701 = vpop.permute.xlu0 %2700
  %2702 = vrot.lane.b32.xlu0 %v2461, 111
  %v2703 = vpop.permute.xlu0 %2702
  %2704 = vrot.lane.b32.xlu0 %v2465, 111
  %v2705 = vpop.permute.xlu0 %2704
  %2706 = vrot.lane.b32.xlu0 %v2462, 111
  %v2707 = vpop.permute.xlu0 %2706
  %2708 = vrot.lane.b32.xlu0 %v2466, 111
  %v2709 = vpop.permute.xlu0 %2708
  %v2710 = vsel %vm500, %v2703, %v2707
  %v2711 = vsel %vm500, %v2705, %v2709
  %v2712 = vsel %vm500, %v2699, %v2703
  %v2713 = vsel %vm500, %v2701, %v2705
  %v2714 = vsel %vm500, %v2695, %v2699
  %v2715 = vsel %vm500, %v2697, %v2701
  %v2716 = vsel %vm500, %v2707, %v2695
  %v2717 = vsel %vm500, %v2709, %v2697
  %v2718 = vmul.f32 %v2714, %v509
  %v2719 = vmul.f32 %v2712, %v513
  %v2720 = vmul.f32 %v2710, %v517
  %v2721 = vmul.f32 %v2716, %v521
  %v2722 = vmul.f32 %v2715, %v509
  %v2723 = vmul.f32 %v2713, %v513
  %v2724 = vmul.f32 %v2711, %v517
  %v2725 = vmul.f32 %v2717, %v521
  %v2726 = vpack.c.bf16 %v2498, %v2494
  %v2727 = vpack.c.bf16 %v2499, %v2495
  %v2728 = vpack.c.bf16 %v2500, %v2496
  %v2729 = vpack.c.bf16 %v2501, %v2497
  %v2730 = vpack.c.bf16 %v2530, %v2526
  %v2731 = vpack.c.bf16 %v2531, %v2527
  %v2732 = vpack.c.bf16 %v2532, %v2528
  %v2733 = vpack.c.bf16 %v2533, %v2529
  %v2734 = vpack.c.bf16 %v2562, %v2558
  %v2735 = vpack.c.bf16 %v2563, %v2559
  %v2736 = vpack.c.bf16 %v2564, %v2560
  %v2737 = vpack.c.bf16 %v2565, %v2561
  %v2738 = vpack.c.bf16 %v2594, %v2590
  %v2739 = vpack.c.bf16 %v2595, %v2591
  %v2740 = vpack.c.bf16 %v2596, %v2592
  %v2741 = vpack.c.bf16 %v2597, %v2593
  %v2742 = vpack.c.bf16 %v2463, %v2459
  %v2743 = vpack.c.bf16 %v2464, %v2460
  %v2744 = vpack.c.bf16 %v2465, %v2461
  %v2745 = vpack.c.bf16 %v2466, %v2462
  %v2746 = vpack.c.bf16 %v2626, %v2622
  %v2747 = vpack.c.bf16 %v2627, %v2623
  %v2748 = vpack.c.bf16 %v2628, %v2624
  %v2749 = vpack.c.bf16 %v2629, %v2625
  %v2750 = vpack.c.bf16 %v2658, %v2654
  %v2751 = vpack.c.bf16 %v2659, %v2655
  %v2752 = vpack.c.bf16 %v2660, %v2656
  %v2753 = vpack.c.bf16 %v2661, %v2657
  %v2754 = vpack.c.bf16 %v2690, %v2686
  %v2755 = vpack.c.bf16 %v2691, %v2687
  %v2756 = vpack.c.bf16 %v2692, %v2688
  %v2757 = vpack.c.bf16 %v2693, %v2689
  %v2758 = vpack.c.bf16 %v2722, %v2718
  %v2759 = vpack.c.bf16 %v2723, %v2719
  %v2760 = vpack.c.bf16 %v2724, %v2720
  %v2761 = vpack.c.bf16 %v2725, %v2721
  %v2764 = vunpack.c.l.b16 %v2468
  %v2765 = vunpack.c.h.b16 %v2468
  %v2766 = vunpack.c.l.b16 %v2469
  %v2767 = vunpack.c.h.b16 %v2469
  %v2768 = vpack.c.b16 %v2766, %v2764
  %v2769 = vpack.c.b16 %v2767, %v2765
  %v2772 = vsel %vm1932, %v2769, 0
  %2774 = vmatprep.subr.bf16.mxu0 %v2727
  %2775 = vmatpush1.bf16.msra.mxu0 %v2726
  %2776 = vmatprep.subr.bf16.mxu0 %v2731
  %2777 = vmatpush1.bf16.msra.mxu0 %v2730
  %2778 = vmatprep.subr.bf16.mxu0 %v2735
  %2779 = vmatpush1.bf16.msra.mxu0 %v2734
  %2780 = vmatprep.subr.bf16.mxu0 %v2739
  %2781 = vmatpush1.bf16.msra.mxu0 %v2738
  %2782 = vmatprep.subr.bf16.mxu0 %v2743
  %2783 = vmatpush1.bf16.msra.mxu0 %v2742
  %2784 = vmatprep.subr.bf16.mxu0 %v2747
  %2785 = vmatpush1.bf16.msra.mxu0 %v2746
  %2786 = vmatprep.subr.bf16.mxu0 %v2751
  %2787 = vmatpush1.bf16.msra.mxu0 %v2750
  %2788 = vmatprep.subr.bf16.mxu0 %v2755
  %2789 = vmatpush1.bf16.msra.mxu0 %v2754
  %2790 = vmatprep.subr.bf16.mxu0 %v2759
  %2791 = vmatpush1.bf16.msra.mxu0 %v2758
  %2792 = vmatprep.subr.bf16.mxu0 0
  %2793 = vmatpush1.bf16.msra.mxu0 0
  %2794 = vmatprep.subr.bf16.mxu0 0
  %2795 = vmatpush1.bf16.msra.mxu0 0
  %2796 = vmatprep.subr.bf16.mxu0 0
  %2797 = vmatpush1.bf16.msra.mxu0 0
  %2798 = vmatprep.subr.bf16.mxu0 0
  %2799 = vmatpush1.bf16.msra.mxu0 0
  %2800 = vmatprep.subr.bf16.mxu0 0
  %2801 = vmatpush1.bf16.msra.mxu0 0
  %2802 = vmatprep.subr.bf16.mxu0 0
  %2803 = vmatpush1.bf16.msra.mxu0 0
  %2804 = vmatprep.subr.bf16.mxu0 0
  %2805 = vmatpush1.bf16.msra.mxu0 0
  %2806 = vmatprep.mubr.bf16.mxu0 %v2772
  %2807 = vmatmul.mubr.bf16.gmra.mrb[0].mxu0 %v2768
  %v2808 = vpop.f32.mrb[0].mxu0
  %v2809 = vadd.f32 0.0, %v2808
  %v2810 = vpop.f32.mrb[0].mxu0
  %v2811 = vadd.f32 0.0, %v2810
  %v2812 = vpop.f32.mrb[0].mxu0
  %v2813 = vadd.f32 0.0, %v2812
  %v2814 = vpop.f32.mrb[0].mxu0
  %v2815 = vadd.f32 0.0, %v2814
  %2816 = vdwg.mxu0
  %2817 = vmatprep.subr.bf16.mxu0 %v2729
  %2818 = vmatpush1.bf16.msra.mxu0 %v2728
  %2819 = vmatprep.subr.bf16.mxu0 %v2733
  %2820 = vmatpush1.bf16.msra.mxu0 %v2732
  %2821 = vmatprep.subr.bf16.mxu0 %v2737
  %2822 = vmatpush1.bf16.msra.mxu0 %v2736
  %2823 = vmatprep.subr.bf16.mxu0 %v2741
  %2824 = vmatpush1.bf16.msra.mxu0 %v2740
  %2825 = vmatprep.subr.bf16.mxu0 %v2745
  %2826 = vmatpush1.bf16.msra.mxu0 %v2744
  %2827 = vmatprep.subr.bf16.mxu0 %v2749
  %2828 = vmatpush1.bf16.msra.mxu0 %v2748
  %2829 = vmatprep.subr.bf16.mxu0 %v2753
  %2830 = vmatpush1.bf16.msra.mxu0 %v2752
  %2831 = vmatprep.subr.bf16.mxu0 %v2757
  %2832 = vmatpush1.bf16.msra.mxu0 %v2756
  %2833 = vmatprep.subr.bf16.mxu0 %v2761
  %2834 = vmatpush1.bf16.msra.mxu0 %v2760
  %2835 = vmatprep.subr.bf16.mxu0 0
  %2836 = vmatpush1.bf16.msra.mxu0 0
  %2837 = vmatprep.subr.bf16.mxu0 0
  %2838 = vmatpush1.bf16.msra.mxu0 0
  %2839 = vmatprep.subr.bf16.mxu0 0
  %2840 = vmatpush1.bf16.msra.mxu0 0
  %2841 = vmatprep.subr.bf16.mxu0 0
  %2842 = vmatpush1.bf16.msra.mxu0 0
  %2843 = vmatprep.subr.bf16.mxu0 0
  %2844 = vmatpush1.bf16.msra.mxu0 0
  %2845 = vmatprep.subr.bf16.mxu0 0
  %2846 = vmatpush1.bf16.msra.mxu0 0
  %2847 = vmatprep.subr.bf16.mxu0 0
  %2848 = vmatpush1.bf16.msra.mxu0 0
  %2849 = vmatprep.mubr.bf16.mxu0 %v2772
  %2850 = vmatmul.mubr.bf16.gmra.mrb[0].mxu0 %v2768
  %v2851 = vpop.f32.mrb[0].mxu0
  %v2852 = vadd.f32 0.0, %v2851
  %v2853 = vpop.f32.mrb[0].mxu0
  %v2854 = vadd.f32 0.0, %v2853
  %v2855 = vpop.f32.mrb[0].mxu0
  %v2856 = vadd.f32 0.0, %v2855
  %v2857 = vpop.f32.mrb[0].mxu0
  %v2858 = vadd.f32 0.0, %v2857
  %2859 = vdwg.mxu0
  %v2860 = vmax.f32 %v2809, 0.0
  %v2861 = vmax.f32 %v2811, 0.0
  %v2862 = vmax.f32 %v2852, 0.0
  %v2863 = vmax.f32 %v2854, 0.0
  %v2864 = vmax.f32 %v2813, 0.0
  %v2865 = vmax.f32 %v2815, 0.0
  %v2866 = vmax.f32 %v2856, 0.0
  %v2867 = vmax.f32 %v2858, 0.0
  %v2868 = vpack.c.bf16 %v211, %v1129
  %v2869 = vpack.c.bf16 %v212, %v1130
  %v2870 = vpack.c.bf16 %v213, %v1131
  %v2871 = vpack.c.bf16 %v214, %v1132
  %v2872 = vpack.c.bf16 %v2864, %v2860
  %v2873 = vpack.c.bf16 %v2865, %v2861
  %v2874 = vpack.c.bf16 %v2866, %v2862
  %v2875 = vpack.c.bf16 %v2867, %v2863
  %v2876 = vld [vmem:[%s13] sm:$0xf]
  %v2877 = vld [vmem:[%s13 + $0x4] sm:$0xf]
  %v2878 = vld [vmem:[%s13 + $0x8] sm:$0xf]
  %v2879 = vld [vmem:[%s13 + $0xc] sm:$0xf]
  %v2884 = vunpack.c.l.b16 %v2876
  %v2885 = vunpack.c.l.b16 %v2877
  %v2886 = vunpack.c.l.b16 %v2878
  %v2887 = vunpack.c.l.b16 %v2879
  %v2888 = vpack.c.b16 %v2885, %v2884
  %v2889 = vpack.c.b16 %v2887, %v2886
  %v2891 = vsel %vm94, %v2888, 0
  %v2894 = vsel %vm94, %v2889, 0
  %2896 = vmatprep.subr.bf16.mxu0 %v2869
  %2897 = vmatpush1.bf16.msra.mxu0 %v2868
  %2898 = vmatprep.subr.bf16.mxu0 %v2873
  %2899 = vmatpush1.bf16.msra.mxu0 %v2872
  %2900 = vmatprep.subr.bf16.mxu0 0
  %2901 = vmatpush1.bf16.msra.mxu0 0
  %2902 = vmatprep.subr.bf16.mxu0 0
  %2903 = vmatpush1.bf16.msra.mxu0 0
  %2904 = vmatprep.subr.bf16.mxu0 0
  %2905 = vmatpush1.bf16.msra.mxu0 0
  %2906 = vmatprep.subr.bf16.mxu0 0
  %2907 = vmatpush1.bf16.msra.mxu0 0
  %2908 = vmatprep.subr.bf16.mxu0 0
  %2909 = vmatpush1.bf16.msra.mxu0 0
  %2910 = vmatprep.subr.bf16.mxu0 0
  %2911 = vmatpush1.bf16.msra.mxu0 0
  %2912 = vmatprep.subr.bf16.mxu0 0
  %2913 = vmatpush1.bf16.msra.mxu0 0
  %2914 = vmatprep.subr.bf16.mxu0 0
  %2915 = vmatpush1.bf16.msra.mxu0 0
  %2916 = vmatprep.subr.bf16.mxu0 0
  %2917 = vmatpush1.bf16.msra.mxu0 0
  %2918 = vmatprep.subr.bf16.mxu0 0
  %2919 = vmatpush1.bf16.msra.mxu0 0
  %2920 = vmatprep.subr.bf16.mxu0 0
  %2921 = vmatpush1.bf16.msra.mxu0 0
  %2922 = vmatprep.subr.bf16.mxu0 0
  %2923 = vmatpush1.bf16.msra.mxu0 0
  %2924 = vmatprep.subr.bf16.mxu0 0
  %2925 = vmatpush1.bf16.msra.mxu0 0
  %2926 = vmatprep.subr.bf16.mxu0 0
  %2927 = vmatpush1.bf16.msra.mxu0 0
  %2928 = vmatprep.mubr.bf16.mxu0 0
  %2929 = vmatmul.mubr.bf16.gmra.mrb[0].mxu0 %v2891
  %v2930 = vpop.f32.mrb[0].mxu0
  %v2931 = vadd.f32 %v48, %v2930
  %v2932 = vpop.f32.mrb[0].mxu0
  %v2933 = vadd.f32 %v49, %v2932
  %v2934 = vpop.f32.mrb[0].mxu0
  %v2935 = vadd.f32 %v52, %v2934
  %v2936 = vpop.f32.mrb[0].mxu0
  %v2937 = vadd.f32 %v53, %v2936
  %2938 = vmatprep.mubr.bf16.mxu0 0
  %2939 = vmatmul.mubr.bf16.gmra.mrb[0].mxu0 %v2894
  %v2940 = vpop.f32.mrb[0].mxu0
  %v2941 = vadd.f32 %v56, %v2940
  %v2942 = vpop.f32.mrb[0].mxu0
  %v2943 = vadd.f32 %v57, %v2942
  %v2944 = vpop.f32.mrb[0].mxu0
  %v2945 = vadd.f32 %v60, %v2944
  %v2946 = vpop.f32.mrb[0].mxu0
  %v2947 = vadd.f32 %v61, %v2946
  %2948 = vdwg.mxu0
  %2949 = vmatprep.subr.bf16.mxu0 %v2871
  %2950 = vmatpush1.bf16.msra.mxu0 %v2870
  %2951 = vmatprep.subr.bf16.mxu0 %v2875
  %2952 = vmatpush1.bf16.msra.mxu0 %v2874
  %2953 = vmatprep.subr.bf16.mxu0 0
  %2954 = vmatpush1.bf16.msra.mxu0 0
  %2955 = vmatprep.subr.bf16.mxu0 0
  %2956 = vmatpush1.bf16.msra.mxu0 0
  %2957 = vmatprep.subr.bf16.mxu0 0
  %2958 = vmatpush1.bf16.msra.mxu0 0
  %2959 = vmatprep.subr.bf16.mxu0 0
  %2960 = vmatpush1.bf16.msra.mxu0 0
  %2961 = vmatprep.subr.bf16.mxu0 0
  %2962 = vmatpush1.bf16.msra.mxu0 0
  %2963 = vmatprep.subr.bf16.mxu0 0
  %2964 = vmatpush1.bf16.msra.mxu0 0
  %2965 = vmatprep.subr.bf16.mxu0 0
  %2966 = vmatpush1.bf16.msra.mxu0 0
  %2967 = vmatprep.subr.bf16.mxu0 0
  %2968 = vmatpush1.bf16.msra.mxu0 0
  %2969 = vmatprep.subr.bf16.mxu0 0
  %2970 = vmatpush1.bf16.msra.mxu0 0
  %2971 = vmatprep.subr.bf16.mxu0 0
  %2972 = vmatpush1.bf16.msra.mxu0 0
  %2973 = vmatprep.subr.bf16.mxu0 0
  %2974 = vmatpush1.bf16.msra.mxu0 0
  %2975 = vmatprep.subr.bf16.mxu0 0
  %2976 = vmatpush1.bf16.msra.mxu0 0
  %2977 = vmatprep.subr.bf16.mxu0 0
  %2978 = vmatpush1.bf16.msra.mxu0 0
  %2979 = vmatprep.subr.bf16.mxu0 0
  %2980 = vmatpush1.bf16.msra.mxu0 0
  %2981 = vmatprep.mubr.bf16.mxu0 0
  %2982 = vmatmul.mubr.bf16.gmra.mrb[0].mxu0 %v2891
  %v2983 = vpop.f32.mrb[0].mxu0
  %v2984 = vadd.f32 %v50, %v2983
  %v2985 = vpop.f32.mrb[0].mxu0
  %v2986 = vadd.f32 %v51, %v2985
  %v2987 = vpop.f32.mrb[0].mxu0
  %v2988 = vadd.f32 %v54, %v2987
  %v2989 = vpop.f32.mrb[0].mxu0
  %v2990 = vadd.f32 %v55, %v2989
  %2991 = vmatprep.mubr.bf16.mxu0 0
  %2992 = vmatmul.mubr.bf16.gmra.mrb[0].mxu0 %v2894
  %v2993 = vpop.f32.mrb[0].mxu0
  %v2994 = vadd.f32 %v58, %v2993
  %v2995 = vpop.f32.mrb[0].mxu0
  %v2996 = vadd.f32 %v59, %v2995
  %v2997 = vpop.f32.mrb[0].mxu0
  %v2998 = vadd.f32 %v62, %v2997
  %v2999 = vpop.f32.mrb[0].mxu0
  %v3000 = vadd.f32 %v63, %v2999
  %3001 = vdwg.mxu0
  %3002 = vst [vmem:[%s14] sm:$0xff] %v2931
  %3003 = vst [vmem:[%s14 + $0x8] sm:$0xff] %v2933
  %3004 = vst [vmem:[%s14 + $0x10] sm:$0xff] %v2984
  %3005 = vst [vmem:[%s14 + $0x18] sm:$0xff] %v2986
  %3006 = vst [vmem:[%s14 + $0x20] sm:$0xff] %v2935
  %3007 = vst [vmem:[%s14 + $0x28] sm:$0xff] %v2937
  %3008 = vst [vmem:[%s14 + $0x30] sm:$0xff] %v2988
  %3009 = vst [vmem:[%s14 + $0x38] sm:$0xff] %v2990
  %3010 = vst [vmem:[%s14 + $0x40] sm:$0xff] %v2941
  %3011 = vst [vmem:[%s14 + $0x48] sm:$0xff] %v2943
  %3012 = vst [vmem:[%s14 + $0x50] sm:$0xff] %v2994
  %3013 = vst [vmem:[%s14 + $0x58] sm:$0xff] %v2996
  %3014 = vst [vmem:[%s14 + $0x60] sm:$0xff] %v2945
  %3015 = vst [vmem:[%s14 + $0x68] sm:$0xff] %v2947
  %3016 = vst [vmem:[%s14 + $0x70] sm:$0xff] %v2998
  %3017 = vst [vmem:[%s14 + $0x78] sm:$0xff] %v3000
  // Predicated region
  $region58: #{hffb_forward.1} parent=0 // pred_check
    _
  $region59: #{hffb_forward.1} parent=0 // pred_check_branch
    %3019 = sbr.rel (0) target = $region61
  $region60: #{hffb_forward.1} parent=0 // pred_region
    _
  $region61: #{hffb_forward.1} parent=0 // pred_fallthru
    _
  // Predicated region
  $region62: #{hffb_forward.1} parent=0 // pred_check
    _
  $region63: #{hffb_forward.1} parent=0 // pred_check_branch
    %3021 = sbr.rel (0) target = $region65
  $region64: #{hffb_forward.1} parent=0 // pred_region
    _
  $region65: #{hffb_forward.1} parent=0 // pred_fallthru
    _

</llo_original>
